<compile_context>
chip_gen: v6e
topology: v6e:2x2x1
jax: 0.10.0
libtpu: 0.0.40
codegen_flags: <defaults>
</compile_context>

<pallas_src>
import functools

import jax
import jax.numpy as jnp
from jax.experimental import pallas as pl
from jax.experimental.pallas import tpu as pltpu

LRELU_SLOPE = 0.2
IN_EPS = 1e-5


# ---------------------------------------------------------------------------
# Pallas kernels (one grid step == one sample)
# ---------------------------------------------------------------------------
def _conv_bias_lrelu_kernel(x_ref, w_ref, b_ref, o_ref, *, alpha):
    """o[n] = leaky_relu(w @ x[n] + b).

    x block: (1, K, HW) bf16, w: (Cout, K) bf16, b: (Cout, 1) f32."""
    acc = jnp.dot(w_ref[...], x_ref[0], preferred_element_type=jnp.float32)
    acc = acc + b_ref[...]                        # (Cout, HW) + (Cout, 1)
    acc = jnp.where(acc >= 0.0, acc, alpha * acc)
    o_ref[0] = acc.astype(o_ref.dtype)


def _conv_in_lrelu_kernel(x_ref, w_ref, o_ref, *, eps, alpha):
    """Fused conv matmul + InstanceNorm2d (no affine) + LeakyReLU.

    Rows = channels, lanes = full H*W of one sample, so the per-(sample,
    channel) statistics are a single lane reduction on the f32 accumulator.
    Conv bias is omitted: it is exactly cancelled by the mean subtraction."""
    acc = jnp.dot(w_ref[...], x_ref[0], preferred_element_type=jnp.float32)
    mean = jnp.mean(acc, axis=1, keepdims=True)
    xc = acc - mean
    var = jnp.mean(xc * xc, axis=1, keepdims=True)          # biased var (torch)
    y = xc * jax.lax.rsqrt(var + eps)
    y = jnp.where(y >= 0.0, y, alpha * y)
    o_ref[0] = y.astype(o_ref.dtype)


def _conv_in_lrelu_fc_kernel(x_ref, w_ref, fcw_ref, fcb_ref, o_ref, *, eps, alpha):
    """Last block: conv matmul + InstanceNorm + LeakyReLU + Linear(8192 -> 1).

    y is (C=128, H*W=64), i.e. exactly torch's nn.Flatten(NCHW) order, so the
    Linear is a VPU multiply against fc_w reshaped to (128, 64) + reduction."""
    acc = jnp.dot(w_ref[...], x_ref[0], preferred_element_type=jnp.float32)
    mean = jnp.mean(acc, axis=1, keepdims=True)
    xc = acc - mean
    var = jnp.mean(xc * xc, axis=1, keepdims=True)
    y = xc * jax.lax.rsqrt(var + eps)
    y = jnp.where(y >= 0.0, y, alpha * y)
    prod = y * fcw_ref[...]                                   # (128, 64) f32
    v = jnp.sum(jnp.sum(prod, axis=1, keepdims=True), axis=0, keepdims=True)
    o_ref[0] = (v + fcb_ref[...]).astype(o_ref.dtype)         # (1, 1)


# ---------------------------------------------------------------------------
# im2col (thin XLA slicing glue, channel-major, bf16)
# ---------------------------------------------------------------------------
def im2col_chw(x, *, k=4, stride=2, pad=1):
    """x: (N, C, H, W) -> patches (N, k*k*C, Ho*Wo); row order (ki, kj, cin).

    A real torch conv weight (Cout, Cin, kh, kw) maps to the matching matrix
    via w.transpose(0, 2, 3, 1).reshape(Cout, kh*kw*Cin)."""
    N, C, H, W = x.shape
    xp = jnp.pad(x, ((0, 0), (0, 0), (pad, pad), (pad, pad)))
    Ho = (H + 2 * pad - k) // stride + 1
    Wo = (W + 2 * pad - k) // stride + 1
    taps = []
    for ki in range(k):
        for kj in range(k):
            taps.append(
                xp[:, :, ki:ki + stride * Ho:stride, kj:kj + stride * Wo:stride]
                .reshape(N, C, Ho * Wo))
    return jnp.concatenate(taps, axis=1), Ho, Wo


# ---------------------------------------------------------------------------
# Pallas wrappers
# ---------------------------------------------------------------------------
def _conv_call(kernel, operands, in_specs, out_shape, out_spec, n_samples):
    return pl.pallas_call(
        kernel,
        out_shape=out_shape,
        grid=(n_samples,),
        in_specs=in_specs,
        out_specs=out_spec,
        compiler_params=pltpu.CompilerParams(dimension_semantics=("parallel",)),
    )(*operands)


def conv_bias_lrelu(x, w, b, *, alpha=LRELU_SLOPE):
    """Conv(4x4, s2, p1) + bias + LeakyReLU.  x: (N,C,H,W) bf16 -> (N,Cout,Ho,Wo) bf16."""
    N = x.shape[0]
    patches, Ho, Wo = im2col_chw(x)
    K, HW, Cout = patches.shape[1], Ho * Wo, w.shape[0]
    out = _conv_call(
        functools.partial(_conv_bias_lrelu_kernel, alpha=alpha),
        (patches, w, b),
        [pl.BlockSpec((1, K, HW), lambda n: (n, 0, 0)),
         pl.BlockSpec((Cout, K), lambda n: (0, 0)),
         pl.BlockSpec((Cout, 1), lambda n: (0, 0))],
        jax.ShapeDtypeStruct((N, Cout, HW), jnp.bfloat16),
        pl.BlockSpec((1, Cout, HW), lambda n: (n, 0, 0)),
        N)
    return out.reshape(N, Cout, Ho, Wo)


def conv_in_lrelu(x, w, *, eps=IN_EPS, alpha=LRELU_SLOPE):
    """Conv(4x4, s2, p1) + InstanceNorm2d + LeakyReLU, all fused."""
    N = x.shape[0]
    patches, Ho, Wo = im2col_chw(x)
    K, HW, Cout = patches.shape[1], Ho * Wo, w.shape[0]
    out = _conv_call(
        functools.partial(_conv_in_lrelu_kernel, eps=eps, alpha=alpha),
        (patches, w),
        [pl.BlockSpec((1, K, HW), lambda n: (n, 0, 0)),
         pl.BlockSpec((Cout, K), lambda n: (0, 0))],
        jax.ShapeDtypeStruct((N, Cout, HW), jnp.bfloat16),
        pl.BlockSpec((1, Cout, HW), lambda n: (n, 0, 0)),
        N)
    return out.reshape(N, Cout, Ho, Wo)


def conv_in_lrelu_fc(x, w, fc_w, fc_b, *, eps=IN_EPS, alpha=LRELU_SLOPE):
    """Final block: Conv + InstanceNorm + LeakyReLU + Linear(128*8*8 -> 1)."""
    N = x.shape[0]
    patches, Ho, Wo = im2col_chw(x)
    K, HW, Cout = patches.shape[1], Ho * Wo, w.shape[0]
    out = _conv_call(
        functools.partial(_conv_in_lrelu_fc_kernel, eps=eps, alpha=alpha),
        (patches, w, fc_w, fc_b),
        [pl.BlockSpec((1, K, HW), lambda n: (n, 0, 0)),
         pl.BlockSpec((Cout, K), lambda n: (0, 0)),
         pl.BlockSpec((Cout, HW), lambda n: (0, 0)),
         pl.BlockSpec((1, 1), lambda n: (0, 0))],
        jax.ShapeDtypeStruct((N, 1, 1), jnp.float32),
        pl.BlockSpec((1, 1, 1), lambda n: (n, 0, 0)),
        N)
    return out.reshape(N, 1)


# ---------------------------------------------------------------------------
# Parameter init (deterministic, synthetic; mirrors torch layer shapes)
# ---------------------------------------------------------------------------
def init_params(key):
    params = {}
    layer_specs = [(1, 16), (16, 32), (32, 64), (64, 128)]   # (cin, cout)
    for idx, (cin, cout) in enumerate(layer_specs):
        key, kw, kb = jax.random.split(key, 3)
        fan_in = 4 * 4 * cin
        bound = 1.0 / (fan_in ** 0.5)
        # Weight stored as (Cout, kh*kw*Cin), column order (ki, kj, cin); bf16.
        params[f"conv{idx}_w"] = jax.random.uniform(
            kw, (cout, fan_in), jnp.float32, -bound, bound).astype(jnp.bfloat16)
        # Biases for conv1-3 are kept for parameter parity with the torch module
        # but are NOT applied: InstanceNorm2d cancels them exactly.
        params[f"conv{idx}_b"] = jax.random.uniform(
            kb, (cout, 1), jnp.float32, -bound, bound)
    key, kw, kb = jax.random.split(key, 3)
    fan_in = 128 * 8 * 8
    bound = 1.0 / (fan_in ** 0.5)
    # fc_w stored pre-reshaped to (C=128, H*W=64): row-major == torch Flatten(NCHW).
    params["fc_w"] = jax.random.uniform(kw, (128, 64), jnp.float32, -bound, bound)
    params["fc_b"] = jax.random.uniform(kb, (1, 1), jnp.float32, -bound, bound)
    return params


# ---------------------------------------------------------------------------
# Full forward pass
# ---------------------------------------------------------------------------
@jax.jit
def discriminator_forward(params, img_nchw):
    x = img_nchw.astype(jnp.bfloat16)                      # already (N, C, H, W)
    # Block 1: Conv(1->16) + LeakyReLU (bias kept; no norm in this block).
    x = conv_bias_lrelu(x, params["conv0_w"], params["conv0_b"])       # (N,16,64,64)
    # Blocks 2-3: Conv + InstanceNorm2d + LeakyReLU (fully fused per sample).
    x = conv_in_lrelu(x, params["conv1_w"])                            # (N,32,32,32)
    x = conv_in_lrelu(x, params["conv2_w"])                            # (N,64,16,16)
    # Block 4 + head: Conv + InstanceNorm2d + LeakyReLU + Linear(8192 -> 1).
    return conv_in_lrelu_fc(x, params["conv3_w"],
                            params["fc_w"], params["fc_b"])            # (N, 1)


if __name__ == "__main__":
    key = jax.random.PRNGKey(0)
    key_p, key_x = jax.random.split(key)
    params = init_params(key_p)

    # 128x128 single-channel images (four stride-2 convs -> 8x8 spatial,
    # matching Linear(128*8*8, 1) in the module).
    img = jax.random.normal(key_x, (2, 1, 128, 128), jnp.float32)

    out = discriminator_forward(params, img)
    out = jax.block_until_ready(out)
    assert out.shape == (2, 1) and out.dtype == jnp.float32
    print("KERNEL_OK")
</pallas_src>

<mosaic_0001>
module attributes {stable_mosaic.version = 11 : i64} {
  func.func @_conv_bias_lrelu_kernel(%arg0: i32, %arg1: memref<1x16x4096xbf16, #tpu.memory_space<vmem>>, %arg2: memref<16x16xbf16, #tpu.memory_space<vmem>>, %arg3: memref<16x1xf32, #tpu.memory_space<vmem>>, %arg4: memref<1x16x4096xbf16, #tpu.memory_space<vmem>>) attributes {dimension_semantics = [#tpu.dimension_semantics<parallel>], iteration_bounds = array<i64: 2>, scalar_prefetch = 0 : i64, scratch_operands = 0 : i64, tpu.core_type = #tpu.core_type<tc>, window_params = [{transform_indices = @transform_0, window_bounds = array<i64: 1, 16, 4096>}, {pipeline_mode = #tpu.pipeline_mode<synchronous>, transform_indices = @transform_1, window_bounds = array<i64: 16, 16>}, {pipeline_mode = #tpu.pipeline_mode<synchronous>, transform_indices = @transform_2, window_bounds = array<i64: 16, 1>}, {transform_indices = @transform_3, window_bounds = array<i64: 1, 16, 4096>}]} {
    %c0 = arith.constant 0 : index
    %c0_0 = arith.constant 0 : index
    %0 = vector.load %arg2[%c0, %c0_0] : memref<16x16xbf16, #tpu.memory_space<vmem>>, vector<16x16xbf16>
    %c0_1 = arith.constant 0 : index
    %c0_2 = arith.constant 0 : index
    %c0_3 = arith.constant 0 : index
    %1 = vector.load %arg1[%c0_1, %c0_2, %c0_3] : memref<1x16x4096xbf16, #tpu.memory_space<vmem>>, vector<1x16x4096xbf16>
    %2 = vector.shape_cast %1 : vector<1x16x4096xbf16> to vector<16x4096xbf16>
    %cst = arith.constant dense<0.000000e+00> : vector<16x4096xf32>
    %3 = tpu.matmul %0, %2, %cst {dimension_numbers = #tpu.dot_dimension_numbers<[1], [0], [0], [1], [0, 0, 1, 1], [], []>} : vector<16x16xbf16>, vector<16x4096xbf16>, vector<16x4096xf32> -> vector<16x4096xf32>
    %c0_4 = arith.constant 0 : index
    %c0_5 = arith.constant 0 : index
    %4 = vector.load %arg3[%c0_4, %c0_5] : memref<16x1xf32, #tpu.memory_space<vmem>>, vector<16x1xf32>
    %5 = vector.broadcast %4 : vector<16x1xf32> to vector<16x4096xf32>
    %6 = arith.addf %3, %5 : vector<16x4096xf32>
    %cst_6 = arith.constant 0.000000e+00 : f32
    %7 = vector.broadcast %cst_6 : f32 to vector<16x4096xf32>
    %8 = arith.cmpf oge, %6, %7 : vector<16x4096xf32>
    %cst_7 = arith.constant 2.000000e-01 : f32
    %9 = vector.broadcast %cst_7 : f32 to vector<16x4096xf32>
    %10 = arith.mulf %9, %6 : vector<16x4096xf32>
    %11 = arith.select %8, %6, %10 : vector<16x4096xi1>, vector<16x4096xf32>
    %12 = arith.truncf %11 : vector<16x4096xf32> to vector<16x4096xbf16>
    %c0_8 = arith.constant 0 : index
    %c0_9 = arith.constant 0 : index
    %c0_10 = arith.constant 0 : index
    %13 = vector.load %arg4[%c0_8, %c0_9, %c0_10] : memref<1x16x4096xbf16, #tpu.memory_space<vmem>>, vector<1x16x4096xbf16>
    %14 = vector.shape_cast %13 : vector<1x16x4096xbf16> to vector<16x4096xbf16>
    %15 = vector.shape_cast %12 : vector<16x4096xbf16> to vector<1x16x4096xbf16>
    tpu.vector_store %arg4[%c0_8, %c0_9, %c0_10], %15 {strides = array<i32>} : memref<1x16x4096xbf16, #tpu.memory_space<vmem>>, vector<1x16x4096xbf16>,
    return
  }
  func.func @transform_0(%arg0: i32) -> (i32, i32, i32) {
    %c0_i32 = arith.constant 0 : i32
    %c0_i32_0 = arith.constant 0 : i32
    %c0_i32_1 = arith.constant 0 : i32
    return %arg0, %c0_i32, %c0_i32_0 : i32, i32, i32
  }
  func.func @transform_1(%arg0: i32) -> (i32, i32) {
    %c0_i32 = arith.constant 0 : i32
    %c0_i32_0 = arith.constant 0 : i32
    %c0_i32_1 = arith.constant 0 : i32
    return %c0_i32, %c0_i32_0 : i32, i32
  }
  func.func @transform_2(%arg0: i32) -> (i32, i32) {
    %c0_i32 = arith.constant 0 : i32
    %c0_i32_0 = arith.constant 0 : i32
    %c0_i32_1 = arith.constant 0 : i32
    return %c0_i32, %c0_i32_0 : i32, i32
  }
  func.func @transform_3(%arg0: i32) -> (i32, i32, i32) {
    %c0_i32 = arith.constant 0 : i32
    %c0_i32_0 = arith.constant 0 : i32
    %c0_i32_1 = arith.constant 0 : i32
    return %arg0, %c0_i32, %c0_i32_0 : i32, i32, i32
  }
}

module attributes {stable_mosaic.version = 11 : i64} {
  func.func @_conv_in_lrelu_kernel(%arg0: i32, %arg1: memref<1x256x1024xbf16, #tpu.memory_space<vmem>>, %arg2: memref<32x256xbf16, #tpu.memory_space<vmem>>, %arg3: memref<1x32x1024xbf16, #tpu.memory_space<vmem>>) attributes {dimension_semantics = [#tpu.dimension_semantics<parallel>], iteration_bounds = array<i64: 2>, scalar_prefetch = 0 : i64, scratch_operands = 0 : i64, tpu.core_type = #tpu.core_type<tc>, window_params = [{transform_indices = @transform_0, window_bounds = array<i64: 1, 256, 1024>}, {pipeline_mode = #tpu.pipeline_mode<synchronous>, transform_indices = @transform_1, window_bounds = array<i64: 32, 256>}, {transform_indices = @transform_2, window_bounds = array<i64: 1, 32, 1024>}]} {
    %c0 = arith.constant 0 : index
    %c0_0 = arith.constant 0 : index
    %0 = vector.load %arg2[%c0, %c0_0] : memref<32x256xbf16, #tpu.memory_space<vmem>>, vector<32x256xbf16>
    %c0_1 = arith.constant 0 : index
    %c0_2 = arith.constant 0 : index
    %c0_3 = arith.constant 0 : index
    %1 = vector.load %arg1[%c0_1, %c0_2, %c0_3] : memref<1x256x1024xbf16, #tpu.memory_space<vmem>>, vector<1x256x1024xbf16>
    %2 = vector.shape_cast %1 : vector<1x256x1024xbf16> to vector<256x1024xbf16>
    %cst = arith.constant dense<0.000000e+00> : vector<32x1024xf32>
    %3 = tpu.matmul %0, %2, %cst {dimension_numbers = #tpu.dot_dimension_numbers<[1], [0], [0], [1], [0, 0, 1, 1], [], []>} : vector<32x256xbf16>, vector<256x1024xbf16>, vector<32x1024xf32> -> vector<32x1024xf32>
    %cst_4 = arith.constant dense<0.000000e+00> : vector<32xf32>
    %4 = vector.multi_reduction <add>, %3, %cst_4 [1] : vector<32x1024xf32> to vector<32xf32>
    %5 = vector.shape_cast %4 : vector<32xf32> to vector<32x1xf32>
    %cst_5 = arith.constant 1.024000e+03 : f32
    %6 = vector.broadcast %cst_5 : f32 to vector<32x1xf32>
    %7 = arith.divf %5, %6 : vector<32x1xf32>
    %8 = vector.broadcast %7 : vector<32x1xf32> to vector<32x1024xf32>
    %9 = arith.subf %3, %8 : vector<32x1024xf32>
    %10 = arith.mulf %9, %9 : vector<32x1024xf32>
    %cst_6 = arith.constant dense<0.000000e+00> : vector<32xf32>
    %11 = vector.multi_reduction <add>, %10, %cst_6 [1] : vector<32x1024xf32> to vector<32xf32>
    %12 = vector.shape_cast %11 : vector<32xf32> to vector<32x1xf32>
    %cst_7 = arith.constant 1.024000e+03 : f32
    %13 = vector.broadcast %cst_7 : f32 to vector<32x1xf32>
    %14 = arith.divf %12, %13 : vector<32x1xf32>
    %cst_8 = arith.constant 9.99999974E-6 : f32
    %15 = vector.broadcast %cst_8 : f32 to vector<32x1xf32>
    %16 = arith.addf %14, %15 : vector<32x1xf32>
    %17 = math.rsqrt %16 : vector<32x1xf32>
    %18 = vector.broadcast %17 : vector<32x1xf32> to vector<32x1024xf32>
    %19 = arith.mulf %9, %18 : vector<32x1024xf32>
    %cst_9 = arith.constant 0.000000e+00 : f32
    %20 = vector.broadcast %cst_9 : f32 to vector<32x1024xf32>
    %21 = arith.cmpf oge, %19, %20 : vector<32x1024xf32>
    %cst_10 = arith.constant 2.000000e-01 : f32
    %22 = vector.broadcast %cst_10 : f32 to vector<32x1024xf32>
    %23 = arith.mulf %22, %19 : vector<32x1024xf32>
    %24 = arith.select %21, %19, %23 : vector<32x1024xi1>, vector<32x1024xf32>
    %25 = arith.truncf %24 : vector<32x1024xf32> to vector<32x1024xbf16>
    %c0_11 = arith.constant 0 : index
    %c0_12 = arith.constant 0 : index
    %c0_13 = arith.constant 0 : index
    %26 = vector.load %arg3[%c0_11, %c0_12, %c0_13] : memref<1x32x1024xbf16, #tpu.memory_space<vmem>>, vector<1x32x1024xbf16>
    %27 = vector.shape_cast %26 : vector<1x32x1024xbf16> to vector<32x1024xbf16>
    %28 = vector.shape_cast %25 : vector<32x1024xbf16> to vector<1x32x1024xbf16>
    tpu.vector_store %arg3[%c0_11, %c0_12, %c0_13], %28 {strides = array<i32>} : memref<1x32x1024xbf16, #tpu.memory_space<vmem>>, vector<1x32x1024xbf16>,
    return
  }
  func.func @transform_0(%arg0: i32) -> (i32, i32, i32) {
    %c0_i32 = arith.constant 0 : i32
    %c0_i32_0 = arith.constant 0 : i32
    %c0_i32_1 = arith.constant 0 : i32
    return %arg0, %c0_i32, %c0_i32_0 : i32, i32, i32
  }
  func.func @transform_1(%arg0: i32) -> (i32, i32) {
    %c0_i32 = arith.constant 0 : i32
    %c0_i32_0 = arith.constant 0 : i32
    %c0_i32_1 = arith.constant 0 : i32
    return %c0_i32, %c0_i32_0 : i32, i32
  }
  func.func @transform_2(%arg0: i32) -> (i32, i32, i32) {
    %c0_i32 = arith.constant 0 : i32
    %c0_i32_0 = arith.constant 0 : i32
    %c0_i32_1 = arith.constant 0 : i32
    return %arg0, %c0_i32, %c0_i32_0 : i32, i32, i32
  }
}

module attributes {stable_mosaic.version = 11 : i64} {
  func.func @_conv_in_lrelu_kernel(%arg0: i32, %arg1: memref<1x512x256xbf16, #tpu.memory_space<vmem>>, %arg2: memref<64x512xbf16, #tpu.memory_space<vmem>>, %arg3: memref<1x64x256xbf16, #tpu.memory_space<vmem>>) attributes {dimension_semantics = [#tpu.dimension_semantics<parallel>], iteration_bounds = array<i64: 2>, scalar_prefetch = 0 : i64, scratch_operands = 0 : i64, tpu.core_type = #tpu.core_type<tc>, window_params = [{transform_indices = @transform_0, window_bounds = array<i64: 1, 512, 256>}, {pipeline_mode = #tpu.pipeline_mode<synchronous>, transform_indices = @transform_1, window_bounds = array<i64: 64, 512>}, {transform_indices = @transform_2, window_bounds = array<i64: 1, 64, 256>}]} {
    %c0 = arith.constant 0 : index
    %c0_0 = arith.constant 0 : index
    %0 = vector.load %arg2[%c0, %c0_0] : memref<64x512xbf16, #tpu.memory_space<vmem>>, vector<64x512xbf16>
    %c0_1 = arith.constant 0 : index
    %c0_2 = arith.constant 0 : index
    %c0_3 = arith.constant 0 : index
    %1 = vector.load %arg1[%c0_1, %c0_2, %c0_3] : memref<1x512x256xbf16, #tpu.memory_space<vmem>>, vector<1x512x256xbf16>
    %2 = vector.shape_cast %1 : vector<1x512x256xbf16> to vector<512x256xbf16>
    %cst = arith.constant dense<0.000000e+00> : vector<64x256xf32>
    %3 = tpu.matmul %0, %2, %cst {dimension_numbers = #tpu.dot_dimension_numbers<[1], [0], [0], [1], [0, 0, 1, 1], [], []>} : vector<64x512xbf16>, vector<512x256xbf16>, vector<64x256xf32> -> vector<64x256xf32>
    %cst_4 = arith.constant dense<0.000000e+00> : vector<64xf32>
    %4 = vector.multi_reduction <add>, %3, %cst_4 [1] : vector<64x256xf32> to vector<64xf32>
    %5 = vector.shape_cast %4 : vector<64xf32> to vector<64x1xf32>
    %cst_5 = arith.constant 2.560000e+02 : f32
    %6 = vector.broadcast %cst_5 : f32 to vector<64x1xf32>
    %7 = arith.divf %5, %6 : vector<64x1xf32>
    %8 = vector.broadcast %7 : vector<64x1xf32> to vector<64x256xf32>
    %9 = arith.subf %3, %8 : vector<64x256xf32>
    %10 = arith.mulf %9, %9 : vector<64x256xf32>
    %cst_6 = arith.constant dense<0.000000e+00> : vector<64xf32>
    %11 = vector.multi_reduction <add>, %10, %cst_6 [1] : vector<64x256xf32> to vector<64xf32>
    %12 = vector.shape_cast %11 : vector<64xf32> to vector<64x1xf32>
    %cst_7 = arith.constant 2.560000e+02 : f32
    %13 = vector.broadcast %cst_7 : f32 to vector<64x1xf32>
    %14 = arith.divf %12, %13 : vector<64x1xf32>
    %cst_8 = arith.constant 9.99999974E-6 : f32
    %15 = vector.broadcast %cst_8 : f32 to vector<64x1xf32>
    %16 = arith.addf %14, %15 : vector<64x1xf32>
    %17 = math.rsqrt %16 : vector<64x1xf32>
    %18 = vector.broadcast %17 : vector<64x1xf32> to vector<64x256xf32>
    %19 = arith.mulf %9, %18 : vector<64x256xf32>
    %cst_9 = arith.constant 0.000000e+00 : f32
    %20 = vector.broadcast %cst_9 : f32 to vector<64x256xf32>
    %21 = arith.cmpf oge, %19, %20 : vector<64x256xf32>
    %cst_10 = arith.constant 2.000000e-01 : f32
    %22 = vector.broadcast %cst_10 : f32 to vector<64x256xf32>
    %23 = arith.mulf %22, %19 : vector<64x256xf32>
    %24 = arith.select %21, %19, %23 : vector<64x256xi1>, vector<64x256xf32>
    %25 = arith.truncf %24 : vector<64x256xf32> to vector<64x256xbf16>
    %c0_11 = arith.constant 0 : index
    %c0_12 = arith.constant 0 : index
    %c0_13 = arith.constant 0 : index
    %26 = vector.load %arg3[%c0_11, %c0_12, %c0_13] : memref<1x64x256xbf16, #tpu.memory_space<vmem>>, vector<1x64x256xbf16>
    %27 = vector.shape_cast %26 : vector<1x64x256xbf16> to vector<64x256xbf16>
    %28 = vector.shape_cast %25 : vector<64x256xbf16> to vector<1x64x256xbf16>
    tpu.vector_store %arg3[%c0_11, %c0_12, %c0_13], %28 {strides = array<i32>} : memref<1x64x256xbf16, #tpu.memory_space<vmem>>, vector<1x64x256xbf16>,
    return
  }
  func.func @transform_0(%arg0: i32) -> (i32, i32, i32) {
    %c0_i32 = arith.constant 0 : i32
    %c0_i32_0 = arith.constant 0 : i32
    %c0_i32_1 = arith.constant 0 : i32
    return %arg0, %c0_i32, %c0_i32_0 : i32, i32, i32
  }
  func.func @transform_1(%arg0: i32) -> (i32, i32) {
    %c0_i32 = arith.constant 0 : i32
    %c0_i32_0 = arith.constant 0 : i32
    %c0_i32_1 = arith.constant 0 : i32
    return %c0_i32, %c0_i32_0 : i32, i32
  }
  func.func @transform_2(%arg0: i32) -> (i32, i32, i32) {
    %c0_i32 = arith.constant 0 : i32
    %c0_i32_0 = arith.constant 0 : i32
    %c0_i32_1 = arith.constant 0 : i32
    return %arg0, %c0_i32, %c0_i32_0 : i32, i32, i32
  }
}

module attributes {stable_mosaic.version = 11 : i64} {
  func.func @_conv_in_lrelu_fc_kernel(%arg0: i32, %arg1: memref<1x1024x64xbf16, #tpu.memory_space<vmem>>, %arg2: memref<128x1024xbf16, #tpu.memory_space<vmem>>, %arg3: memref<128x64xf32, #tpu.memory_space<vmem>>, %arg4: memref<1x1xf32, #tpu.memory_space<vmem>>, %arg5: memref<1x1x1xf32, #tpu.memory_space<vmem>>) attributes {dimension_semantics = [#tpu.dimension_semantics<parallel>], iteration_bounds = array<i64: 2>, scalar_prefetch = 0 : i64, scratch_operands = 0 : i64, tpu.core_type = #tpu.core_type<tc>, window_params = [{transform_indices = @transform_0, window_bounds = array<i64: 1, 1024, 64>}, {pipeline_mode = #tpu.pipeline_mode<synchronous>, transform_indices = @transform_1, window_bounds = array<i64: 128, 1024>}, {pipeline_mode = #tpu.pipeline_mode<synchronous>, transform_indices = @transform_2, window_bounds = array<i64: 128, 64>}, {pipeline_mode = #tpu.pipeline_mode<synchronous>, transform_indices = @transform_3, window_bounds = array<i64: 1, 1>}, {transform_indices = @transform_4, window_bounds = array<i64: 1, 1, 1>}]} {
    %c0 = arith.constant 0 : index
    %c0_0 = arith.constant 0 : index
    %0 = vector.load %arg2[%c0, %c0_0] : memref<128x1024xbf16, #tpu.memory_space<vmem>>, vector<128x1024xbf16>
    %c0_1 = arith.constant 0 : index
    %c0_2 = arith.constant 0 : index
    %c0_3 = arith.constant 0 : index
    %1 = vector.load %arg1[%c0_1, %c0_2, %c0_3] : memref<1x1024x64xbf16, #tpu.memory_space<vmem>>, vector<1x1024x64xbf16>
    %2 = vector.shape_cast %1 : vector<1x1024x64xbf16> to vector<1024x64xbf16>
    %cst = arith.constant dense<0.000000e+00> : vector<128x64xf32>
    %3 = tpu.matmul %0, %2, %cst {dimension_numbers = #tpu.dot_dimension_numbers<[1], [0], [0], [1], [0, 0, 1, 1], [], []>} : vector<128x1024xbf16>, vector<1024x64xbf16>, vector<128x64xf32> -> vector<128x64xf32>
    %cst_4 = arith.constant dense<0.000000e+00> : vector<128xf32>
    %4 = vector.multi_reduction <add>, %3, %cst_4 [1] : vector<128x64xf32> to vector<128xf32>
    %5 = vector.shape_cast %4 : vector<128xf32> to vector<128x1xf32>
    %cst_5 = arith.constant 6.400000e+01 : f32
    %6 = vector.broadcast %cst_5 : f32 to vector<128x1xf32>
    %7 = arith.divf %5, %6 : vector<128x1xf32>
    %8 = vector.broadcast %7 : vector<128x1xf32> to vector<128x64xf32>
    %9 = arith.subf %3, %8 : vector<128x64xf32>
    %10 = arith.mulf %9, %9 : vector<128x64xf32>
    %cst_6 = arith.constant dense<0.000000e+00> : vector<128xf32>
    %11 = vector.multi_reduction <add>, %10, %cst_6 [1] : vector<128x64xf32> to vector<128xf32>
    %12 = vector.shape_cast %11 : vector<128xf32> to vector<128x1xf32>
    %cst_7 = arith.constant 6.400000e+01 : f32
    %13 = vector.broadcast %cst_7 : f32 to vector<128x1xf32>
    %14 = arith.divf %12, %13 : vector<128x1xf32>
    %cst_8 = arith.constant 9.99999974E-6 : f32
    %15 = vector.broadcast %cst_8 : f32 to vector<128x1xf32>
    %16 = arith.addf %14, %15 : vector<128x1xf32>
    %17 = math.rsqrt %16 : vector<128x1xf32>
    %18 = vector.broadcast %17 : vector<128x1xf32> to vector<128x64xf32>
    %19 = arith.mulf %9, %18 : vector<128x64xf32>
    %cst_9 = arith.constant 0.000000e+00 : f32
    %20 = vector.broadcast %cst_9 : f32 to vector<128x64xf32>
    %21 = arith.cmpf oge, %19, %20 : vector<128x64xf32>
    %cst_10 = arith.constant 2.000000e-01 : f32
    %22 = vector.broadcast %cst_10 : f32 to vector<128x64xf32>
    %23 = arith.mulf %22, %19 : vector<128x64xf32>
    %24 = arith.select %21, %19, %23 : vector<128x64xi1>, vector<128x64xf32>
    %c0_11 = arith.constant 0 : index
    %c0_12 = arith.constant 0 : index
    %25 = vector.load %arg3[%c0_11, %c0_12] : memref<128x64xf32, #tpu.memory_space<vmem>>, vector<128x64xf32>
    %26 = arith.mulf %24, %25 : vector<128x64xf32>
    %cst_13 = arith.constant dense<0.000000e+00> : vector<128xf32>
    %27 = vector.multi_reduction <add>, %26, %cst_13 [1] : vector<128x64xf32> to vector<128xf32>
    %28 = vector.shape_cast %27 : vector<128xf32> to vector<128x1xf32>
    %cst_14 = arith.constant dense<0.000000e+00> : vector<1xf32>
    %29 = vector.multi_reduction <add>, %28, %cst_14 [0] : vector<128x1xf32> to vector<1xf32>
    %30 = vector.shape_cast %29 : vector<1xf32> to vector<1x1xf32>
    %c0_15 = arith.constant 0 : index
    %c0_16 = arith.constant 0 : index
    %31 = vector.load %arg4[%c0_15, %c0_16] : memref<1x1xf32, #tpu.memory_space<vmem>>, vector<1x1xf32>
    %32 = arith.addf %30, %31 : vector<1x1xf32>
    %c0_17 = arith.constant 0 : index
    %c0_18 = arith.constant 0 : index
    %c0_19 = arith.constant 0 : index
    %33 = vector.load %arg5[%c0_17, %c0_18, %c0_19] : memref<1x1x1xf32, #tpu.memory_space<vmem>>, vector<1x1x1xf32>
    %34 = vector.shape_cast %33 : vector<1x1x1xf32> to vector<1x1xf32>
    %35 = vector.shape_cast %32 : vector<1x1xf32> to vector<1x1x1xf32>
    tpu.vector_store %arg5[%c0_17, %c0_18, %c0_19], %35 {strides = array<i32>} : memref<1x1x1xf32, #tpu.memory_space<vmem>>, vector<1x1x1xf32>,
    return
  }
  func.func @transform_0(%arg0: i32) -> (i32, i32, i32) {
    %c0_i32 = arith.constant 0 : i32
    %c0_i32_0 = arith.constant 0 : i32
    %c0_i32_1 = arith.constant 0 : i32
    return %arg0, %c0_i32, %c0_i32_0 : i32, i32, i32
  }
  func.func @transform_1(%arg0: i32) -> (i32, i32) {
    %c0_i32 = arith.constant 0 : i32
    %c0_i32_0 = arith.constant 0 : i32
    %c0_i32_1 = arith.constant 0 : i32
    return %c0_i32, %c0_i32_0 : i32, i32
  }
  func.func @transform_2(%arg0: i32) -> (i32, i32) {
    %c0_i32 = arith.constant 0 : i32
    %c0_i32_0 = arith.constant 0 : i32
    %c0_i32_1 = arith.constant 0 : i32
    return %c0_i32, %c0_i32_0 : i32, i32
  }
  func.func @transform_3(%arg0: i32) -> (i32, i32) {
    %c0_i32 = arith.constant 0 : i32
    %c0_i32_0 = arith.constant 0 : i32
    %c0_i32_1 = arith.constant 0 : i32
    return %c0_i32, %c0_i32_0 : i32, i32
  }
  func.func @transform_4(%arg0: i32) -> (i32, i32, i32) {
    %c0_i32 = arith.constant 0 : i32
    %c0_i32_0 = arith.constant 0 : i32
    %c0_i32_1 = arith.constant 0 : i32
    return %arg0, %c0_i32, %c0_i32_0 : i32, i32, i32
  }
}

</mosaic_0001>

<llo_original>
// kernel: discriminator_forward.4
$region0: #{discriminator_forward.4}
  #allocation0 [shape = 'u32[]', space=smem, size = 0x4, offset = 0x4, fixed_abs, tag = 'smem constant byte address 0x4 - core index']
  #allocation1 [shape = 'u32[144,128]{1,0:T(1,128)}', space=vmem, size = 0x12000, scoped, tag = 'internal scratch']
  %s0 = inlined_call_operand.vmem [shape: bf16[2,16,4096], index: 0, kind: input, shape index: {}]
  %s1 = inlined_call_operand.vmem [shape: bf16[16,16], index: 1, kind: input, shape index: {}]
  %s2 = inlined_call_operand.vmem [shape: f32[16,1], index: 2, kind: input, shape index: {}]
  %s3 = inlined_call_operand.vmem [shape: bf16[2,16,4096], index: 3, kind: output, shape index: {}]
  %s4 = sld [smem:[#allocation0]]
  $region45: #{discriminator_forward.4} parent=0
    _
  %s6 = ssub.s32 1, %s4
  %s7 = scalar_select 0, %s6, %s4
  loop: start=0, step=1, limit=4
  $region2: #{discriminator_forward.4} parent=0 // loop_pre_header
    _
  $region3: #{discriminator_forward.4} parent=0 // loop_header
    %s9 = sphi 0, %s13
    %p10 = scmp.ge.s32.totalorder %s9, 4
    %s19 = sphi 0, %s21
    %s22 = sphi 0, %s19
    %s23 = sphi 0, %s22
    %s39 = sphi 0, %s23
    %s43 = sphi 0, %s43
    %s45 = sphi 0, %s43
    %s46 = sphi 0, %s45
    %s60 = sphi 0, %s46
    %s64 = sphi 0, %s64
    %s66 = sphi 0, %s64
    %s67 = sphi 0, %s66
    %s81 = sphi 0, %s67
    %s87 = sphi 0, %s89
    %s90 = sphi 0, %s87
    %s91 = sphi 0, %s90
    %s107 = sphi 0, %s91
  $region4: #{discriminator_forward.4} parent=0 // loop_header_branch
    %12 = sbr.rel (%p10) target = $region8
  $region5: #{discriminator_forward.4} parent=0 // loop_body
    %s14 = ssub.s32 %s9, 1
    %s15 = ssub.s32 %s9, 2
    %s16 = sadd.s32 %s9, 1
    %s17 = ssub.s32 %s9, %s16
    %p18 = scmp.eq.s32.totalorder %s17, 0
    %s20 = sadd.s32 %s19, 1
    %s21 = scalar_select %p18, %s19, %s20
    %p24 = pneg %p18
    %p25 = scmp.eq.s32.totalorder %s9, 1
    %p26 = por %p24, %p25
    %p27 = scmp.ne.s32.totalorder %s19, %s22
    %p28 = scmp.eq.s32.totalorder %s9, 0
    %p29 = por %p27, %p28
    %p30 = scmp.ne.s32.totalorder %s19, %s22
    %p31 = scmp.eq.s32.totalorder %s14, 1
    %p32 = por %p30, %p31
    %p33 = scmp.ne.s32.totalorder %s22, %s23
    %p34 = scmp.eq.s32.totalorder %s14, 0
    %p35 = por %p33, %p34
    %p36 = scmp.ne.s32.totalorder %s22, %s23
    %p37 = scmp.eq.s32.totalorder %s15, 1
    %p38 = por %p36, %p37
    %p40 = scmp.ne.s32.totalorder %s23, %s39
    %p41 = scmp.eq.s32.totalorder %s15, 0
    %p42 = por %p40, %p41
    %s44 = sadd.s32 %s43, 1
    %p47 = scmp.eq.s32.totalorder %s9, 1
    %p48 = scmp.ne.s32.totalorder %s43, %s45
    %p49 = scmp.eq.s32.totalorder %s9, 0
    %p50 = por %p48, %p49
    %p51 = scmp.ne.s32.totalorder %s43, %s45
    %p52 = scmp.eq.s32.totalorder %s14, 1
    %p53 = por %p51, %p52
    %p54 = scmp.ne.s32.totalorder %s45, %s46
    %p55 = scmp.eq.s32.totalorder %s14, 0
    %p56 = por %p54, %p55
    %p57 = scmp.ne.s32.totalorder %s45, %s46
    %p58 = scmp.eq.s32.totalorder %s15, 1
    %p59 = por %p57, %p58
    %p61 = scmp.ne.s32.totalorder %s46, %s60
    %p62 = scmp.eq.s32.totalorder %s15, 0
    %p63 = por %p61, %p62
    %s65 = sadd.s32 %s64, 1
    %p68 = scmp.eq.s32.totalorder %s9, 1
    %p69 = scmp.ne.s32.totalorder %s64, %s66
    %p70 = scmp.eq.s32.totalorder %s9, 0
    %p71 = por %p69, %p70
    %p72 = scmp.ne.s32.totalorder %s64, %s66
    %p73 = scmp.eq.s32.totalorder %s14, 1
    %p74 = por %p72, %p73
    %p75 = scmp.ne.s32.totalorder %s66, %s67
    %p76 = scmp.eq.s32.totalorder %s14, 0
    %p77 = por %p75, %p76
    %p78 = scmp.ne.s32.totalorder %s66, %s67
    %p79 = scmp.eq.s32.totalorder %s15, 1
    %p80 = por %p78, %p79
    %p82 = scmp.ne.s32.totalorder %s67, %s81
    %p83 = scmp.eq.s32.totalorder %s15, 0
    %p84 = por %p82, %p83
    %s85 = ssub.s32 %s9, %s16
    %p86 = scmp.eq.s32.totalorder %s85, 0
    %s88 = sadd.s32 %s87, 1
    %s89 = scalar_select %p86, %s87, %s88
    %p92 = pneg %p86
    %p93 = scmp.eq.s32.totalorder %s9, 1
    %p94 = por %p92, %p93
    %p95 = scmp.ne.s32.totalorder %s87, %s90
    %p96 = scmp.eq.s32.totalorder %s9, 0
    %p97 = por %p95, %p96
    %p98 = scmp.ne.s32.totalorder %s87, %s90
    %p99 = scmp.eq.s32.totalorder %s14, 1
    %p100 = por %p98, %p99
    %p101 = scmp.ne.s32.totalorder %s90, %s91
    %p102 = scmp.eq.s32.totalorder %s14, 0
    %p103 = por %p101, %p102
    %p104 = scmp.ne.s32.totalorder %s90, %s91
    %p105 = scmp.eq.s32.totalorder %s15, 1
    %p106 = por %p104, %p105
    %p108 = scmp.ne.s32.totalorder %s91, %s107
    %p109 = scmp.eq.s32.totalorder %s15, 0
    %p110 = por %p108, %p109
    %p111 = scmp.le.s32.totalorder 1, %s9
    %p112 = scmp.lt.s32.totalorder %s9, 3
    %p113 = pnand %p111, %p112
    %p114 = pneg %p113
    // Predicated region
    $region9: #{discriminator_forward.4} parent=5 // pred_check
      _
    $region10: #{discriminator_forward.4} parent=5 // pred_check_branch
      %116 = sbr.rel (%p113) target = $region12
    $region11: #{discriminator_forward.4} parent=5 // pred_region
      %s117 = ssub.s32 %s9, 1
      // Predicated region
      $region13: #{discriminator_forward.4} parent=11 // pred_check
        %p118 = pneg %p56
      $region14: #{discriminator_forward.4} parent=11 // pred_check_branch
        %120 = sbr.rel (%p118) target = $region16
      $region15: #{discriminator_forward.4} parent=11 // pred_region
        _
      $region16: #{discriminator_forward.4} parent=11 // pred_fallthru
        _
      // Predicated region
      $region17: #{discriminator_forward.4} parent=11 // pred_check
        %p121 = pneg %p77
      $region18: #{discriminator_forward.4} parent=11 // pred_check_branch
        %123 = sbr.rel (%p121) target = $region20
      $region19: #{discriminator_forward.4} parent=11 // pred_region
        _
      $region20: #{discriminator_forward.4} parent=11 // pred_fallthru
        _
    $region12: #{discriminator_forward.4} parent=5 // pred_fallthru
      _
    %p124 = scmp.lt.s32.totalorder %s9, 2
    // Predicated region
    $region21: #{discriminator_forward.4} parent=5 // pred_check
      %p125 = pneg %p124
    $region22: #{discriminator_forward.4} parent=5 // pred_check_branch
      %127 = sbr.rel (%p125) target = $region24
    $region23: #{discriminator_forward.4} parent=5 // pred_region
      // Predicated region
      $region25: #{discriminator_forward.4} parent=23 // pred_check
        %p128 = pneg %p29
      $region26: #{discriminator_forward.4} parent=23 // pred_check_branch
        %130 = sbr.rel (%p128) target = $region28
      $region27: #{discriminator_forward.4} parent=23 // pred_region
        %p131 = scmp.lt.s32.totalorder %s9, 1
        %s132 = scalar_select %p131, %s9, 1
        %s133 = smul.addr %s132, 64
        %s134 = smul.addr %s133, 4
        %s135 = scalar_lea.vmem %s0, %s134
      $region28: #{discriminator_forward.4} parent=23 // pred_fallthru
        _
    $region24: #{discriminator_forward.4} parent=5 // pred_fallthru
      _
    %p136 = scmp.le.s32.totalorder 1, %s9
    %p137 = scmp.lt.s32.totalorder %s9, 3
    %p138 = pnand %p136, %p137
    %p139 = pneg %p138
    // Predicated region
    $region29: #{discriminator_forward.4} parent=5 // pred_check
      _
    $region30: #{discriminator_forward.4} parent=5 // pred_check_branch
      %141 = sbr.rel (%p138) target = $region32
    $region31: #{discriminator_forward.4} parent=5 // pred_region
      %s142 = ssub.s32 %s9, 1
      %p143 = scmp.lt.s32.totalorder %s14, 1
      %s144 = scalar_select %p143, %s14, 1
      %s145 = smul.addr %s144, 64
      %s146 = smul.addr %s145, 4
      %s147 = scalar_lea.vmem %s0, %s146
      %p148 = pneg %p35
      %p149 = pneg %p32
      %p150 = pneg %p56
      %p151 = pneg %p53
      %p152 = pneg %p77
      %p153 = pneg %p74
      %p154 = pneg %p103
      %p155 = pneg %p100
      %p156 = scmp.lt.s32.totalorder %s14, 1
      %s157 = scalar_select %p156, %s14, 1
      %s158 = smul.addr %s157, 64
      %s159 = smul.addr %s158, 4
      %s160 = scalar_lea.vmem %s3, %s159
      %p161 = scmp.lt.s32.totalorder %s14, 1
      %s162 = scalar_select %p161, %s14, 1
      %s163 = smul.addr %s162, 64
      %s164 = smul.addr %s163, 4
      %s165 = scalar_lea.vmem %s0, %s164
      %p166 = scmp.lt.s32.totalorder %s14, 1
      %s167 = scalar_select %p166, %s14, 1
      %s168 = smul.addr %s167, 64
      %s169 = smul.addr %s168, 4
      %s170 = scalar_lea.vmem %s3, %s169
      %v172 = vld [vmem:[%s1] sm:$0xf]
      %v173 = vld [vmem:[%s1 + $0x4] sm:$0xf]
      %v174 = vld [vmem:[%s165] sm:$0xff]
      %v175 = vld [vmem:[%s165 + $0x8] sm:$0xff]
      %v176 = vld [vmem:[%s165 + $0x10] sm:$0xff]
      %v177 = vld [vmem:[%s165 + $0x18] sm:$0xff]
      %v178 = vld [vmem:[%s165 + $0x20] sm:$0xff]
      %v179 = vld [vmem:[%s165 + $0x28] sm:$0xff]
      %v180 = vld [vmem:[%s165 + $0x30] sm:$0xff]
      %v181 = vld [vmem:[%s165 + $0x38] sm:$0xff]
      %v182 = vld [vmem:[%s165 + $0x40] sm:$0xff]
      %v183 = vld [vmem:[%s165 + $0x48] sm:$0xff]
      %v184 = vld [vmem:[%s165 + $0x50] sm:$0xff]
      %v185 = vld [vmem:[%s165 + $0x58] sm:$0xff]
      %v186 = vld [vmem:[%s165 + $0x60] sm:$0xff]
      %v187 = vld [vmem:[%s165 + $0x68] sm:$0xff]
      %v188 = vld [vmem:[%s165 + $0x70] sm:$0xff]
      %v189 = vld [vmem:[%s165 + $0x78] sm:$0xff]
      %v190 = vld [vmem:[%s165 + $0x80] sm:$0xff]
      %v191 = vld [vmem:[%s165 + $0x88] sm:$0xff]
      %v192 = vld [vmem:[%s165 + $0x90] sm:$0xff]
      %v193 = vld [vmem:[%s165 + $0x98] sm:$0xff]
      %v194 = vld [vmem:[%s165 + $0xa0] sm:$0xff]
      %v195 = vld [vmem:[%s165 + $0xa8] sm:$0xff]
      %v196 = vld [vmem:[%s165 + $0xb0] sm:$0xff]
      %v197 = vld [vmem:[%s165 + $0xb8] sm:$0xff]
      %v198 = vld [vmem:[%s165 + $0xc0] sm:$0xff]
      %v199 = vld [vmem:[%s165 + $0xc8] sm:$0xff]
      %v200 = vld [vmem:[%s165 + $0xd0] sm:$0xff]
      %v201 = vld [vmem:[%s165 + $0xd8] sm:$0xff]
      %v202 = vld [vmem:[%s165 + $0xe0] sm:$0xff]
      %v203 = vld [vmem:[%s165 + $0xe8] sm:$0xff]
      %v204 = vld [vmem:[%s165 + $0xf0] sm:$0xff]
      %v205 = vld [vmem:[%s165 + $0xf8] sm:$0xff]
      %v206 = vld [vmem:[%s2] sm:$0xff]
      %v207 = vld [vmem:[%s2 + $0x8] sm:$0xff]
      %209 = vset.pattern.permute.xlu0 0
      %210 = vperm.xlu0 %209, %v206
      %v211 = vpop.permute.xlu0 %210
      %214 = vset.pattern.permute.xlu0 0
      %215 = vperm.xlu0 %214, %v207
      %v216 = vpop.permute.xlu0 %215
      %v220 = vunpack.c.l.b16 %v172
      %v221 = vunpack.c.l.b16 %v173
      %v222 = vpack.c.b16 %v221, %v220
      %v255 = vunpack.c.l.b16 %v174
      %v256 = vunpack.c.h.b16 %v174
      %v257 = vunpack.c.l.b16 %v175
      %v258 = vunpack.c.h.b16 %v175
      %v259 = vunpack.c.l.b16 %v176
      %v260 = vunpack.c.h.b16 %v176
      %v261 = vunpack.c.l.b16 %v177
      %v262 = vunpack.c.h.b16 %v177
      %v263 = vunpack.c.l.b16 %v178
      %v264 = vunpack.c.h.b16 %v178
      %v265 = vunpack.c.l.b16 %v179
      %v266 = vunpack.c.h.b16 %v179
      %v267 = vunpack.c.l.b16 %v180
      %v268 = vunpack.c.h.b16 %v180
      %v269 = vunpack.c.l.b16 %v181
      %v270 = vunpack.c.h.b16 %v181
      %v271 = vunpack.c.l.b16 %v182
      %v272 = vunpack.c.h.b16 %v182
      %v273 = vunpack.c.l.b16 %v183
      %v274 = vunpack.c.h.b16 %v183
      %v275 = vunpack.c.l.b16 %v184
      %v276 = vunpack.c.h.b16 %v184
      %v277 = vunpack.c.l.b16 %v185
      %v278 = vunpack.c.h.b16 %v185
      %v279 = vunpack.c.l.b16 %v186
      %v280 = vunpack.c.h.b16 %v186
      %v281 = vunpack.c.l.b16 %v187
      %v282 = vunpack.c.h.b16 %v187
      %v283 = vunpack.c.l.b16 %v188
      %v284 = vunpack.c.h.b16 %v188
      %v285 = vunpack.c.l.b16 %v189
      %v286 = vunpack.c.h.b16 %v189
      %v287 = vunpack.c.l.b16 %v190
      %v288 = vunpack.c.h.b16 %v190
      %v289 = vunpack.c.l.b16 %v191
      %v290 = vunpack.c.h.b16 %v191
      %v291 = vunpack.c.l.b16 %v192
      %v292 = vunpack.c.h.b16 %v192
      %v293 = vunpack.c.l.b16 %v193
      %v294 = vunpack.c.h.b16 %v193
      %v295 = vunpack.c.l.b16 %v194
      %v296 = vunpack.c.h.b16 %v194
      %v297 = vunpack.c.l.b16 %v195
      %v298 = vunpack.c.h.b16 %v195
      %v299 = vunpack.c.l.b16 %v196
      %v300 = vunpack.c.h.b16 %v196
      %v301 = vunpack.c.l.b16 %v197
      %v302 = vunpack.c.h.b16 %v197
      %v303 = vunpack.c.l.b16 %v198
      %v304 = vunpack.c.h.b16 %v198
      %v305 = vunpack.c.l.b16 %v199
      %v306 = vunpack.c.h.b16 %v199
      %v307 = vunpack.c.l.b16 %v200
      %v308 = vunpack.c.h.b16 %v200
      %v309 = vunpack.c.l.b16 %v201
      %v310 = vunpack.c.h.b16 %v201
      %v311 = vunpack.c.l.b16 %v202
      %v312 = vunpack.c.h.b16 %v202
      %v313 = vunpack.c.l.b16 %v203
      %v314 = vunpack.c.h.b16 %v203
      %v315 = vunpack.c.l.b16 %v204
      %v316 = vunpack.c.h.b16 %v204
      %v317 = vunpack.c.l.b16 %v205
      %v318 = vunpack.c.h.b16 %v205
      %v319 = vpack.c.b16 %v287, %v255
      %v320 = vpack.c.b16 %v288, %v256
      %v321 = vpack.c.b16 %v289, %v257
      %v322 = vpack.c.b16 %v290, %v258
      %v323 = vpack.c.b16 %v291, %v259
      %v324 = vpack.c.b16 %v292, %v260
      %v325 = vpack.c.b16 %v293, %v261
      %v326 = vpack.c.b16 %v294, %v262
      %v327 = vpack.c.b16 %v295, %v263
      %v328 = vpack.c.b16 %v296, %v264
      %v329 = vpack.c.b16 %v297, %v265
      %v330 = vpack.c.b16 %v298, %v266
      %v331 = vpack.c.b16 %v299, %v267
      %v332 = vpack.c.b16 %v300, %v268
      %v333 = vpack.c.b16 %v301, %v269
      %v334 = vpack.c.b16 %v302, %v270
      %v335 = vpack.c.b16 %v303, %v271
      %v336 = vpack.c.b16 %v304, %v272
      %v337 = vpack.c.b16 %v305, %v273
      %v338 = vpack.c.b16 %v306, %v274
      %v339 = vpack.c.b16 %v307, %v275
      %v340 = vpack.c.b16 %v308, %v276
      %v341 = vpack.c.b16 %v309, %v277
      %v342 = vpack.c.b16 %v310, %v278
      %v343 = vpack.c.b16 %v311, %v279
      %v344 = vpack.c.b16 %v312, %v280
      %v345 = vpack.c.b16 %v313, %v281
      %v346 = vpack.c.b16 %v314, %v282
      %v347 = vpack.c.b16 %v315, %v283
      %v348 = vpack.c.b16 %v316, %v284
      %v349 = vpack.c.b16 %v317, %v285
      %v350 = vpack.c.b16 %v318, %v286
      %vm383 = vcmask 130048
      %v385 = vsel %vm383, %v222, 0
      %387 = vmatprep.subr.bf16.mxu0 0
      %388 = vmatpush1.bf16.msra.mxu0 0
      %389 = vmatprep.subr.bf16.mxu0 0
      %390 = vmatpush1.bf16.msra.mxu0 0
      %391 = vmatprep.subr.bf16.mxu0 0
      %392 = vmatpush1.bf16.msra.mxu0 0
      %393 = vmatprep.subr.bf16.mxu0 0
      %394 = vmatpush1.bf16.msra.mxu0 0
      %395 = vmatprep.subr.bf16.mxu0 0
      %396 = vmatpush1.bf16.msra.mxu0 0
      %397 = vmatprep.subr.bf16.mxu0 0
      %398 = vmatpush1.bf16.msra.mxu0 0
      %399 = vmatprep.subr.bf16.mxu0 0
      %400 = vmatpush1.bf16.msra.mxu0 0
      %401 = vmatprep.subr.bf16.mxu0 %v320
      %402 = vmatpush1.bf16.msra.mxu0 %v319
      %403 = vmatprep.subr.bf16.mxu0 0
      %404 = vmatpush2.bf16.msra.mxu0 0
      %405 = vmatprep.subr.bf16.mxu0 0
      %406 = vmatpush2.bf16.msra.mxu0 0
      %407 = vmatprep.subr.bf16.mxu0 0
      %408 = vmatpush2.bf16.msra.mxu0 0
      %409 = vmatprep.subr.bf16.mxu0 0
      %410 = vmatpush2.bf16.msra.mxu0 0
      %411 = vmatprep.subr.bf16.mxu0 0
      %412 = vmatpush2.bf16.msra.mxu0 0
      %413 = vmatprep.subr.bf16.mxu0 0
      %414 = vmatpush2.bf16.msra.mxu0 0
      %415 = vmatprep.subr.bf16.mxu0 0
      %416 = vmatpush2.bf16.msra.mxu0 0
      %417 = vmatprep.subr.bf16.mxu0 0
      %418 = vmatpush2.bf16.msra.mxu0 0
      %419 = vmatprep.mubr.bf16.mxu0 0
      %420 = vmatmul.mubr.bf16.gmra.mxu0 %v385
      %v421 = vpop.f32.mrf.mxu0
      %v422 = vadd.f32 %v211, %v421
      %v423 = vpop.f32.mrf.mxu0
      %v424 = vadd.f32 %v211, %v423
      %v425 = vpop.f32.mrf.mxu0
      %v426 = vadd.f32 %v216, %v425
      %v427 = vpop.f32.mrf.mxu0
      %v428 = vadd.f32 %v216, %v427
      %429 = vdwg.mxu0
      %430 = vmatprep.subr.bf16.mxu0 0
      %431 = vmatpush1.bf16.msra.mxu0 0
      %432 = vmatprep.subr.bf16.mxu0 0
      %433 = vmatpush1.bf16.msra.mxu0 0
      %434 = vmatprep.subr.bf16.mxu0 0
      %435 = vmatpush1.bf16.msra.mxu0 0
      %436 = vmatprep.subr.bf16.mxu0 0
      %437 = vmatpush1.bf16.msra.mxu0 0
      %438 = vmatprep.subr.bf16.mxu0 0
      %439 = vmatpush1.bf16.msra.mxu0 0
      %440 = vmatprep.subr.bf16.mxu0 0
      %441 = vmatpush1.bf16.msra.mxu0 0
      %442 = vmatprep.subr.bf16.mxu0 0
      %443 = vmatpush1.bf16.msra.mxu0 0
      %444 = vmatprep.subr.bf16.mxu0 %v322
      %445 = vmatpush1.bf16.msra.mxu0 %v321
      %446 = vmatprep.subr.bf16.mxu0 0
      %447 = vmatpush2.bf16.msra.mxu0 0
      %448 = vmatprep.subr.bf16.mxu0 0
      %449 = vmatpush2.bf16.msra.mxu0 0
      %450 = vmatprep.subr.bf16.mxu0 0
      %451 = vmatpush2.bf16.msra.mxu0 0
      %452 = vmatprep.subr.bf16.mxu0 0
      %453 = vmatpush2.bf16.msra.mxu0 0
      %454 = vmatprep.subr.bf16.mxu0 0
      %455 = vmatpush2.bf16.msra.mxu0 0
      %456 = vmatprep.subr.bf16.mxu0 0
      %457 = vmatpush2.bf16.msra.mxu0 0
      %458 = vmatprep.subr.bf16.mxu0 0
      %459 = vmatpush2.bf16.msra.mxu0 0
      %460 = vmatprep.subr.bf16.mxu0 0
      %461 = vmatpush2.bf16.msra.mxu0 0
      %462 = vmatprep.mubr.bf16.mxu0 0
      %463 = vmatmul.mubr.bf16.gmra.mxu0 %v385
      %v464 = vpop.f32.mrf.mxu0
      %v465 = vadd.f32 %v211, %v464
      %v466 = vpop.f32.mrf.mxu0
      %v467 = vadd.f32 %v211, %v466
      %v468 = vpop.f32.mrf.mxu0
      %v469 = vadd.f32 %v216, %v468
      %v470 = vpop.f32.mrf.mxu0
      %v471 = vadd.f32 %v216, %v470
      %472 = vdwg.mxu0
      %473 = vmatprep.subr.bf16.mxu0 0
      %474 = vmatpush1.bf16.msra.mxu0 0
      %475 = vmatprep.subr.bf16.mxu0 0
      %476 = vmatpush1.bf16.msra.mxu0 0
      %477 = vmatprep.subr.bf16.mxu0 0
      %478 = vmatpush1.bf16.msra.mxu0 0
      %479 = vmatprep.subr.bf16.mxu0 0
      %480 = vmatpush1.bf16.msra.mxu0 0
      %481 = vmatprep.subr.bf16.mxu0 0
      %482 = vmatpush1.bf16.msra.mxu0 0
      %483 = vmatprep.subr.bf16.mxu0 0
      %484 = vmatpush1.bf16.msra.mxu0 0
      %485 = vmatprep.subr.bf16.mxu0 0
      %486 = vmatpush1.bf16.msra.mxu0 0
      %487 = vmatprep.subr.bf16.mxu0 %v324
      %488 = vmatpush1.bf16.msra.mxu0 %v323
      %489 = vmatprep.subr.bf16.mxu0 0
      %490 = vmatpush2.bf16.msra.mxu0 0
      %491 = vmatprep.subr.bf16.mxu0 0
      %492 = vmatpush2.bf16.msra.mxu0 0
      %493 = vmatprep.subr.bf16.mxu0 0
      %494 = vmatpush2.bf16.msra.mxu0 0
      %495 = vmatprep.subr.bf16.mxu0 0
      %496 = vmatpush2.bf16.msra.mxu0 0
      %497 = vmatprep.subr.bf16.mxu0 0
      %498 = vmatpush2.bf16.msra.mxu0 0
      %499 = vmatprep.subr.bf16.mxu0 0
      %500 = vmatpush2.bf16.msra.mxu0 0
      %501 = vmatprep.subr.bf16.mxu0 0
      %502 = vmatpush2.bf16.msra.mxu0 0
      %503 = vmatprep.subr.bf16.mxu0 0
      %504 = vmatpush2.bf16.msra.mxu0 0
      %505 = vmatprep.mubr.bf16.mxu0 0
      %506 = vmatmul.mubr.bf16.gmra.mxu0 %v385
      %v507 = vpop.f32.mrf.mxu0
      %v508 = vadd.f32 %v211, %v507
      %v509 = vpop.f32.mrf.mxu0
      %v510 = vadd.f32 %v211, %v509
      %v511 = vpop.f32.mrf.mxu0
      %v512 = vadd.f32 %v216, %v511
      %v513 = vpop.f32.mrf.mxu0
      %v514 = vadd.f32 %v216, %v513
      %515 = vdwg.mxu0
      %516 = vmatprep.subr.bf16.mxu0 0
      %517 = vmatpush1.bf16.msra.mxu0 0
      %518 = vmatprep.subr.bf16.mxu0 0
      %519 = vmatpush1.bf16.msra.mxu0 0
      %520 = vmatprep.subr.bf16.mxu0 0
      %521 = vmatpush1.bf16.msra.mxu0 0
      %522 = vmatprep.subr.bf16.mxu0 0
      %523 = vmatpush1.bf16.msra.mxu0 0
      %524 = vmatprep.subr.bf16.mxu0 0
      %525 = vmatpush1.bf16.msra.mxu0 0
      %526 = vmatprep.subr.bf16.mxu0 0
      %527 = vmatpush1.bf16.msra.mxu0 0
      %528 = vmatprep.subr.bf16.mxu0 0
      %529 = vmatpush1.bf16.msra.mxu0 0
      %530 = vmatprep.subr.bf16.mxu0 %v326
      %531 = vmatpush1.bf16.msra.mxu0 %v325
      %532 = vmatprep.subr.bf16.mxu0 0
      %533 = vmatpush2.bf16.msra.mxu0 0
      %534 = vmatprep.subr.bf16.mxu0 0
      %535 = vmatpush2.bf16.msra.mxu0 0
      %536 = vmatprep.subr.bf16.mxu0 0
      %537 = vmatpush2.bf16.msra.mxu0 0
      %538 = vmatprep.subr.bf16.mxu0 0
      %539 = vmatpush2.bf16.msra.mxu0 0
      %540 = vmatprep.subr.bf16.mxu0 0
      %541 = vmatpush2.bf16.msra.mxu0 0
      %542 = vmatprep.subr.bf16.mxu0 0
      %543 = vmatpush2.bf16.msra.mxu0 0
      %544 = vmatprep.subr.bf16.mxu0 0
      %545 = vmatpush2.bf16.msra.mxu0 0
      %546 = vmatprep.subr.bf16.mxu0 0
      %547 = vmatpush2.bf16.msra.mxu0 0
      %548 = vmatprep.mubr.bf16.mxu0 0
      %549 = vmatmul.mubr.bf16.gmra.mxu0 %v385
      %v550 = vpop.f32.mrf.mxu0
      %v551 = vadd.f32 %v211, %v550
      %v552 = vpop.f32.mrf.mxu0
      %v553 = vadd.f32 %v211, %v552
      %v554 = vpop.f32.mrf.mxu0
      %v555 = vadd.f32 %v216, %v554
      %v556 = vpop.f32.mrf.mxu0
      %v557 = vadd.f32 %v216, %v556
      %558 = vdwg.mxu0
      %559 = vmatprep.subr.bf16.mxu0 0
      %560 = vmatpush1.bf16.msra.mxu0 0
      %561 = vmatprep.subr.bf16.mxu0 0
      %562 = vmatpush1.bf16.msra.mxu0 0
      %563 = vmatprep.subr.bf16.mxu0 0
      %564 = vmatpush1.bf16.msra.mxu0 0
      %565 = vmatprep.subr.bf16.mxu0 0
      %566 = vmatpush1.bf16.msra.mxu0 0
      %567 = vmatprep.subr.bf16.mxu0 0
      %568 = vmatpush1.bf16.msra.mxu0 0
      %569 = vmatprep.subr.bf16.mxu0 0
      %570 = vmatpush1.bf16.msra.mxu0 0
      %571 = vmatprep.subr.bf16.mxu0 0
      %572 = vmatpush1.bf16.msra.mxu0 0
      %573 = vmatprep.subr.bf16.mxu0 %v328
      %574 = vmatpush1.bf16.msra.mxu0 %v327
      %575 = vmatprep.subr.bf16.mxu0 0
      %576 = vmatpush2.bf16.msra.mxu0 0
      %577 = vmatprep.subr.bf16.mxu0 0
      %578 = vmatpush2.bf16.msra.mxu0 0
      %579 = vmatprep.subr.bf16.mxu0 0
      %580 = vmatpush2.bf16.msra.mxu0 0
      %581 = vmatprep.subr.bf16.mxu0 0
      %582 = vmatpush2.bf16.msra.mxu0 0
      %583 = vmatprep.subr.bf16.mxu0 0
      %584 = vmatpush2.bf16.msra.mxu0 0
      %585 = vmatprep.subr.bf16.mxu0 0
      %586 = vmatpush2.bf16.msra.mxu0 0
      %587 = vmatprep.subr.bf16.mxu0 0
      %588 = vmatpush2.bf16.msra.mxu0 0
      %589 = vmatprep.subr.bf16.mxu0 0
      %590 = vmatpush2.bf16.msra.mxu0 0
      %591 = vmatprep.mubr.bf16.mxu0 0
      %592 = vmatmul.mubr.bf16.gmra.mxu0 %v385
      %v593 = vpop.f32.mrf.mxu0
      %v594 = vadd.f32 %v211, %v593
      %v595 = vpop.f32.mrf.mxu0
      %v596 = vadd.f32 %v211, %v595
      %v597 = vpop.f32.mrf.mxu0
      %v598 = vadd.f32 %v216, %v597
      %v599 = vpop.f32.mrf.mxu0
      %v600 = vadd.f32 %v216, %v599
      %601 = vdwg.mxu0
      %602 = vmatprep.subr.bf16.mxu0 0
      %603 = vmatpush1.bf16.msra.mxu0 0
      %604 = vmatprep.subr.bf16.mxu0 0
      %605 = vmatpush1.bf16.msra.mxu0 0
      %606 = vmatprep.subr.bf16.mxu0 0
      %607 = vmatpush1.bf16.msra.mxu0 0
      %608 = vmatprep.subr.bf16.mxu0 0
      %609 = vmatpush1.bf16.msra.mxu0 0
      %610 = vmatprep.subr.bf16.mxu0 0
      %611 = vmatpush1.bf16.msra.mxu0 0
      %612 = vmatprep.subr.bf16.mxu0 0
      %613 = vmatpush1.bf16.msra.mxu0 0
      %614 = vmatprep.subr.bf16.mxu0 0
      %615 = vmatpush1.bf16.msra.mxu0 0
      %616 = vmatprep.subr.bf16.mxu0 %v330
      %617 = vmatpush1.bf16.msra.mxu0 %v329
      %618 = vmatprep.subr.bf16.mxu0 0
      %619 = vmatpush2.bf16.msra.mxu0 0
      %620 = vmatprep.subr.bf16.mxu0 0
      %621 = vmatpush2.bf16.msra.mxu0 0
      %622 = vmatprep.subr.bf16.mxu0 0
      %623 = vmatpush2.bf16.msra.mxu0 0
      %624 = vmatprep.subr.bf16.mxu0 0
      %625 = vmatpush2.bf16.msra.mxu0 0
      %626 = vmatprep.subr.bf16.mxu0 0
      %627 = vmatpush2.bf16.msra.mxu0 0
      %628 = vmatprep.subr.bf16.mxu0 0
      %629 = vmatpush2.bf16.msra.mxu0 0
      %630 = vmatprep.subr.bf16.mxu0 0
      %631 = vmatpush2.bf16.msra.mxu0 0
      %632 = vmatprep.subr.bf16.mxu0 0
      %633 = vmatpush2.bf16.msra.mxu0 0
      %634 = vmatprep.mubr.bf16.mxu0 0
      %635 = vmatmul.mubr.bf16.gmra.mxu0 %v385
      %v636 = vpop.f32.mrf.mxu0
      %v637 = vadd.f32 %v211, %v636
      %v638 = vpop.f32.mrf.mxu0
      %v639 = vadd.f32 %v211, %v638
      %v640 = vpop.f32.mrf.mxu0
      %v641 = vadd.f32 %v216, %v640
      %v642 = vpop.f32.mrf.mxu0
      %v643 = vadd.f32 %v216, %v642
      %644 = vdwg.mxu0
      %645 = vmatprep.subr.bf16.mxu0 0
      %646 = vmatpush1.bf16.msra.mxu0 0
      %647 = vmatprep.subr.bf16.mxu0 0
      %648 = vmatpush1.bf16.msra.mxu0 0
      %649 = vmatprep.subr.bf16.mxu0 0
      %650 = vmatpush1.bf16.msra.mxu0 0
      %651 = vmatprep.subr.bf16.mxu0 0
      %652 = vmatpush1.bf16.msra.mxu0 0
      %653 = vmatprep.subr.bf16.mxu0 0
      %654 = vmatpush1.bf16.msra.mxu0 0
      %655 = vmatprep.subr.bf16.mxu0 0
      %656 = vmatpush1.bf16.msra.mxu0 0
      %657 = vmatprep.subr.bf16.mxu0 0
      %658 = vmatpush1.bf16.msra.mxu0 0
      %659 = vmatprep.subr.bf16.mxu0 %v332
      %660 = vmatpush1.bf16.msra.mxu0 %v331
      %661 = vmatprep.subr.bf16.mxu0 0
      %662 = vmatpush2.bf16.msra.mxu0 0
      %663 = vmatprep.subr.bf16.mxu0 0
      %664 = vmatpush2.bf16.msra.mxu0 0
      %665 = vmatprep.subr.bf16.mxu0 0
      %666 = vmatpush2.bf16.msra.mxu0 0
      %667 = vmatprep.subr.bf16.mxu0 0
      %668 = vmatpush2.bf16.msra.mxu0 0
      %669 = vmatprep.subr.bf16.mxu0 0
      %670 = vmatpush2.bf16.msra.mxu0 0
      %671 = vmatprep.subr.bf16.mxu0 0
      %672 = vmatpush2.bf16.msra.mxu0 0
      %673 = vmatprep.subr.bf16.mxu0 0
      %674 = vmatpush2.bf16.msra.mxu0 0
      %675 = vmatprep.subr.bf16.mxu0 0
      %676 = vmatpush2.bf16.msra.mxu0 0
      %677 = vmatprep.mubr.bf16.mxu0 0
      %678 = vmatmul.mubr.bf16.gmra.mxu0 %v385
      %v679 = vpop.f32.mrf.mxu0
      %v680 = vadd.f32 %v211, %v679
      %v681 = vpop.f32.mrf.mxu0
      %v682 = vadd.f32 %v211, %v681
      %v683 = vpop.f32.mrf.mxu0
      %v684 = vadd.f32 %v216, %v683
      %v685 = vpop.f32.mrf.mxu0
      %v686 = vadd.f32 %v216, %v685
      %687 = vdwg.mxu0
      %688 = vmatprep.subr.bf16.mxu0 0
      %689 = vmatpush1.bf16.msra.mxu0 0
      %690 = vmatprep.subr.bf16.mxu0 0
      %691 = vmatpush1.bf16.msra.mxu0 0
      %692 = vmatprep.subr.bf16.mxu0 0
      %693 = vmatpush1.bf16.msra.mxu0 0
      %694 = vmatprep.subr.bf16.mxu0 0
      %695 = vmatpush1.bf16.msra.mxu0 0
      %696 = vmatprep.subr.bf16.mxu0 0
      %697 = vmatpush1.bf16.msra.mxu0 0
      %698 = vmatprep.subr.bf16.mxu0 0
      %699 = vmatpush1.bf16.msra.mxu0 0
      %700 = vmatprep.subr.bf16.mxu0 0
      %701 = vmatpush1.bf16.msra.mxu0 0
      %702 = vmatprep.subr.bf16.mxu0 %v334
      %703 = vmatpush1.bf16.msra.mxu0 %v333
      %704 = vmatprep.subr.bf16.mxu0 0
      %705 = vmatpush2.bf16.msra.mxu0 0
      %706 = vmatprep.subr.bf16.mxu0 0
      %707 = vmatpush2.bf16.msra.mxu0 0
      %708 = vmatprep.subr.bf16.mxu0 0
      %709 = vmatpush2.bf16.msra.mxu0 0
      %710 = vmatprep.subr.bf16.mxu0 0
      %711 = vmatpush2.bf16.msra.mxu0 0
      %712 = vmatprep.subr.bf16.mxu0 0
      %713 = vmatpush2.bf16.msra.mxu0 0
      %714 = vmatprep.subr.bf16.mxu0 0
      %715 = vmatpush2.bf16.msra.mxu0 0
      %716 = vmatprep.subr.bf16.mxu0 0
      %717 = vmatpush2.bf16.msra.mxu0 0
      %718 = vmatprep.subr.bf16.mxu0 0
      %719 = vmatpush2.bf16.msra.mxu0 0
      %720 = vmatprep.mubr.bf16.mxu0 0
      %721 = vmatmul.mubr.bf16.gmra.mxu0 %v385
      %v722 = vpop.f32.mrf.mxu0
      %v723 = vadd.f32 %v211, %v722
      %v724 = vpop.f32.mrf.mxu0
      %v725 = vadd.f32 %v211, %v724
      %v726 = vpop.f32.mrf.mxu0
      %v727 = vadd.f32 %v216, %v726
      %v728 = vpop.f32.mrf.mxu0
      %v729 = vadd.f32 %v216, %v728
      %730 = vdwg.mxu0
      %731 = vmatprep.subr.bf16.mxu0 0
      %732 = vmatpush1.bf16.msra.mxu0 0
      %733 = vmatprep.subr.bf16.mxu0 0
      %734 = vmatpush1.bf16.msra.mxu0 0
      %735 = vmatprep.subr.bf16.mxu0 0
      %736 = vmatpush1.bf16.msra.mxu0 0
      %737 = vmatprep.subr.bf16.mxu0 0
      %738 = vmatpush1.bf16.msra.mxu0 0
      %739 = vmatprep.subr.bf16.mxu0 0
      %740 = vmatpush1.bf16.msra.mxu0 0
      %741 = vmatprep.subr.bf16.mxu0 0
      %742 = vmatpush1.bf16.msra.mxu0 0
      %743 = vmatprep.subr.bf16.mxu0 0
      %744 = vmatpush1.bf16.msra.mxu0 0
      %745 = vmatprep.subr.bf16.mxu0 %v336
      %746 = vmatpush1.bf16.msra.mxu0 %v335
      %747 = vmatprep.subr.bf16.mxu0 0
      %748 = vmatpush2.bf16.msra.mxu0 0
      %749 = vmatprep.subr.bf16.mxu0 0
      %750 = vmatpush2.bf16.msra.mxu0 0
      %751 = vmatprep.subr.bf16.mxu0 0
      %752 = vmatpush2.bf16.msra.mxu0 0
      %753 = vmatprep.subr.bf16.mxu0 0
      %754 = vmatpush2.bf16.msra.mxu0 0
      %755 = vmatprep.subr.bf16.mxu0 0
      %756 = vmatpush2.bf16.msra.mxu0 0
      %757 = vmatprep.subr.bf16.mxu0 0
      %758 = vmatpush2.bf16.msra.mxu0 0
      %759 = vmatprep.subr.bf16.mxu0 0
      %760 = vmatpush2.bf16.msra.mxu0 0
      %761 = vmatprep.subr.bf16.mxu0 0
      %762 = vmatpush2.bf16.msra.mxu0 0
      %763 = vmatprep.mubr.bf16.mxu0 0
      %764 = vmatmul.mubr.bf16.gmra.mxu0 %v385
      %v765 = vpop.f32.mrf.mxu0
      %v766 = vadd.f32 %v211, %v765
      %v767 = vpop.f32.mrf.mxu0
      %v768 = vadd.f32 %v211, %v767
      %v769 = vpop.f32.mrf.mxu0
      %v770 = vadd.f32 %v216, %v769
      %v771 = vpop.f32.mrf.mxu0
      %v772 = vadd.f32 %v216, %v771
      %773 = vdwg.mxu0
      %774 = vmatprep.subr.bf16.mxu0 0
      %775 = vmatpush1.bf16.msra.mxu0 0
      %776 = vmatprep.subr.bf16.mxu0 0
      %777 = vmatpush1.bf16.msra.mxu0 0
      %778 = vmatprep.subr.bf16.mxu0 0
      %779 = vmatpush1.bf16.msra.mxu0 0
      %780 = vmatprep.subr.bf16.mxu0 0
      %781 = vmatpush1.bf16.msra.mxu0 0
      %782 = vmatprep.subr.bf16.mxu0 0
      %783 = vmatpush1.bf16.msra.mxu0 0
      %784 = vmatprep.subr.bf16.mxu0 0
      %785 = vmatpush1.bf16.msra.mxu0 0
      %786 = vmatprep.subr.bf16.mxu0 0
      %787 = vmatpush1.bf16.msra.mxu0 0
      %788 = vmatprep.subr.bf16.mxu0 %v338
      %789 = vmatpush1.bf16.msra.mxu0 %v337
      %790 = vmatprep.subr.bf16.mxu0 0
      %791 = vmatpush2.bf16.msra.mxu0 0
      %792 = vmatprep.subr.bf16.mxu0 0
      %793 = vmatpush2.bf16.msra.mxu0 0
      %794 = vmatprep.subr.bf16.mxu0 0
      %795 = vmatpush2.bf16.msra.mxu0 0
      %796 = vmatprep.subr.bf16.mxu0 0
      %797 = vmatpush2.bf16.msra.mxu0 0
      %798 = vmatprep.subr.bf16.mxu0 0
      %799 = vmatpush2.bf16.msra.mxu0 0
      %800 = vmatprep.subr.bf16.mxu0 0
      %801 = vmatpush2.bf16.msra.mxu0 0
      %802 = vmatprep.subr.bf16.mxu0 0
      %803 = vmatpush2.bf16.msra.mxu0 0
      %804 = vmatprep.subr.bf16.mxu0 0
      %805 = vmatpush2.bf16.msra.mxu0 0
      %806 = vmatprep.mubr.bf16.mxu0 0
      %807 = vmatmul.mubr.bf16.gmra.mxu0 %v385
      %v808 = vpop.f32.mrf.mxu0
      %v809 = vadd.f32 %v211, %v808
      %v810 = vpop.f32.mrf.mxu0
      %v811 = vadd.f32 %v211, %v810
      %v812 = vpop.f32.mrf.mxu0
      %v813 = vadd.f32 %v216, %v812
      %v814 = vpop.f32.mrf.mxu0
      %v815 = vadd.f32 %v216, %v814
      %816 = vdwg.mxu0
      %817 = vmatprep.subr.bf16.mxu0 0
      %818 = vmatpush1.bf16.msra.mxu0 0
      %819 = vmatprep.subr.bf16.mxu0 0
      %820 = vmatpush1.bf16.msra.mxu0 0
      %821 = vmatprep.subr.bf16.mxu0 0
      %822 = vmatpush1.bf16.msra.mxu0 0
      %823 = vmatprep.subr.bf16.mxu0 0
      %824 = vmatpush1.bf16.msra.mxu0 0
      %825 = vmatprep.subr.bf16.mxu0 0
      %826 = vmatpush1.bf16.msra.mxu0 0
      %827 = vmatprep.subr.bf16.mxu0 0
      %828 = vmatpush1.bf16.msra.mxu0 0
      %829 = vmatprep.subr.bf16.mxu0 0
      %830 = vmatpush1.bf16.msra.mxu0 0
      %831 = vmatprep.subr.bf16.mxu0 %v340
      %832 = vmatpush1.bf16.msra.mxu0 %v339
      %833 = vmatprep.subr.bf16.mxu0 0
      %834 = vmatpush2.bf16.msra.mxu0 0
      %835 = vmatprep.subr.bf16.mxu0 0
      %836 = vmatpush2.bf16.msra.mxu0 0
      %837 = vmatprep.subr.bf16.mxu0 0
      %838 = vmatpush2.bf16.msra.mxu0 0
      %839 = vmatprep.subr.bf16.mxu0 0
      %840 = vmatpush2.bf16.msra.mxu0 0
      %841 = vmatprep.subr.bf16.mxu0 0
      %842 = vmatpush2.bf16.msra.mxu0 0
      %843 = vmatprep.subr.bf16.mxu0 0
      %844 = vmatpush2.bf16.msra.mxu0 0
      %845 = vmatprep.subr.bf16.mxu0 0
      %846 = vmatpush2.bf16.msra.mxu0 0
      %847 = vmatprep.subr.bf16.mxu0 0
      %848 = vmatpush2.bf16.msra.mxu0 0
      %849 = vmatprep.mubr.bf16.mxu0 0
      %850 = vmatmul.mubr.bf16.gmra.mxu0 %v385
      %v851 = vpop.f32.mrf.mxu0
      %v852 = vadd.f32 %v211, %v851
      %v853 = vpop.f32.mrf.mxu0
      %v854 = vadd.f32 %v211, %v853
      %v855 = vpop.f32.mrf.mxu0
      %v856 = vadd.f32 %v216, %v855
      %v857 = vpop.f32.mrf.mxu0
      %v858 = vadd.f32 %v216, %v857
      %859 = vdwg.mxu0
      %860 = vmatprep.subr.bf16.mxu0 0
      %861 = vmatpush1.bf16.msra.mxu0 0
      %862 = vmatprep.subr.bf16.mxu0 0
      %863 = vmatpush1.bf16.msra.mxu0 0
      %864 = vmatprep.subr.bf16.mxu0 0
      %865 = vmatpush1.bf16.msra.mxu0 0
      %866 = vmatprep.subr.bf16.mxu0 0
      %867 = vmatpush1.bf16.msra.mxu0 0
      %868 = vmatprep.subr.bf16.mxu0 0
      %869 = vmatpush1.bf16.msra.mxu0 0
      %870 = vmatprep.subr.bf16.mxu0 0
      %871 = vmatpush1.bf16.msra.mxu0 0
      %872 = vmatprep.subr.bf16.mxu0 0
      %873 = vmatpush1.bf16.msra.mxu0 0
      %874 = vmatprep.subr.bf16.mxu0 %v342
      %875 = vmatpush1.bf16.msra.mxu0 %v341
      %876 = vmatprep.subr.bf16.mxu0 0
      %877 = vmatpush2.bf16.msra.mxu0 0
      %878 = vmatprep.subr.bf16.mxu0 0
      %879 = vmatpush2.bf16.msra.mxu0 0
      %880 = vmatprep.subr.bf16.mxu0 0
      %881 = vmatpush2.bf16.msra.mxu0 0
      %882 = vmatprep.subr.bf16.mxu0 0
      %883 = vmatpush2.bf16.msra.mxu0 0
      %884 = vmatprep.subr.bf16.mxu0 0
      %885 = vmatpush2.bf16.msra.mxu0 0
      %886 = vmatprep.subr.bf16.mxu0 0
      %887 = vmatpush2.bf16.msra.mxu0 0
      %888 = vmatprep.subr.bf16.mxu0 0
      %889 = vmatpush2.bf16.msra.mxu0 0
      %890 = vmatprep.subr.bf16.mxu0 0
      %891 = vmatpush2.bf16.msra.mxu0 0
      %892 = vmatprep.mubr.bf16.mxu0 0
      %893 = vmatmul.mubr.bf16.gmra.mxu0 %v385
      %v894 = vpop.f32.mrf.mxu0
      %v895 = vadd.f32 %v211, %v894
      %v896 = vpop.f32.mrf.mxu0
      %v897 = vadd.f32 %v211, %v896
      %v898 = vpop.f32.mrf.mxu0
      %v899 = vadd.f32 %v216, %v898
      %v900 = vpop.f32.mrf.mxu0
      %v901 = vadd.f32 %v216, %v900
      %902 = vdwg.mxu0
      %903 = vmatprep.subr.bf16.mxu0 0
      %904 = vmatpush1.bf16.msra.mxu0 0
      %905 = vmatprep.subr.bf16.mxu0 0
      %906 = vmatpush1.bf16.msra.mxu0 0
      %907 = vmatprep.subr.bf16.mxu0 0
      %908 = vmatpush1.bf16.msra.mxu0 0
      %909 = vmatprep.subr.bf16.mxu0 0
      %910 = vmatpush1.bf16.msra.mxu0 0
      %911 = vmatprep.subr.bf16.mxu0 0
      %912 = vmatpush1.bf16.msra.mxu0 0
      %913 = vmatprep.subr.bf16.mxu0 0
      %914 = vmatpush1.bf16.msra.mxu0 0
      %915 = vmatprep.subr.bf16.mxu0 0
      %916 = vmatpush1.bf16.msra.mxu0 0
      %917 = vmatprep.subr.bf16.mxu0 %v344
      %918 = vmatpush1.bf16.msra.mxu0 %v343
      %919 = vmatprep.subr.bf16.mxu0 0
      %920 = vmatpush2.bf16.msra.mxu0 0
      %921 = vmatprep.subr.bf16.mxu0 0
      %922 = vmatpush2.bf16.msra.mxu0 0
      %923 = vmatprep.subr.bf16.mxu0 0
      %924 = vmatpush2.bf16.msra.mxu0 0
      %925 = vmatprep.subr.bf16.mxu0 0
      %926 = vmatpush2.bf16.msra.mxu0 0
      %927 = vmatprep.subr.bf16.mxu0 0
      %928 = vmatpush2.bf16.msra.mxu0 0
      %929 = vmatprep.subr.bf16.mxu0 0
      %930 = vmatpush2.bf16.msra.mxu0 0
      %931 = vmatprep.subr.bf16.mxu0 0
      %932 = vmatpush2.bf16.msra.mxu0 0
      %933 = vmatprep.subr.bf16.mxu0 0
      %934 = vmatpush2.bf16.msra.mxu0 0
      %935 = vmatprep.mubr.bf16.mxu0 0
      %936 = vmatmul.mubr.bf16.gmra.mxu0 %v385
      %v937 = vpop.f32.mrf.mxu0
      %v938 = vadd.f32 %v211, %v937
      %v939 = vpop.f32.mrf.mxu0
      %v940 = vadd.f32 %v211, %v939
      %v941 = vpop.f32.mrf.mxu0
      %v942 = vadd.f32 %v216, %v941
      %v943 = vpop.f32.mrf.mxu0
      %v944 = vadd.f32 %v216, %v943
      %945 = vdwg.mxu0
      %946 = vmatprep.subr.bf16.mxu0 0
      %947 = vmatpush1.bf16.msra.mxu0 0
      %948 = vmatprep.subr.bf16.mxu0 0
      %949 = vmatpush1.bf16.msra.mxu0 0
      %950 = vmatprep.subr.bf16.mxu0 0
      %951 = vmatpush1.bf16.msra.mxu0 0
      %952 = vmatprep.subr.bf16.mxu0 0
      %953 = vmatpush1.bf16.msra.mxu0 0
      %954 = vmatprep.subr.bf16.mxu0 0
      %955 = vmatpush1.bf16.msra.mxu0 0
      %956 = vmatprep.subr.bf16.mxu0 0
      %957 = vmatpush1.bf16.msra.mxu0 0
      %958 = vmatprep.subr.bf16.mxu0 0
      %959 = vmatpush1.bf16.msra.mxu0 0
      %960 = vmatprep.subr.bf16.mxu0 %v346
      %961 = vmatpush1.bf16.msra.mxu0 %v345
      %962 = vmatprep.subr.bf16.mxu0 0
      %963 = vmatpush2.bf16.msra.mxu0 0
      %964 = vmatprep.subr.bf16.mxu0 0
      %965 = vmatpush2.bf16.msra.mxu0 0
      %966 = vmatprep.subr.bf16.mxu0 0
      %967 = vmatpush2.bf16.msra.mxu0 0
      %968 = vmatprep.subr.bf16.mxu0 0
      %969 = vmatpush2.bf16.msra.mxu0 0
      %970 = vmatprep.subr.bf16.mxu0 0
      %971 = vmatpush2.bf16.msra.mxu0 0
      %972 = vmatprep.subr.bf16.mxu0 0
      %973 = vmatpush2.bf16.msra.mxu0 0
      %974 = vmatprep.subr.bf16.mxu0 0
      %975 = vmatpush2.bf16.msra.mxu0 0
      %976 = vmatprep.subr.bf16.mxu0 0
      %977 = vmatpush2.bf16.msra.mxu0 0
      %978 = vmatprep.mubr.bf16.mxu0 0
      %979 = vmatmul.mubr.bf16.gmra.mxu0 %v385
      %v980 = vpop.f32.mrf.mxu0
      %v981 = vadd.f32 %v211, %v980
      %v982 = vpop.f32.mrf.mxu0
      %v983 = vadd.f32 %v211, %v982
      %v984 = vpop.f32.mrf.mxu0
      %v985 = vadd.f32 %v216, %v984
      %v986 = vpop.f32.mrf.mxu0
      %v987 = vadd.f32 %v216, %v986
      %988 = vdwg.mxu0
      %989 = vmatprep.subr.bf16.mxu0 0
      %990 = vmatpush1.bf16.msra.mxu0 0
      %991 = vmatprep.subr.bf16.mxu0 0
      %992 = vmatpush1.bf16.msra.mxu0 0
      %993 = vmatprep.subr.bf16.mxu0 0
      %994 = vmatpush1.bf16.msra.mxu0 0
      %995 = vmatprep.subr.bf16.mxu0 0
      %996 = vmatpush1.bf16.msra.mxu0 0
      %997 = vmatprep.subr.bf16.mxu0 0
      %998 = vmatpush1.bf16.msra.mxu0 0
      %999 = vmatprep.subr.bf16.mxu0 0
      %1000 = vmatpush1.bf16.msra.mxu0 0
      %1001 = vmatprep.subr.bf16.mxu0 0
      %1002 = vmatpush1.bf16.msra.mxu0 0
      %1003 = vmatprep.subr.bf16.mxu0 %v348
      %1004 = vmatpush1.bf16.msra.mxu0 %v347
      %1005 = vmatprep.subr.bf16.mxu0 0
      %1006 = vmatpush2.bf16.msra.mxu0 0
      %1007 = vmatprep.subr.bf16.mxu0 0
      %1008 = vmatpush2.bf16.msra.mxu0 0
      %1009 = vmatprep.subr.bf16.mxu0 0
      %1010 = vmatpush2.bf16.msra.mxu0 0
      %1011 = vmatprep.subr.bf16.mxu0 0
      %1012 = vmatpush2.bf16.msra.mxu0 0
      %1013 = vmatprep.subr.bf16.mxu0 0
      %1014 = vmatpush2.bf16.msra.mxu0 0
      %1015 = vmatprep.subr.bf16.mxu0 0
      %1016 = vmatpush2.bf16.msra.mxu0 0
      %1017 = vmatprep.subr.bf16.mxu0 0
      %1018 = vmatpush2.bf16.msra.mxu0 0
      %1019 = vmatprep.subr.bf16.mxu0 0
      %1020 = vmatpush2.bf16.msra.mxu0 0
      %1021 = vmatprep.mubr.bf16.mxu0 0
      %1022 = vmatmul.mubr.bf16.gmra.mxu0 %v385
      %v1023 = vpop.f32.mrf.mxu0
      %v1024 = vadd.f32 %v211, %v1023
      %v1025 = vpop.f32.mrf.mxu0
      %v1026 = vadd.f32 %v211, %v1025
      %v1027 = vpop.f32.mrf.mxu0
      %v1028 = vadd.f32 %v216, %v1027
      %v1029 = vpop.f32.mrf.mxu0
      %v1030 = vadd.f32 %v216, %v1029
      %1031 = vdwg.mxu0
      %1032 = vmatprep.subr.bf16.mxu0 0
      %1033 = vmatpush1.bf16.msra.mxu0 0
      %1034 = vmatprep.subr.bf16.mxu0 0
      %1035 = vmatpush1.bf16.msra.mxu0 0
      %1036 = vmatprep.subr.bf16.mxu0 0
      %1037 = vmatpush1.bf16.msra.mxu0 0
      %1038 = vmatprep.subr.bf16.mxu0 0
      %1039 = vmatpush1.bf16.msra.mxu0 0
      %1040 = vmatprep.subr.bf16.mxu0 0
      %1041 = vmatpush1.bf16.msra.mxu0 0
      %1042 = vmatprep.subr.bf16.mxu0 0
      %1043 = vmatpush1.bf16.msra.mxu0 0
      %1044 = vmatprep.subr.bf16.mxu0 0
      %1045 = vmatpush1.bf16.msra.mxu0 0
      %1046 = vmatprep.subr.bf16.mxu0 %v350
      %1047 = vmatpush1.bf16.msra.mxu0 %v349
      %1048 = vmatprep.subr.bf16.mxu0 0
      %1049 = vmatpush2.bf16.msra.mxu0 0
      %1050 = vmatprep.subr.bf16.mxu0 0
      %1051 = vmatpush2.bf16.msra.mxu0 0
      %1052 = vmatprep.subr.bf16.mxu0 0
      %1053 = vmatpush2.bf16.msra.mxu0 0
      %1054 = vmatprep.subr.bf16.mxu0 0
      %1055 = vmatpush2.bf16.msra.mxu0 0
      %1056 = vmatprep.subr.bf16.mxu0 0
      %1057 = vmatpush2.bf16.msra.mxu0 0
      %1058 = vmatprep.subr.bf16.mxu0 0
      %1059 = vmatpush2.bf16.msra.mxu0 0
      %1060 = vmatprep.subr.bf16.mxu0 0
      %1061 = vmatpush2.bf16.msra.mxu0 0
      %1062 = vmatprep.subr.bf16.mxu0 0
      %1063 = vmatpush2.bf16.msra.mxu0 0
      %1064 = vmatprep.mubr.bf16.mxu0 0
      %1065 = vmatmul.mubr.bf16.gmra.mxu0 %v385
      %v1066 = vpop.f32.mrf.mxu0
      %v1067 = vadd.f32 %v211, %v1066
      %v1068 = vpop.f32.mrf.mxu0
      %v1069 = vadd.f32 %v211, %v1068
      %v1070 = vpop.f32.mrf.mxu0
      %v1071 = vadd.f32 %v216, %v1070
      %v1072 = vpop.f32.mrf.mxu0
      %v1073 = vadd.f32 %v216, %v1072
      %1074 = vdwg.mxu0
      %vm1075 = vcmp.ge.f32.partialorder %v422, 0.0
      %vm1076 = vcmp.ge.f32.partialorder %v424, 0.0
      %vm1077 = vcmp.ge.f32.partialorder %v465, 0.0
      %vm1078 = vcmp.ge.f32.partialorder %v467, 0.0
      %vm1079 = vcmp.ge.f32.partialorder %v508, 0.0
      %vm1080 = vcmp.ge.f32.partialorder %v510, 0.0
      %vm1081 = vcmp.ge.f32.partialorder %v551, 0.0
      %vm1082 = vcmp.ge.f32.partialorder %v553, 0.0
      %vm1083 = vcmp.ge.f32.partialorder %v594, 0.0
      %vm1084 = vcmp.ge.f32.partialorder %v596, 0.0
      %vm1085 = vcmp.ge.f32.partialorder %v637, 0.0
      %vm1086 = vcmp.ge.f32.partialorder %v639, 0.0
      %vm1087 = vcmp.ge.f32.partialorder %v680, 0.0
      %vm1088 = vcmp.ge.f32.partialorder %v682, 0.0
      %vm1089 = vcmp.ge.f32.partialorder %v723, 0.0
      %vm1090 = vcmp.ge.f32.partialorder %v725, 0.0
      %vm1091 = vcmp.ge.f32.partialorder %v766, 0.0
      %vm1092 = vcmp.ge.f32.partialorder %v768, 0.0
      %vm1093 = vcmp.ge.f32.partialorder %v809, 0.0
      %vm1094 = vcmp.ge.f32.partialorder %v811, 0.0
      %vm1095 = vcmp.ge.f32.partialorder %v852, 0.0
      %vm1096 = vcmp.ge.f32.partialorder %v854, 0.0
      %vm1097 = vcmp.ge.f32.partialorder %v895, 0.0
      %vm1098 = vcmp.ge.f32.partialorder %v897, 0.0
      %vm1099 = vcmp.ge.f32.partialorder %v938, 0.0
      %vm1100 = vcmp.ge.f32.partialorder %v940, 0.0
      %vm1101 = vcmp.ge.f32.partialorder %v981, 0.0
      %vm1102 = vcmp.ge.f32.partialorder %v983, 0.0
      %vm1103 = vcmp.ge.f32.partialorder %v1024, 0.0
      %vm1104 = vcmp.ge.f32.partialorder %v1026, 0.0
      %vm1105 = vcmp.ge.f32.partialorder %v1067, 0.0
      %vm1106 = vcmp.ge.f32.partialorder %v1069, 0.0
      %vm1107 = vcmp.ge.f32.partialorder %v426, 0.0
      %vm1108 = vcmp.ge.f32.partialorder %v428, 0.0
      %vm1109 = vcmp.ge.f32.partialorder %v469, 0.0
      %vm1110 = vcmp.ge.f32.partialorder %v471, 0.0
      %vm1111 = vcmp.ge.f32.partialorder %v512, 0.0
      %vm1112 = vcmp.ge.f32.partialorder %v514, 0.0
      %vm1113 = vcmp.ge.f32.partialorder %v555, 0.0
      %vm1114 = vcmp.ge.f32.partialorder %v557, 0.0
      %vm1115 = vcmp.ge.f32.partialorder %v598, 0.0
      %vm1116 = vcmp.ge.f32.partialorder %v600, 0.0
      %vm1117 = vcmp.ge.f32.partialorder %v641, 0.0
      %vm1118 = vcmp.ge.f32.partialorder %v643, 0.0
      %vm1119 = vcmp.ge.f32.partialorder %v684, 0.0
      %vm1120 = vcmp.ge.f32.partialorder %v686, 0.0
      %vm1121 = vcmp.ge.f32.partialorder %v727, 0.0
      %vm1122 = vcmp.ge.f32.partialorder %v729, 0.0
      %vm1123 = vcmp.ge.f32.partialorder %v770, 0.0
      %vm1124 = vcmp.ge.f32.partialorder %v772, 0.0
      %vm1125 = vcmp.ge.f32.partialorder %v813, 0.0
      %vm1126 = vcmp.ge.f32.partialorder %v815, 0.0
      %vm1127 = vcmp.ge.f32.partialorder %v856, 0.0
      %vm1128 = vcmp.ge.f32.partialorder %v858, 0.0
      %vm1129 = vcmp.ge.f32.partialorder %v899, 0.0
      %vm1130 = vcmp.ge.f32.partialorder %v901, 0.0
      %vm1131 = vcmp.ge.f32.partialorder %v942, 0.0
      %vm1132 = vcmp.ge.f32.partialorder %v944, 0.0
      %vm1133 = vcmp.ge.f32.partialorder %v985, 0.0
      %vm1134 = vcmp.ge.f32.partialorder %v987, 0.0
      %vm1135 = vcmp.ge.f32.partialorder %v1028, 0.0
      %vm1136 = vcmp.ge.f32.partialorder %v1030, 0.0
      %vm1137 = vcmp.ge.f32.partialorder %v1071, 0.0
      %vm1138 = vcmp.ge.f32.partialorder %v1073, 0.0
      %v1139 = vmul.f32 %v422, 0.2
      %v1140 = vmul.f32 %v424, 0.2
      %v1141 = vmul.f32 %v465, 0.2
      %v1142 = vmul.f32 %v467, 0.2
      %v1143 = vmul.f32 %v508, 0.2
      %v1144 = vmul.f32 %v510, 0.2
      %v1145 = vmul.f32 %v551, 0.2
      %v1146 = vmul.f32 %v553, 0.2
      %v1147 = vmul.f32 %v594, 0.2
      %v1148 = vmul.f32 %v596, 0.2
      %v1149 = vmul.f32 %v637, 0.2
      %v1150 = vmul.f32 %v639, 0.2
      %v1151 = vmul.f32 %v680, 0.2
      %v1152 = vmul.f32 %v682, 0.2
      %v1153 = vmul.f32 %v723, 0.2
      %v1154 = vmul.f32 %v725, 0.2
      %v1155 = vmul.f32 %v766, 0.2
      %v1156 = vmul.f32 %v768, 0.2
      %v1157 = vmul.f32 %v809, 0.2
      %v1158 = vmul.f32 %v811, 0.2
      %v1159 = vmul.f32 %v852, 0.2
      %v1160 = vmul.f32 %v854, 0.2
      %v1161 = vmul.f32 %v895, 0.2
      %v1162 = vmul.f32 %v897, 0.2
      %v1163 = vmul.f32 %v938, 0.2
      %v1164 = vmul.f32 %v940, 0.2
      %v1165 = vmul.f32 %v981, 0.2
      %v1166 = vmul.f32 %v983, 0.2
      %v1167 = vmul.f32 %v1024, 0.2
      %v1168 = vmul.f32 %v1026, 0.2
      %v1169 = vmul.f32 %v1067, 0.2
      %v1170 = vmul.f32 %v1069, 0.2
      %v1171 = vmul.f32 %v426, 0.2
      %v1172 = vmul.f32 %v428, 0.2
      %v1173 = vmul.f32 %v469, 0.2
      %v1174 = vmul.f32 %v471, 0.2
      %v1175 = vmul.f32 %v512, 0.2
      %v1176 = vmul.f32 %v514, 0.2
      %v1177 = vmul.f32 %v555, 0.2
      %v1178 = vmul.f32 %v557, 0.2
      %v1179 = vmul.f32 %v598, 0.2
      %v1180 = vmul.f32 %v600, 0.2
      %v1181 = vmul.f32 %v641, 0.2
      %v1182 = vmul.f32 %v643, 0.2
      %v1183 = vmul.f32 %v684, 0.2
      %v1184 = vmul.f32 %v686, 0.2
      %v1185 = vmul.f32 %v727, 0.2
      %v1186 = vmul.f32 %v729, 0.2
      %v1187 = vmul.f32 %v770, 0.2
      %v1188 = vmul.f32 %v772, 0.2
      %v1189 = vmul.f32 %v813, 0.2
      %v1190 = vmul.f32 %v815, 0.2
      %v1191 = vmul.f32 %v856, 0.2
      %v1192 = vmul.f32 %v858, 0.2
      %v1193 = vmul.f32 %v899, 0.2
      %v1194 = vmul.f32 %v901, 0.2
      %v1195 = vmul.f32 %v942, 0.2
      %v1196 = vmul.f32 %v944, 0.2
      %v1197 = vmul.f32 %v985, 0.2
      %v1198 = vmul.f32 %v987, 0.2
      %v1199 = vmul.f32 %v1028, 0.2
      %v1200 = vmul.f32 %v1030, 0.2
      %v1201 = vmul.f32 %v1071, 0.2
      %v1202 = vmul.f32 %v1073, 0.2
      %v1203 = vsel %vm1075, %v422, %v1139
      %v1204 = vsel %vm1076, %v424, %v1140
      %v1205 = vsel %vm1077, %v465, %v1141
      %v1206 = vsel %vm1078, %v467, %v1142
      %v1207 = vsel %vm1079, %v508, %v1143
      %v1208 = vsel %vm1080, %v510, %v1144
      %v1209 = vsel %vm1081, %v551, %v1145
      %v1210 = vsel %vm1082, %v553, %v1146
      %v1211 = vsel %vm1083, %v594, %v1147
      %v1212 = vsel %vm1084, %v596, %v1148
      %v1213 = vsel %vm1085, %v637, %v1149
      %v1214 = vsel %vm1086, %v639, %v1150
      %v1215 = vsel %vm1087, %v680, %v1151
      %v1216 = vsel %vm1088, %v682, %v1152
      %v1217 = vsel %vm1089, %v723, %v1153
      %v1218 = vsel %vm1090, %v725, %v1154
      %v1219 = vsel %vm1091, %v766, %v1155
      %v1220 = vsel %vm1092, %v768, %v1156
      %v1221 = vsel %vm1093, %v809, %v1157
      %v1222 = vsel %vm1094, %v811, %v1158
      %v1223 = vsel %vm1095, %v852, %v1159
      %v1224 = vsel %vm1096, %v854, %v1160
      %v1225 = vsel %vm1097, %v895, %v1161
      %v1226 = vsel %vm1098, %v897, %v1162
      %v1227 = vsel %vm1099, %v938, %v1163
      %v1228 = vsel %vm1100, %v940, %v1164
      %v1229 = vsel %vm1101, %v981, %v1165
      %v1230 = vsel %vm1102, %v983, %v1166
      %v1231 = vsel %vm1103, %v1024, %v1167
      %v1232 = vsel %vm1104, %v1026, %v1168
      %v1233 = vsel %vm1105, %v1067, %v1169
      %v1234 = vsel %vm1106, %v1069, %v1170
      %v1235 = vsel %vm1107, %v426, %v1171
      %v1236 = vsel %vm1108, %v428, %v1172
      %v1237 = vsel %vm1109, %v469, %v1173
      %v1238 = vsel %vm1110, %v471, %v1174
      %v1239 = vsel %vm1111, %v512, %v1175
      %v1240 = vsel %vm1112, %v514, %v1176
      %v1241 = vsel %vm1113, %v555, %v1177
      %v1242 = vsel %vm1114, %v557, %v1178
      %v1243 = vsel %vm1115, %v598, %v1179
      %v1244 = vsel %vm1116, %v600, %v1180
      %v1245 = vsel %vm1117, %v641, %v1181
      %v1246 = vsel %vm1118, %v643, %v1182
      %v1247 = vsel %vm1119, %v684, %v1183
      %v1248 = vsel %vm1120, %v686, %v1184
      %v1249 = vsel %vm1121, %v727, %v1185
      %v1250 = vsel %vm1122, %v729, %v1186
      %v1251 = vsel %vm1123, %v770, %v1187
      %v1252 = vsel %vm1124, %v772, %v1188
      %v1253 = vsel %vm1125, %v813, %v1189
      %v1254 = vsel %vm1126, %v815, %v1190
      %v1255 = vsel %vm1127, %v856, %v1191
      %v1256 = vsel %vm1128, %v858, %v1192
      %v1257 = vsel %vm1129, %v899, %v1193
      %v1258 = vsel %vm1130, %v901, %v1194
      %v1259 = vsel %vm1131, %v942, %v1195
      %v1260 = vsel %vm1132, %v944, %v1196
      %v1261 = vsel %vm1133, %v985, %v1197
      %v1262 = vsel %vm1134, %v987, %v1198
      %v1263 = vsel %vm1135, %v1028, %v1199
      %v1264 = vsel %vm1136, %v1030, %v1200
      %v1265 = vsel %vm1137, %v1071, %v1201
      %v1266 = vsel %vm1138, %v1073, %v1202
      %v1267 = vpack.c.bf16 %v1235, %v1203
      %v1268 = vpack.c.bf16 %v1236, %v1204
      %v1269 = vpack.c.bf16 %v1237, %v1205
      %v1270 = vpack.c.bf16 %v1238, %v1206
      %v1271 = vpack.c.bf16 %v1239, %v1207
      %v1272 = vpack.c.bf16 %v1240, %v1208
      %v1273 = vpack.c.bf16 %v1241, %v1209
      %v1274 = vpack.c.bf16 %v1242, %v1210
      %v1275 = vpack.c.bf16 %v1243, %v1211
      %v1276 = vpack.c.bf16 %v1244, %v1212
      %v1277 = vpack.c.bf16 %v1245, %v1213
      %v1278 = vpack.c.bf16 %v1246, %v1214
      %v1279 = vpack.c.bf16 %v1247, %v1215
      %v1280 = vpack.c.bf16 %v1248, %v1216
      %v1281 = vpack.c.bf16 %v1249, %v1217
      %v1282 = vpack.c.bf16 %v1250, %v1218
      %v1283 = vpack.c.bf16 %v1251, %v1219
      %v1284 = vpack.c.bf16 %v1252, %v1220
      %v1285 = vpack.c.bf16 %v1253, %v1221
      %v1286 = vpack.c.bf16 %v1254, %v1222
      %v1287 = vpack.c.bf16 %v1255, %v1223
      %v1288 = vpack.c.bf16 %v1256, %v1224
      %v1289 = vpack.c.bf16 %v1257, %v1225
      %v1290 = vpack.c.bf16 %v1258, %v1226
      %v1291 = vpack.c.bf16 %v1259, %v1227
      %v1292 = vpack.c.bf16 %v1260, %v1228
      %v1293 = vpack.c.bf16 %v1261, %v1229
      %v1294 = vpack.c.bf16 %v1262, %v1230
      %v1295 = vpack.c.bf16 %v1263, %v1231
      %v1296 = vpack.c.bf16 %v1264, %v1232
      %v1297 = vpack.c.bf16 %v1265, %v1233
      %v1298 = vpack.c.bf16 %v1266, %v1234
      %v1331 = vunpack.c.l.b16 %v1267
      %v1332 = vunpack.c.l.b16 %v1268
      %v1333 = vunpack.c.l.b16 %v1269
      %v1334 = vunpack.c.l.b16 %v1270
      %v1335 = vunpack.c.l.b16 %v1271
      %v1336 = vunpack.c.l.b16 %v1272
      %v1337 = vunpack.c.l.b16 %v1273
      %v1338 = vunpack.c.l.b16 %v1274
      %v1339 = vunpack.c.l.b16 %v1275
      %v1340 = vunpack.c.l.b16 %v1276
      %v1341 = vunpack.c.l.b16 %v1277
      %v1342 = vunpack.c.l.b16 %v1278
      %v1343 = vunpack.c.l.b16 %v1279
      %v1344 = vunpack.c.l.b16 %v1280
      %v1345 = vunpack.c.l.b16 %v1281
      %v1346 = vunpack.c.l.b16 %v1282
      %v1347 = vunpack.c.l.b16 %v1283
      %v1348 = vunpack.c.l.b16 %v1284
      %v1349 = vunpack.c.l.b16 %v1285
      %v1350 = vunpack.c.l.b16 %v1286
      %v1351 = vunpack.c.l.b16 %v1287
      %v1352 = vunpack.c.l.b16 %v1288
      %v1353 = vunpack.c.l.b16 %v1289
      %v1354 = vunpack.c.l.b16 %v1290
      %v1355 = vunpack.c.l.b16 %v1291
      %v1356 = vunpack.c.l.b16 %v1292
      %v1357 = vunpack.c.l.b16 %v1293
      %v1358 = vunpack.c.l.b16 %v1294
      %v1359 = vunpack.c.l.b16 %v1295
      %v1360 = vunpack.c.l.b16 %v1296
      %v1361 = vunpack.c.l.b16 %v1297
      %v1362 = vunpack.c.l.b16 %v1298
      %v1363 = vunpack.c.h.b16 %v1267
      %v1364 = vunpack.c.h.b16 %v1268
      %v1365 = vunpack.c.h.b16 %v1269
      %v1366 = vunpack.c.h.b16 %v1270
      %v1367 = vunpack.c.h.b16 %v1271
      %v1368 = vunpack.c.h.b16 %v1272
      %v1369 = vunpack.c.h.b16 %v1273
      %v1370 = vunpack.c.h.b16 %v1274
      %v1371 = vunpack.c.h.b16 %v1275
      %v1372 = vunpack.c.h.b16 %v1276
      %v1373 = vunpack.c.h.b16 %v1277
      %v1374 = vunpack.c.h.b16 %v1278
      %v1375 = vunpack.c.h.b16 %v1279
      %v1376 = vunpack.c.h.b16 %v1280
      %v1377 = vunpack.c.h.b16 %v1281
      %v1378 = vunpack.c.h.b16 %v1282
      %v1379 = vunpack.c.h.b16 %v1283
      %v1380 = vunpack.c.h.b16 %v1284
      %v1381 = vunpack.c.h.b16 %v1285
      %v1382 = vunpack.c.h.b16 %v1286
      %v1383 = vunpack.c.h.b16 %v1287
      %v1384 = vunpack.c.h.b16 %v1288
      %v1385 = vunpack.c.h.b16 %v1289
      %v1386 = vunpack.c.h.b16 %v1290
      %v1387 = vunpack.c.h.b16 %v1291
      %v1388 = vunpack.c.h.b16 %v1292
      %v1389 = vunpack.c.h.b16 %v1293
      %v1390 = vunpack.c.h.b16 %v1294
      %v1391 = vunpack.c.h.b16 %v1295
      %v1392 = vunpack.c.h.b16 %v1296
      %v1393 = vunpack.c.h.b16 %v1297
      %v1394 = vunpack.c.h.b16 %v1298
      %v1395 = vpack.c.b16 %v1332, %v1331
      %v1396 = vpack.c.b16 %v1334, %v1333
      %v1397 = vpack.c.b16 %v1336, %v1335
      %v1398 = vpack.c.b16 %v1338, %v1337
      %v1399 = vpack.c.b16 %v1340, %v1339
      %v1400 = vpack.c.b16 %v1342, %v1341
      %v1401 = vpack.c.b16 %v1344, %v1343
      %v1402 = vpack.c.b16 %v1346, %v1345
      %v1403 = vpack.c.b16 %v1348, %v1347
      %v1404 = vpack.c.b16 %v1350, %v1349
      %v1405 = vpack.c.b16 %v1352, %v1351
      %v1406 = vpack.c.b16 %v1354, %v1353
      %v1407 = vpack.c.b16 %v1356, %v1355
      %v1408 = vpack.c.b16 %v1358, %v1357
      %v1409 = vpack.c.b16 %v1360, %v1359
      %v1410 = vpack.c.b16 %v1362, %v1361
      %v1411 = vpack.c.b16 %v1364, %v1363
      %v1412 = vpack.c.b16 %v1366, %v1365
      %v1413 = vpack.c.b16 %v1368, %v1367
      %v1414 = vpack.c.b16 %v1370, %v1369
      %v1415 = vpack.c.b16 %v1372, %v1371
      %v1416 = vpack.c.b16 %v1374, %v1373
      %v1417 = vpack.c.b16 %v1376, %v1375
      %v1418 = vpack.c.b16 %v1378, %v1377
      %v1419 = vpack.c.b16 %v1380, %v1379
      %v1420 = vpack.c.b16 %v1382, %v1381
      %v1421 = vpack.c.b16 %v1384, %v1383
      %v1422 = vpack.c.b16 %v1386, %v1385
      %v1423 = vpack.c.b16 %v1388, %v1387
      %v1424 = vpack.c.b16 %v1390, %v1389
      %v1425 = vpack.c.b16 %v1392, %v1391
      %v1426 = vpack.c.b16 %v1394, %v1393
      %1459 = vst [vmem:[%s170] sm:$0xff] %v1395
      %1460 = vst [vmem:[%s170 + $0x8] sm:$0xff] %v1396
      %1461 = vst [vmem:[%s170 + $0x10] sm:$0xff] %v1397
      %1462 = vst [vmem:[%s170 + $0x18] sm:$0xff] %v1398
      %1463 = vst [vmem:[%s170 + $0x20] sm:$0xff] %v1399
      %1464 = vst [vmem:[%s170 + $0x28] sm:$0xff] %v1400
      %1465 = vst [vmem:[%s170 + $0x30] sm:$0xff] %v1401
      %1466 = vst [vmem:[%s170 + $0x38] sm:$0xff] %v1402
      %1467 = vst [vmem:[%s170 + $0x40] sm:$0xff] %v1403
      %1468 = vst [vmem:[%s170 + $0x48] sm:$0xff] %v1404
      %1469 = vst [vmem:[%s170 + $0x50] sm:$0xff] %v1405
      %1470 = vst [vmem:[%s170 + $0x58] sm:$0xff] %v1406
      %1471 = vst [vmem:[%s170 + $0x60] sm:$0xff] %v1407
      %1472 = vst [vmem:[%s170 + $0x68] sm:$0xff] %v1408
      %1473 = vst [vmem:[%s170 + $0x70] sm:$0xff] %v1409
      %1474 = vst [vmem:[%s170 + $0x78] sm:$0xff] %v1410
      %1475 = vst [vmem:[%s170 + $0x80] sm:$0xff] %v1411
      %1476 = vst [vmem:[%s170 + $0x88] sm:$0xff] %v1412
      %1477 = vst [vmem:[%s170 + $0x90] sm:$0xff] %v1413
      %1478 = vst [vmem:[%s170 + $0x98] sm:$0xff] %v1414
      %1479 = vst [vmem:[%s170 + $0xa0] sm:$0xff] %v1415
      %1480 = vst [vmem:[%s170 + $0xa8] sm:$0xff] %v1416
      %1481 = vst [vmem:[%s170 + $0xb0] sm:$0xff] %v1417
      %1482 = vst [vmem:[%s170 + $0xb8] sm:$0xff] %v1418
      %1483 = vst [vmem:[%s170 + $0xc0] sm:$0xff] %v1419
      %1484 = vst [vmem:[%s170 + $0xc8] sm:$0xff] %v1420
      %1485 = vst [vmem:[%s170 + $0xd0] sm:$0xff] %v1421
      %1486 = vst [vmem:[%s170 + $0xd8] sm:$0xff] %v1422
      %1487 = vst [vmem:[%s170 + $0xe0] sm:$0xff] %v1423
      %1488 = vst [vmem:[%s170 + $0xe8] sm:$0xff] %v1424
      %1489 = vst [vmem:[%s170 + $0xf0] sm:$0xff] %v1425
      %1490 = vst [vmem:[%s170 + $0xf8] sm:$0xff] %v1426
      %p1491 = scmp.lt.s32.totalorder %s14, 1
      %s1492 = scalar_select %p1491, %s14, 1
      %s1493 = smul.addr %s1492, 64
      %s1494 = smul.addr %s1493, 4
      %s1495 = scalar_lea.vmem %s3, %s1494
      // Predicated region
      $region33: #{discriminator_forward.4} parent=31 // pred_check
        %p1496 = pneg %p100
      $region34: #{discriminator_forward.4} parent=31 // pred_check_branch
        %1498 = sbr.rel (%p1496) target = $region36
      $region35: #{discriminator_forward.4} parent=31 // pred_region
        _
      $region36: #{discriminator_forward.4} parent=31 // pred_fallthru
        _
    $region32: #{discriminator_forward.4} parent=5 // pred_fallthru
      _
    %p1499 = scmp.le.s32.totalorder 2, %s9
    // Predicated region
    $region37: #{discriminator_forward.4} parent=5 // pred_check
      %p1500 = pneg %p1499
    $region38: #{discriminator_forward.4} parent=5 // pred_check_branch
      %1502 = sbr.rel (%p1500) target = $region40
    $region39: #{discriminator_forward.4} parent=5 // pred_region
      %s1503 = ssub.s32 %s9, 2
      // Predicated region
      $region41: #{discriminator_forward.4} parent=39 // pred_check
        %p1504 = pneg %p106
      $region42: #{discriminator_forward.4} parent=39 // pred_check_branch
        %1506 = sbr.rel (%p1504) target = $region44
      $region43: #{discriminator_forward.4} parent=39 // pred_region
        %p1507 = scmp.lt.s32.totalorder %s15, 1
        %s1508 = scalar_select %p1507, %s15, 1
        %s1509 = smul.addr %s1508, 64
        %s1510 = smul.addr %s1509, 4
        %s1511 = scalar_lea.vmem %s3, %s1510
      $region44: #{discriminator_forward.4} parent=39 // pred_fallthru
        _
    $region40: #{discriminator_forward.4} parent=5 // pred_fallthru
      _
  $region6: #{discriminator_forward.4} parent=0 // loop_footer
    %s13 = sadd.s32 1, %s9
  $region7: #{discriminator_forward.4} parent=0 // loop_footer_branch
    %8 = sbr.rel target = $region3
  $region8: #{discriminator_forward.4} parent=0 // loop_exit
    _

// kernel: discriminator_forward.5
$region0: #{discriminator_forward.5}
  #allocation0 [shape = 'u32[]', space=smem, size = 0x4, offset = 0x4, fixed_abs, tag = 'smem constant byte address 0x4 - core index']
  #allocation1 [shape = 'u32[144,128]{1,0:T(1,128)}', space=vmem, size = 0x12000, scoped, tag = 'internal scratch']
  %s0 = inlined_call_operand.vmem [shape: bf16[2,256,1024], index: 0, kind: input, shape index: {}]
  %s1 = inlined_call_operand.vmem [shape: bf16[32,256], index: 1, kind: input, shape index: {}]
  %s2 = inlined_call_operand.vmem [shape: bf16[2,32,1024], index: 2, kind: output, shape index: {}]
  %s3 = sld [smem:[#allocation0]]
  $region41: #{discriminator_forward.5} parent=0
    _
  %s5 = ssub.s32 1, %s3
  %s6 = scalar_select 0, %s5, %s3
  loop: start=0, step=1, limit=4
  $region2: #{discriminator_forward.5} parent=0 // loop_pre_header
    _
  $region3: #{discriminator_forward.5} parent=0 // loop_header
    %s8 = sphi 0, %s12
    %p9 = scmp.ge.s32.totalorder %s8, 4
    %s18 = sphi 0, %s20
    %s21 = sphi 0, %s18
    %s22 = sphi 0, %s21
    %s38 = sphi 0, %s22
    %s42 = sphi 0, %s42
    %s44 = sphi 0, %s42
    %s45 = sphi 0, %s44
    %s59 = sphi 0, %s45
    %s65 = sphi 0, %s67
    %s68 = sphi 0, %s65
    %s69 = sphi 0, %s68
    %s85 = sphi 0, %s69
  $region4: #{discriminator_forward.5} parent=0 // loop_header_branch
    %11 = sbr.rel (%p9) target = $region8
  $region5: #{discriminator_forward.5} parent=0 // loop_body
    %s13 = ssub.s32 %s8, 1
    %s14 = ssub.s32 %s8, 2
    %s15 = sadd.s32 %s8, 1
    %s16 = ssub.s32 %s8, %s15
    %p17 = scmp.eq.s32.totalorder %s16, 0
    %s19 = sadd.s32 %s18, 1
    %s20 = scalar_select %p17, %s18, %s19
    %p23 = pneg %p17
    %p24 = scmp.eq.s32.totalorder %s8, 1
    %p25 = por %p23, %p24
    %p26 = scmp.ne.s32.totalorder %s18, %s21
    %p27 = scmp.eq.s32.totalorder %s8, 0
    %p28 = por %p26, %p27
    %p29 = scmp.ne.s32.totalorder %s18, %s21
    %p30 = scmp.eq.s32.totalorder %s13, 1
    %p31 = por %p29, %p30
    %p32 = scmp.ne.s32.totalorder %s21, %s22
    %p33 = scmp.eq.s32.totalorder %s13, 0
    %p34 = por %p32, %p33
    %p35 = scmp.ne.s32.totalorder %s21, %s22
    %p36 = scmp.eq.s32.totalorder %s14, 1
    %p37 = por %p35, %p36
    %p39 = scmp.ne.s32.totalorder %s22, %s38
    %p40 = scmp.eq.s32.totalorder %s14, 0
    %p41 = por %p39, %p40
    %s43 = sadd.s32 %s42, 1
    %p46 = scmp.eq.s32.totalorder %s8, 1
    %p47 = scmp.ne.s32.totalorder %s42, %s44
    %p48 = scmp.eq.s32.totalorder %s8, 0
    %p49 = por %p47, %p48
    %p50 = scmp.ne.s32.totalorder %s42, %s44
    %p51 = scmp.eq.s32.totalorder %s13, 1
    %p52 = por %p50, %p51
    %p53 = scmp.ne.s32.totalorder %s44, %s45
    %p54 = scmp.eq.s32.totalorder %s13, 0
    %p55 = por %p53, %p54
    %p56 = scmp.ne.s32.totalorder %s44, %s45
    %p57 = scmp.eq.s32.totalorder %s14, 1
    %p58 = por %p56, %p57
    %p60 = scmp.ne.s32.totalorder %s45, %s59
    %p61 = scmp.eq.s32.totalorder %s14, 0
    %p62 = por %p60, %p61
    %s63 = ssub.s32 %s8, %s15
    %p64 = scmp.eq.s32.totalorder %s63, 0
    %s66 = sadd.s32 %s65, 1
    %s67 = scalar_select %p64, %s65, %s66
    %p70 = pneg %p64
    %p71 = scmp.eq.s32.totalorder %s8, 1
    %p72 = por %p70, %p71
    %p73 = scmp.ne.s32.totalorder %s65, %s68
    %p74 = scmp.eq.s32.totalorder %s8, 0
    %p75 = por %p73, %p74
    %p76 = scmp.ne.s32.totalorder %s65, %s68
    %p77 = scmp.eq.s32.totalorder %s13, 1
    %p78 = por %p76, %p77
    %p79 = scmp.ne.s32.totalorder %s68, %s69
    %p80 = scmp.eq.s32.totalorder %s13, 0
    %p81 = por %p79, %p80
    %p82 = scmp.ne.s32.totalorder %s68, %s69
    %p83 = scmp.eq.s32.totalorder %s14, 1
    %p84 = por %p82, %p83
    %p86 = scmp.ne.s32.totalorder %s69, %s85
    %p87 = scmp.eq.s32.totalorder %s14, 0
    %p88 = por %p86, %p87
    %p89 = scmp.le.s32.totalorder 1, %s8
    %p90 = scmp.lt.s32.totalorder %s8, 3
    %p91 = pnand %p89, %p90
    %p92 = pneg %p91
    // Predicated region
    $region9: #{discriminator_forward.5} parent=5 // pred_check
      _
    $region10: #{discriminator_forward.5} parent=5 // pred_check_branch
      %94 = sbr.rel (%p91) target = $region12
    $region11: #{discriminator_forward.5} parent=5 // pred_region
      %s95 = ssub.s32 %s8, 1
      // Predicated region
      $region13: #{discriminator_forward.5} parent=11 // pred_check
        %p96 = pneg %p55
      $region14: #{discriminator_forward.5} parent=11 // pred_check_branch
        %98 = sbr.rel (%p96) target = $region16
      $region15: #{discriminator_forward.5} parent=11 // pred_region
        _
      $region16: #{discriminator_forward.5} parent=11 // pred_fallthru
        _
    $region12: #{discriminator_forward.5} parent=5 // pred_fallthru
      _
    %p99 = scmp.lt.s32.totalorder %s8, 2
    // Predicated region
    $region17: #{discriminator_forward.5} parent=5 // pred_check
      %p100 = pneg %p99
    $region18: #{discriminator_forward.5} parent=5 // pred_check_branch
      %102 = sbr.rel (%p100) target = $region20
    $region19: #{discriminator_forward.5} parent=5 // pred_region
      // Predicated region
      $region21: #{discriminator_forward.5} parent=19 // pred_check
        %p103 = pneg %p28
      $region22: #{discriminator_forward.5} parent=19 // pred_check_branch
        %105 = sbr.rel (%p103) target = $region24
      $region23: #{discriminator_forward.5} parent=19 // pred_region
        %p106 = scmp.lt.s32.totalorder %s8, 1
        %s107 = scalar_select %p106, %s8, 1
        %s108 = smul.addr %s107, 256
        %s109 = smul.addr %s108, 4
        %s110 = scalar_lea.vmem %s0, %s109
      $region24: #{discriminator_forward.5} parent=19 // pred_fallthru
        _
    $region20: #{discriminator_forward.5} parent=5 // pred_fallthru
      _
    %p111 = scmp.le.s32.totalorder 1, %s8
    %p112 = scmp.lt.s32.totalorder %s8, 3
    %p113 = pnand %p111, %p112
    %p114 = pneg %p113
    // Predicated region
    $region25: #{discriminator_forward.5} parent=5 // pred_check
      _
    $region26: #{discriminator_forward.5} parent=5 // pred_check_branch
      %116 = sbr.rel (%p113) target = $region28
    $region27: #{discriminator_forward.5} parent=5 // pred_region
      %s117 = ssub.s32 %s8, 1
      %p118 = scmp.lt.s32.totalorder %s13, 1
      %s119 = scalar_select %p118, %s13, 1
      %s120 = smul.addr %s119, 256
      %s121 = smul.addr %s120, 4
      %s122 = scalar_lea.vmem %s0, %s121
      %p123 = pneg %p34
      %p124 = pneg %p31
      %p125 = pneg %p55
      %p126 = pneg %p52
      %p127 = pneg %p81
      %p128 = pneg %p78
      %p129 = scmp.lt.s32.totalorder %s13, 1
      %s130 = scalar_select %p129, %s13, 1
      %s131 = smul.addr %s130, 32
      %s132 = smul.addr %s131, 4
      %s133 = scalar_lea.vmem %s2, %s132
      %p134 = scmp.lt.s32.totalorder %s13, 1
      %s135 = scalar_select %p134, %s13, 1
      %s136 = smul.addr %s135, 256
      %s137 = smul.addr %s136, 4
      %s138 = scalar_lea.vmem %s0, %s137
      %p139 = scmp.lt.s32.totalorder %s13, 1
      %s140 = scalar_select %p139, %s13, 1
      %s141 = smul.addr %s140, 32
      %s142 = smul.addr %s141, 4
      %s143 = scalar_lea.vmem %s2, %s142
      %v144 = vld [vmem:[%s1] sm:$0xff]
      %v145 = vld [vmem:[%s1 + $0x8] sm:$0xff]
      %v146 = vld [vmem:[%s1 + $0x10] sm:$0xff]
      %v147 = vld [vmem:[%s1 + $0x18] sm:$0xff]
      %v148 = vld [vmem:[%s138] sm:$0xff]
      %v149 = vld [vmem:[%s138 + $0x8] sm:$0xff]
      %v150 = vld [vmem:[%s138 + $0x10] sm:$0xff]
      %v151 = vld [vmem:[%s138 + $0x18] sm:$0xff]
      %v152 = vld [vmem:[%s138 + $0x20] sm:$0xff]
      %v153 = vld [vmem:[%s138 + $0x28] sm:$0xff]
      %v154 = vld [vmem:[%s138 + $0x30] sm:$0xff]
      %v155 = vld [vmem:[%s138 + $0x38] sm:$0xff]
      %v156 = vld [vmem:[%s138 + $0x40] sm:$0xff]
      %v157 = vld [vmem:[%s138 + $0x48] sm:$0xff]
      %v158 = vld [vmem:[%s138 + $0x50] sm:$0xff]
      %v159 = vld [vmem:[%s138 + $0x58] sm:$0xff]
      %v160 = vld [vmem:[%s138 + $0x60] sm:$0xff]
      %v161 = vld [vmem:[%s138 + $0x68] sm:$0xff]
      %v162 = vld [vmem:[%s138 + $0x70] sm:$0xff]
      %v163 = vld [vmem:[%s138 + $0x78] sm:$0xff]
      %v164 = vld [vmem:[%s138 + $0x80] sm:$0xff]
      %v165 = vld [vmem:[%s138 + $0x88] sm:$0xff]
      %v166 = vld [vmem:[%s138 + $0x90] sm:$0xff]
      %v167 = vld [vmem:[%s138 + $0x98] sm:$0xff]
      %v168 = vld [vmem:[%s138 + $0xa0] sm:$0xff]
      %v169 = vld [vmem:[%s138 + $0xa8] sm:$0xff]
      %v170 = vld [vmem:[%s138 + $0xb0] sm:$0xff]
      %v171 = vld [vmem:[%s138 + $0xb8] sm:$0xff]
      %v172 = vld [vmem:[%s138 + $0xc0] sm:$0xff]
      %v173 = vld [vmem:[%s138 + $0xc8] sm:$0xff]
      %v174 = vld [vmem:[%s138 + $0xd0] sm:$0xff]
      %v175 = vld [vmem:[%s138 + $0xd8] sm:$0xff]
      %v176 = vld [vmem:[%s138 + $0xe0] sm:$0xff]
      %v177 = vld [vmem:[%s138 + $0xe8] sm:$0xff]
      %v178 = vld [vmem:[%s138 + $0xf0] sm:$0xff]
      %v179 = vld [vmem:[%s138 + $0xf8] sm:$0xff]
      %v180 = vld [vmem:[%s138 + $0x100] sm:$0xff]
      %v181 = vld [vmem:[%s138 + $0x108] sm:$0xff]
      %v182 = vld [vmem:[%s138 + $0x110] sm:$0xff]
      %v183 = vld [vmem:[%s138 + $0x118] sm:$0xff]
      %v184 = vld [vmem:[%s138 + $0x120] sm:$0xff]
      %v185 = vld [vmem:[%s138 + $0x128] sm:$0xff]
      %v186 = vld [vmem:[%s138 + $0x130] sm:$0xff]
      %v187 = vld [vmem:[%s138 + $0x138] sm:$0xff]
      %v188 = vld [vmem:[%s138 + $0x140] sm:$0xff]
      %v189 = vld [vmem:[%s138 + $0x148] sm:$0xff]
      %v190 = vld [vmem:[%s138 + $0x150] sm:$0xff]
      %v191 = vld [vmem:[%s138 + $0x158] sm:$0xff]
      %v192 = vld [vmem:[%s138 + $0x160] sm:$0xff]
      %v193 = vld [vmem:[%s138 + $0x168] sm:$0xff]
      %v194 = vld [vmem:[%s138 + $0x170] sm:$0xff]
      %v195 = vld [vmem:[%s138 + $0x178] sm:$0xff]
      %v196 = vld [vmem:[%s138 + $0x180] sm:$0xff]
      %v197 = vld [vmem:[%s138 + $0x188] sm:$0xff]
      %v198 = vld [vmem:[%s138 + $0x190] sm:$0xff]
      %v199 = vld [vmem:[%s138 + $0x198] sm:$0xff]
      %v200 = vld [vmem:[%s138 + $0x1a0] sm:$0xff]
      %v201 = vld [vmem:[%s138 + $0x1a8] sm:$0xff]
      %v202 = vld [vmem:[%s138 + $0x1b0] sm:$0xff]
      %v203 = vld [vmem:[%s138 + $0x1b8] sm:$0xff]
      %v204 = vld [vmem:[%s138 + $0x1c0] sm:$0xff]
      %v205 = vld [vmem:[%s138 + $0x1c8] sm:$0xff]
      %v206 = vld [vmem:[%s138 + $0x1d0] sm:$0xff]
      %v207 = vld [vmem:[%s138 + $0x1d8] sm:$0xff]
      %v208 = vld [vmem:[%s138 + $0x1e0] sm:$0xff]
      %v209 = vld [vmem:[%s138 + $0x1e8] sm:$0xff]
      %v210 = vld [vmem:[%s138 + $0x1f0] sm:$0xff]
      %v211 = vld [vmem:[%s138 + $0x1f8] sm:$0xff]
      %v212 = vld [vmem:[%s138 + $0x200] sm:$0xff]
      %v213 = vld [vmem:[%s138 + $0x208] sm:$0xff]
      %v214 = vld [vmem:[%s138 + $0x210] sm:$0xff]
      %v215 = vld [vmem:[%s138 + $0x218] sm:$0xff]
      %v216 = vld [vmem:[%s138 + $0x220] sm:$0xff]
      %v217 = vld [vmem:[%s138 + $0x228] sm:$0xff]
      %v218 = vld [vmem:[%s138 + $0x230] sm:$0xff]
      %v219 = vld [vmem:[%s138 + $0x238] sm:$0xff]
      %v220 = vld [vmem:[%s138 + $0x240] sm:$0xff]
      %v221 = vld [vmem:[%s138 + $0x248] sm:$0xff]
      %v222 = vld [vmem:[%s138 + $0x250] sm:$0xff]
      %v223 = vld [vmem:[%s138 + $0x258] sm:$0xff]
      %v224 = vld [vmem:[%s138 + $0x260] sm:$0xff]
      %v225 = vld [vmem:[%s138 + $0x268] sm:$0xff]
      %v226 = vld [vmem:[%s138 + $0x270] sm:$0xff]
      %v227 = vld [vmem:[%s138 + $0x278] sm:$0xff]
      %v228 = vld [vmem:[%s138 + $0x280] sm:$0xff]
      %v229 = vld [vmem:[%s138 + $0x288] sm:$0xff]
      %v230 = vld [vmem:[%s138 + $0x290] sm:$0xff]
      %v231 = vld [vmem:[%s138 + $0x298] sm:$0xff]
      %v232 = vld [vmem:[%s138 + $0x2a0] sm:$0xff]
      %v233 = vld [vmem:[%s138 + $0x2a8] sm:$0xff]
      %v234 = vld [vmem:[%s138 + $0x2b0] sm:$0xff]
      %v235 = vld [vmem:[%s138 + $0x2b8] sm:$0xff]
      %v236 = vld [vmem:[%s138 + $0x2c0] sm:$0xff]
      %v237 = vld [vmem:[%s138 + $0x2c8] sm:$0xff]
      %v238 = vld [vmem:[%s138 + $0x2d0] sm:$0xff]
      %v239 = vld [vmem:[%s138 + $0x2d8] sm:$0xff]
      %v240 = vld [vmem:[%s138 + $0x2e0] sm:$0xff]
      %v241 = vld [vmem:[%s138 + $0x2e8] sm:$0xff]
      %v242 = vld [vmem:[%s138 + $0x2f0] sm:$0xff]
      %v243 = vld [vmem:[%s138 + $0x2f8] sm:$0xff]
      %v244 = vld [vmem:[%s138 + $0x300] sm:$0xff]
      %v245 = vld [vmem:[%s138 + $0x308] sm:$0xff]
      %v246 = vld [vmem:[%s138 + $0x310] sm:$0xff]
      %v247 = vld [vmem:[%s138 + $0x318] sm:$0xff]
      %v248 = vld [vmem:[%s138 + $0x320] sm:$0xff]
      %v249 = vld [vmem:[%s138 + $0x328] sm:$0xff]
      %v250 = vld [vmem:[%s138 + $0x330] sm:$0xff]
      %v251 = vld [vmem:[%s138 + $0x338] sm:$0xff]
      %v252 = vld [vmem:[%s138 + $0x340] sm:$0xff]
      %v253 = vld [vmem:[%s138 + $0x348] sm:$0xff]
      %v254 = vld [vmem:[%s138 + $0x350] sm:$0xff]
      %v255 = vld [vmem:[%s138 + $0x358] sm:$0xff]
      %v256 = vld [vmem:[%s138 + $0x360] sm:$0xff]
      %v257 = vld [vmem:[%s138 + $0x368] sm:$0xff]
      %v258 = vld [vmem:[%s138 + $0x370] sm:$0xff]
      %v259 = vld [vmem:[%s138 + $0x378] sm:$0xff]
      %v260 = vld [vmem:[%s138 + $0x380] sm:$0xff]
      %v261 = vld [vmem:[%s138 + $0x388] sm:$0xff]
      %v262 = vld [vmem:[%s138 + $0x390] sm:$0xff]
      %v263 = vld [vmem:[%s138 + $0x398] sm:$0xff]
      %v264 = vld [vmem:[%s138 + $0x3a0] sm:$0xff]
      %v265 = vld [vmem:[%s138 + $0x3a8] sm:$0xff]
      %v266 = vld [vmem:[%s138 + $0x3b0] sm:$0xff]
      %v267 = vld [vmem:[%s138 + $0x3b8] sm:$0xff]
      %v268 = vld [vmem:[%s138 + $0x3c0] sm:$0xff]
      %v269 = vld [vmem:[%s138 + $0x3c8] sm:$0xff]
      %v270 = vld [vmem:[%s138 + $0x3d0] sm:$0xff]
      %v271 = vld [vmem:[%s138 + $0x3d8] sm:$0xff]
      %v272 = vld [vmem:[%s138 + $0x3e0] sm:$0xff]
      %v273 = vld [vmem:[%s138 + $0x3e8] sm:$0xff]
      %v274 = vld [vmem:[%s138 + $0x3f0] sm:$0xff]
      %v275 = vld [vmem:[%s138 + $0x3f8] sm:$0xff]
      %v280 = vunpack.c.l.b16 %v144
      %v281 = vunpack.c.h.b16 %v144
      %v282 = vunpack.c.l.b16 %v145
      %v283 = vunpack.c.h.b16 %v145
      %v284 = vunpack.c.l.b16 %v146
      %v285 = vunpack.c.h.b16 %v146
      %v286 = vunpack.c.l.b16 %v147
      %v287 = vunpack.c.h.b16 %v147
      %v288 = vpack.c.b16 %v282, %v280
      %v289 = vpack.c.b16 %v283, %v281
      %v290 = vpack.c.b16 %v286, %v284
      %v291 = vpack.c.b16 %v287, %v285
      %v424 = vunpack.c.l.b16 %v148
      %v425 = vunpack.c.h.b16 %v148
      %v426 = vunpack.c.l.b16 %v149
      %v427 = vunpack.c.h.b16 %v149
      %v428 = vunpack.c.l.b16 %v150
      %v429 = vunpack.c.h.b16 %v150
      %v430 = vunpack.c.l.b16 %v151
      %v431 = vunpack.c.h.b16 %v151
      %v432 = vunpack.c.l.b16 %v152
      %v433 = vunpack.c.h.b16 %v152
      %v434 = vunpack.c.l.b16 %v153
      %v435 = vunpack.c.h.b16 %v153
      %v436 = vunpack.c.l.b16 %v154
      %v437 = vunpack.c.h.b16 %v154
      %v438 = vunpack.c.l.b16 %v155
      %v439 = vunpack.c.h.b16 %v155
      %v440 = vunpack.c.l.b16 %v156
      %v441 = vunpack.c.h.b16 %v156
      %v442 = vunpack.c.l.b16 %v157
      %v443 = vunpack.c.h.b16 %v157
      %v444 = vunpack.c.l.b16 %v158
      %v445 = vunpack.c.h.b16 %v158
      %v446 = vunpack.c.l.b16 %v159
      %v447 = vunpack.c.h.b16 %v159
      %v448 = vunpack.c.l.b16 %v160
      %v449 = vunpack.c.h.b16 %v160
      %v450 = vunpack.c.l.b16 %v161
      %v451 = vunpack.c.h.b16 %v161
      %v452 = vunpack.c.l.b16 %v162
      %v453 = vunpack.c.h.b16 %v162
      %v454 = vunpack.c.l.b16 %v163
      %v455 = vunpack.c.h.b16 %v163
      %v456 = vunpack.c.l.b16 %v164
      %v457 = vunpack.c.h.b16 %v164
      %v458 = vunpack.c.l.b16 %v165
      %v459 = vunpack.c.h.b16 %v165
      %v460 = vunpack.c.l.b16 %v166
      %v461 = vunpack.c.h.b16 %v166
      %v462 = vunpack.c.l.b16 %v167
      %v463 = vunpack.c.h.b16 %v167
      %v464 = vunpack.c.l.b16 %v168
      %v465 = vunpack.c.h.b16 %v168
      %v466 = vunpack.c.l.b16 %v169
      %v467 = vunpack.c.h.b16 %v169
      %v468 = vunpack.c.l.b16 %v170
      %v469 = vunpack.c.h.b16 %v170
      %v470 = vunpack.c.l.b16 %v171
      %v471 = vunpack.c.h.b16 %v171
      %v472 = vunpack.c.l.b16 %v172
      %v473 = vunpack.c.h.b16 %v172
      %v474 = vunpack.c.l.b16 %v173
      %v475 = vunpack.c.h.b16 %v173
      %v476 = vunpack.c.l.b16 %v174
      %v477 = vunpack.c.h.b16 %v174
      %v478 = vunpack.c.l.b16 %v175
      %v479 = vunpack.c.h.b16 %v175
      %v480 = vunpack.c.l.b16 %v176
      %v481 = vunpack.c.h.b16 %v176
      %v482 = vunpack.c.l.b16 %v177
      %v483 = vunpack.c.h.b16 %v177
      %v484 = vunpack.c.l.b16 %v178
      %v485 = vunpack.c.h.b16 %v178
      %v486 = vunpack.c.l.b16 %v179
      %v487 = vunpack.c.h.b16 %v179
      %v488 = vunpack.c.l.b16 %v180
      %v489 = vunpack.c.h.b16 %v180
      %v490 = vunpack.c.l.b16 %v181
      %v491 = vunpack.c.h.b16 %v181
      %v492 = vunpack.c.l.b16 %v182
      %v493 = vunpack.c.h.b16 %v182
      %v494 = vunpack.c.l.b16 %v183
      %v495 = vunpack.c.h.b16 %v183
      %v496 = vunpack.c.l.b16 %v184
      %v497 = vunpack.c.h.b16 %v184
      %v498 = vunpack.c.l.b16 %v185
      %v499 = vunpack.c.h.b16 %v185
      %v500 = vunpack.c.l.b16 %v186
      %v501 = vunpack.c.h.b16 %v186
      %v502 = vunpack.c.l.b16 %v187
      %v503 = vunpack.c.h.b16 %v187
      %v504 = vunpack.c.l.b16 %v188
      %v505 = vunpack.c.h.b16 %v188
      %v506 = vunpack.c.l.b16 %v189
      %v507 = vunpack.c.h.b16 %v189
      %v508 = vunpack.c.l.b16 %v190
      %v509 = vunpack.c.h.b16 %v190
      %v510 = vunpack.c.l.b16 %v191
      %v511 = vunpack.c.h.b16 %v191
      %v512 = vunpack.c.l.b16 %v192
      %v513 = vunpack.c.h.b16 %v192
      %v514 = vunpack.c.l.b16 %v193
      %v515 = vunpack.c.h.b16 %v193
      %v516 = vunpack.c.l.b16 %v194
      %v517 = vunpack.c.h.b16 %v194
      %v518 = vunpack.c.l.b16 %v195
      %v519 = vunpack.c.h.b16 %v195
      %v520 = vunpack.c.l.b16 %v196
      %v521 = vunpack.c.h.b16 %v196
      %v522 = vunpack.c.l.b16 %v197
      %v523 = vunpack.c.h.b16 %v197
      %v524 = vunpack.c.l.b16 %v198
      %v525 = vunpack.c.h.b16 %v198
      %v526 = vunpack.c.l.b16 %v199
      %v527 = vunpack.c.h.b16 %v199
      %v528 = vunpack.c.l.b16 %v200
      %v529 = vunpack.c.h.b16 %v200
      %v530 = vunpack.c.l.b16 %v201
      %v531 = vunpack.c.h.b16 %v201
      %v532 = vunpack.c.l.b16 %v202
      %v533 = vunpack.c.h.b16 %v202
      %v534 = vunpack.c.l.b16 %v203
      %v535 = vunpack.c.h.b16 %v203
      %v536 = vunpack.c.l.b16 %v204
      %v537 = vunpack.c.h.b16 %v204
      %v538 = vunpack.c.l.b16 %v205
      %v539 = vunpack.c.h.b16 %v205
      %v540 = vunpack.c.l.b16 %v206
      %v541 = vunpack.c.h.b16 %v206
      %v542 = vunpack.c.l.b16 %v207
      %v543 = vunpack.c.h.b16 %v207
      %v544 = vunpack.c.l.b16 %v208
      %v545 = vunpack.c.h.b16 %v208
      %v546 = vunpack.c.l.b16 %v209
      %v547 = vunpack.c.h.b16 %v209
      %v548 = vunpack.c.l.b16 %v210
      %v549 = vunpack.c.h.b16 %v210
      %v550 = vunpack.c.l.b16 %v211
      %v551 = vunpack.c.h.b16 %v211
      %v552 = vunpack.c.l.b16 %v212
      %v553 = vunpack.c.h.b16 %v212
      %v554 = vunpack.c.l.b16 %v213
      %v555 = vunpack.c.h.b16 %v213
      %v556 = vunpack.c.l.b16 %v214
      %v557 = vunpack.c.h.b16 %v214
      %v558 = vunpack.c.l.b16 %v215
      %v559 = vunpack.c.h.b16 %v215
      %v560 = vunpack.c.l.b16 %v216
      %v561 = vunpack.c.h.b16 %v216
      %v562 = vunpack.c.l.b16 %v217
      %v563 = vunpack.c.h.b16 %v217
      %v564 = vunpack.c.l.b16 %v218
      %v565 = vunpack.c.h.b16 %v218
      %v566 = vunpack.c.l.b16 %v219
      %v567 = vunpack.c.h.b16 %v219
      %v568 = vunpack.c.l.b16 %v220
      %v569 = vunpack.c.h.b16 %v220
      %v570 = vunpack.c.l.b16 %v221
      %v571 = vunpack.c.h.b16 %v221
      %v572 = vunpack.c.l.b16 %v222
      %v573 = vunpack.c.h.b16 %v222
      %v574 = vunpack.c.l.b16 %v223
      %v575 = vunpack.c.h.b16 %v223
      %v576 = vunpack.c.l.b16 %v224
      %v577 = vunpack.c.h.b16 %v224
      %v578 = vunpack.c.l.b16 %v225
      %v579 = vunpack.c.h.b16 %v225
      %v580 = vunpack.c.l.b16 %v226
      %v581 = vunpack.c.h.b16 %v226
      %v582 = vunpack.c.l.b16 %v227
      %v583 = vunpack.c.h.b16 %v227
      %v584 = vunpack.c.l.b16 %v228
      %v585 = vunpack.c.h.b16 %v228
      %v586 = vunpack.c.l.b16 %v229
      %v587 = vunpack.c.h.b16 %v229
      %v588 = vunpack.c.l.b16 %v230
      %v589 = vunpack.c.h.b16 %v230
      %v590 = vunpack.c.l.b16 %v231
      %v591 = vunpack.c.h.b16 %v231
      %v592 = vunpack.c.l.b16 %v232
      %v593 = vunpack.c.h.b16 %v232
      %v594 = vunpack.c.l.b16 %v233
      %v595 = vunpack.c.h.b16 %v233
      %v596 = vunpack.c.l.b16 %v234
      %v597 = vunpack.c.h.b16 %v234
      %v598 = vunpack.c.l.b16 %v235
      %v599 = vunpack.c.h.b16 %v235
      %v600 = vunpack.c.l.b16 %v236
      %v601 = vunpack.c.h.b16 %v236
      %v602 = vunpack.c.l.b16 %v237
      %v603 = vunpack.c.h.b16 %v237
      %v604 = vunpack.c.l.b16 %v238
      %v605 = vunpack.c.h.b16 %v238
      %v606 = vunpack.c.l.b16 %v239
      %v607 = vunpack.c.h.b16 %v239
      %v608 = vunpack.c.l.b16 %v240
      %v609 = vunpack.c.h.b16 %v240
      %v610 = vunpack.c.l.b16 %v241
      %v611 = vunpack.c.h.b16 %v241
      %v612 = vunpack.c.l.b16 %v242
      %v613 = vunpack.c.h.b16 %v242
      %v614 = vunpack.c.l.b16 %v243
      %v615 = vunpack.c.h.b16 %v243
      %v616 = vunpack.c.l.b16 %v244
      %v617 = vunpack.c.h.b16 %v244
      %v618 = vunpack.c.l.b16 %v245
      %v619 = vunpack.c.h.b16 %v245
      %v620 = vunpack.c.l.b16 %v246
      %v621 = vunpack.c.h.b16 %v246
      %v622 = vunpack.c.l.b16 %v247
      %v623 = vunpack.c.h.b16 %v247
      %v624 = vunpack.c.l.b16 %v248
      %v625 = vunpack.c.h.b16 %v248
      %v626 = vunpack.c.l.b16 %v249
      %v627 = vunpack.c.h.b16 %v249
      %v628 = vunpack.c.l.b16 %v250
      %v629 = vunpack.c.h.b16 %v250
      %v630 = vunpack.c.l.b16 %v251
      %v631 = vunpack.c.h.b16 %v251
      %v632 = vunpack.c.l.b16 %v252
      %v633 = vunpack.c.h.b16 %v252
      %v634 = vunpack.c.l.b16 %v253
      %v635 = vunpack.c.h.b16 %v253
      %v636 = vunpack.c.l.b16 %v254
      %v637 = vunpack.c.h.b16 %v254
      %v638 = vunpack.c.l.b16 %v255
      %v639 = vunpack.c.h.b16 %v255
      %v640 = vunpack.c.l.b16 %v256
      %v641 = vunpack.c.h.b16 %v256
      %v642 = vunpack.c.l.b16 %v257
      %v643 = vunpack.c.h.b16 %v257
      %v644 = vunpack.c.l.b16 %v258
      %v645 = vunpack.c.h.b16 %v258
      %v646 = vunpack.c.l.b16 %v259
      %v647 = vunpack.c.h.b16 %v259
      %v648 = vunpack.c.l.b16 %v260
      %v649 = vunpack.c.h.b16 %v260
      %v650 = vunpack.c.l.b16 %v261
      %v651 = vunpack.c.h.b16 %v261
      %v652 = vunpack.c.l.b16 %v262
      %v653 = vunpack.c.h.b16 %v262
      %v654 = vunpack.c.l.b16 %v263
      %v655 = vunpack.c.h.b16 %v263
      %v656 = vunpack.c.l.b16 %v264
      %v657 = vunpack.c.h.b16 %v264
      %v658 = vunpack.c.l.b16 %v265
      %v659 = vunpack.c.h.b16 %v265
      %v660 = vunpack.c.l.b16 %v266
      %v661 = vunpack.c.h.b16 %v266
      %v662 = vunpack.c.l.b16 %v267
      %v663 = vunpack.c.h.b16 %v267
      %v664 = vunpack.c.l.b16 %v268
      %v665 = vunpack.c.h.b16 %v268
      %v666 = vunpack.c.l.b16 %v269
      %v667 = vunpack.c.h.b16 %v269
      %v668 = vunpack.c.l.b16 %v270
      %v669 = vunpack.c.h.b16 %v270
      %v670 = vunpack.c.l.b16 %v271
      %v671 = vunpack.c.h.b16 %v271
      %v672 = vunpack.c.l.b16 %v272
      %v673 = vunpack.c.h.b16 %v272
      %v674 = vunpack.c.l.b16 %v273
      %v675 = vunpack.c.h.b16 %v273
      %v676 = vunpack.c.l.b16 %v274
      %v677 = vunpack.c.h.b16 %v274
      %v678 = vunpack.c.l.b16 %v275
      %v679 = vunpack.c.h.b16 %v275
      %v680 = vpack.c.b16 %v432, %v424
      %v681 = vpack.c.b16 %v433, %v425
      %v682 = vpack.c.b16 %v434, %v426
      %v683 = vpack.c.b16 %v435, %v427
      %v684 = vpack.c.b16 %v436, %v428
      %v685 = vpack.c.b16 %v437, %v429
      %v686 = vpack.c.b16 %v438, %v430
      %v687 = vpack.c.b16 %v439, %v431
      %v688 = vpack.c.b16 %v448, %v440
      %v689 = vpack.c.b16 %v449, %v441
      %v690 = vpack.c.b16 %v450, %v442
      %v691 = vpack.c.b16 %v451, %v443
      %v692 = vpack.c.b16 %v452, %v444
      %v693 = vpack.c.b16 %v453, %v445
      %v694 = vpack.c.b16 %v454, %v446
      %v695 = vpack.c.b16 %v455, %v447
      %v696 = vpack.c.b16 %v464, %v456
      %v697 = vpack.c.b16 %v465, %v457
      %v698 = vpack.c.b16 %v466, %v458
      %v699 = vpack.c.b16 %v467, %v459
      %v700 = vpack.c.b16 %v468, %v460
      %v701 = vpack.c.b16 %v469, %v461
      %v702 = vpack.c.b16 %v470, %v462
      %v703 = vpack.c.b16 %v471, %v463
      %v704 = vpack.c.b16 %v480, %v472
      %v705 = vpack.c.b16 %v481, %v473
      %v706 = vpack.c.b16 %v482, %v474
      %v707 = vpack.c.b16 %v483, %v475
      %v708 = vpack.c.b16 %v484, %v476
      %v709 = vpack.c.b16 %v485, %v477
      %v710 = vpack.c.b16 %v486, %v478
      %v711 = vpack.c.b16 %v487, %v479
      %v712 = vpack.c.b16 %v496, %v488
      %v713 = vpack.c.b16 %v497, %v489
      %v714 = vpack.c.b16 %v498, %v490
      %v715 = vpack.c.b16 %v499, %v491
      %v716 = vpack.c.b16 %v500, %v492
      %v717 = vpack.c.b16 %v501, %v493
      %v718 = vpack.c.b16 %v502, %v494
      %v719 = vpack.c.b16 %v503, %v495
      %v720 = vpack.c.b16 %v512, %v504
      %v721 = vpack.c.b16 %v513, %v505
      %v722 = vpack.c.b16 %v514, %v506
      %v723 = vpack.c.b16 %v515, %v507
      %v724 = vpack.c.b16 %v516, %v508
      %v725 = vpack.c.b16 %v517, %v509
      %v726 = vpack.c.b16 %v518, %v510
      %v727 = vpack.c.b16 %v519, %v511
      %v728 = vpack.c.b16 %v528, %v520
      %v729 = vpack.c.b16 %v529, %v521
      %v730 = vpack.c.b16 %v530, %v522
      %v731 = vpack.c.b16 %v531, %v523
      %v732 = vpack.c.b16 %v532, %v524
      %v733 = vpack.c.b16 %v533, %v525
      %v734 = vpack.c.b16 %v534, %v526
      %v735 = vpack.c.b16 %v535, %v527
      %v736 = vpack.c.b16 %v544, %v536
      %v737 = vpack.c.b16 %v545, %v537
      %v738 = vpack.c.b16 %v546, %v538
      %v739 = vpack.c.b16 %v547, %v539
      %v740 = vpack.c.b16 %v548, %v540
      %v741 = vpack.c.b16 %v549, %v541
      %v742 = vpack.c.b16 %v550, %v542
      %v743 = vpack.c.b16 %v551, %v543
      %v744 = vpack.c.b16 %v560, %v552
      %v745 = vpack.c.b16 %v561, %v553
      %v746 = vpack.c.b16 %v562, %v554
      %v747 = vpack.c.b16 %v563, %v555
      %v748 = vpack.c.b16 %v564, %v556
      %v749 = vpack.c.b16 %v565, %v557
      %v750 = vpack.c.b16 %v566, %v558
      %v751 = vpack.c.b16 %v567, %v559
      %v752 = vpack.c.b16 %v576, %v568
      %v753 = vpack.c.b16 %v577, %v569
      %v754 = vpack.c.b16 %v578, %v570
      %v755 = vpack.c.b16 %v579, %v571
      %v756 = vpack.c.b16 %v580, %v572
      %v757 = vpack.c.b16 %v581, %v573
      %v758 = vpack.c.b16 %v582, %v574
      %v759 = vpack.c.b16 %v583, %v575
      %v760 = vpack.c.b16 %v592, %v584
      %v761 = vpack.c.b16 %v593, %v585
      %v762 = vpack.c.b16 %v594, %v586
      %v763 = vpack.c.b16 %v595, %v587
      %v764 = vpack.c.b16 %v596, %v588
      %v765 = vpack.c.b16 %v597, %v589
      %v766 = vpack.c.b16 %v598, %v590
      %v767 = vpack.c.b16 %v599, %v591
      %v768 = vpack.c.b16 %v608, %v600
      %v769 = vpack.c.b16 %v609, %v601
      %v770 = vpack.c.b16 %v610, %v602
      %v771 = vpack.c.b16 %v611, %v603
      %v772 = vpack.c.b16 %v612, %v604
      %v773 = vpack.c.b16 %v613, %v605
      %v774 = vpack.c.b16 %v614, %v606
      %v775 = vpack.c.b16 %v615, %v607
      %v776 = vpack.c.b16 %v624, %v616
      %v777 = vpack.c.b16 %v625, %v617
      %v778 = vpack.c.b16 %v626, %v618
      %v779 = vpack.c.b16 %v627, %v619
      %v780 = vpack.c.b16 %v628, %v620
      %v781 = vpack.c.b16 %v629, %v621
      %v782 = vpack.c.b16 %v630, %v622
      %v783 = vpack.c.b16 %v631, %v623
      %v784 = vpack.c.b16 %v640, %v632
      %v785 = vpack.c.b16 %v641, %v633
      %v786 = vpack.c.b16 %v642, %v634
      %v787 = vpack.c.b16 %v643, %v635
      %v788 = vpack.c.b16 %v644, %v636
      %v789 = vpack.c.b16 %v645, %v637
      %v790 = vpack.c.b16 %v646, %v638
      %v791 = vpack.c.b16 %v647, %v639
      %v792 = vpack.c.b16 %v656, %v648
      %v793 = vpack.c.b16 %v657, %v649
      %v794 = vpack.c.b16 %v658, %v650
      %v795 = vpack.c.b16 %v659, %v651
      %v796 = vpack.c.b16 %v660, %v652
      %v797 = vpack.c.b16 %v661, %v653
      %v798 = vpack.c.b16 %v662, %v654
      %v799 = vpack.c.b16 %v663, %v655
      %v800 = vpack.c.b16 %v672, %v664
      %v801 = vpack.c.b16 %v673, %v665
      %v802 = vpack.c.b16 %v674, %v666
      %v803 = vpack.c.b16 %v675, %v667
      %v804 = vpack.c.b16 %v676, %v668
      %v805 = vpack.c.b16 %v677, %v669
      %v806 = vpack.c.b16 %v678, %v670
      %v807 = vpack.c.b16 %v679, %v671
      %936 = vmatprep.subr.bf16.mxu0 %v737
      %937 = vmatpush1.bf16.msra.mxu0 %v736
      %938 = vmatprep.subr.bf16.mxu0 %v729
      %939 = vmatpush1.bf16.msra.mxu0 %v728
      %940 = vmatprep.subr.bf16.mxu0 %v721
      %941 = vmatpush1.bf16.msra.mxu0 %v720
      %942 = vmatprep.subr.bf16.mxu0 %v713
      %943 = vmatpush1.bf16.msra.mxu0 %v712
      %944 = vmatprep.subr.bf16.mxu0 %v705
      %945 = vmatpush1.bf16.msra.mxu0 %v704
      %946 = vmatprep.subr.bf16.mxu0 %v697
      %947 = vmatpush1.bf16.msra.mxu0 %v696
      %948 = vmatprep.subr.bf16.mxu0 %v689
      %949 = vmatpush1.bf16.msra.mxu0 %v688
      %950 = vmatprep.subr.bf16.mxu0 %v681
      %951 = vmatpush1.bf16.msra.mxu0 %v680
      %952 = vmatprep.subr.bf16.mxu0 %v801
      %953 = vmatpush2.bf16.msra.mxu0 %v800
      %954 = vmatprep.subr.bf16.mxu0 %v793
      %955 = vmatpush2.bf16.msra.mxu0 %v792
      %956 = vmatprep.subr.bf16.mxu0 %v785
      %957 = vmatpush2.bf16.msra.mxu0 %v784
      %958 = vmatprep.subr.bf16.mxu0 %v777
      %959 = vmatpush2.bf16.msra.mxu0 %v776
      %960 = vmatprep.subr.bf16.mxu0 %v769
      %961 = vmatpush2.bf16.msra.mxu0 %v768
      %962 = vmatprep.subr.bf16.mxu0 %v761
      %963 = vmatpush2.bf16.msra.mxu0 %v760
      %964 = vmatprep.subr.bf16.mxu0 %v753
      %965 = vmatpush2.bf16.msra.mxu0 %v752
      %966 = vmatprep.subr.bf16.mxu0 %v745
      %967 = vmatpush2.bf16.msra.mxu0 %v744
      %968 = vmatprep.mubr.bf16.mxu0 %v289
      %969 = vmatmul.mubr.bf16.gmra.mxu0 %v288
      %v970 = vpop.f32.mrf.mxu0
      %v971 = vadd.f32 0.0, %v970
      %v972 = vpop.f32.mrf.mxu0
      %v973 = vadd.f32 0.0, %v972
      %v974 = vpop.f32.mrf.mxu0
      %v975 = vadd.f32 0.0, %v974
      %v976 = vpop.f32.mrf.mxu0
      %v977 = vadd.f32 0.0, %v976
      %978 = vmatprep.mubr.bf16.mxu0 %v291
      %979 = vmatmul.mubr.bf16.gmra.mxu0 %v290
      %v980 = vpop.f32.mrf.mxu0
      %v981 = vadd.f32 0.0, %v980
      %v982 = vpop.f32.mrf.mxu0
      %v983 = vadd.f32 0.0, %v982
      %v984 = vpop.f32.mrf.mxu0
      %v985 = vadd.f32 0.0, %v984
      %v986 = vpop.f32.mrf.mxu0
      %v987 = vadd.f32 0.0, %v986
      %988 = vdwg.mxu0
      %989 = vmatprep.subr.bf16.mxu0 %v739
      %990 = vmatpush1.bf16.msra.mxu0 %v738
      %991 = vmatprep.subr.bf16.mxu0 %v731
      %992 = vmatpush1.bf16.msra.mxu0 %v730
      %993 = vmatprep.subr.bf16.mxu0 %v723
      %994 = vmatpush1.bf16.msra.mxu0 %v722
      %995 = vmatprep.subr.bf16.mxu0 %v715
      %996 = vmatpush1.bf16.msra.mxu0 %v714
      %997 = vmatprep.subr.bf16.mxu0 %v707
      %998 = vmatpush1.bf16.msra.mxu0 %v706
      %999 = vmatprep.subr.bf16.mxu0 %v699
      %1000 = vmatpush1.bf16.msra.mxu0 %v698
      %1001 = vmatprep.subr.bf16.mxu0 %v691
      %1002 = vmatpush1.bf16.msra.mxu0 %v690
      %1003 = vmatprep.subr.bf16.mxu0 %v683
      %1004 = vmatpush1.bf16.msra.mxu0 %v682
      %1005 = vmatprep.subr.bf16.mxu0 %v803
      %1006 = vmatpush2.bf16.msra.mxu0 %v802
      %1007 = vmatprep.subr.bf16.mxu0 %v795
      %1008 = vmatpush2.bf16.msra.mxu0 %v794
      %1009 = vmatprep.subr.bf16.mxu0 %v787
      %1010 = vmatpush2.bf16.msra.mxu0 %v786
      %1011 = vmatprep.subr.bf16.mxu0 %v779
      %1012 = vmatpush2.bf16.msra.mxu0 %v778
      %1013 = vmatprep.subr.bf16.mxu0 %v771
      %1014 = vmatpush2.bf16.msra.mxu0 %v770
      %1015 = vmatprep.subr.bf16.mxu0 %v763
      %1016 = vmatpush2.bf16.msra.mxu0 %v762
      %1017 = vmatprep.subr.bf16.mxu0 %v755
      %1018 = vmatpush2.bf16.msra.mxu0 %v754
      %1019 = vmatprep.subr.bf16.mxu0 %v747
      %1020 = vmatpush2.bf16.msra.mxu0 %v746
      %1021 = vmatprep.mubr.bf16.mxu0 %v289
      %1022 = vmatmul.mubr.bf16.gmra.mxu0 %v288
      %v1023 = vpop.f32.mrf.mxu0
      %v1024 = vadd.f32 0.0, %v1023
      %v1025 = vpop.f32.mrf.mxu0
      %v1026 = vadd.f32 0.0, %v1025
      %v1027 = vpop.f32.mrf.mxu0
      %v1028 = vadd.f32 0.0, %v1027
      %v1029 = vpop.f32.mrf.mxu0
      %v1030 = vadd.f32 0.0, %v1029
      %1031 = vmatprep.mubr.bf16.mxu0 %v291
      %1032 = vmatmul.mubr.bf16.gmra.mxu0 %v290
      %v1033 = vpop.f32.mrf.mxu0
      %v1034 = vadd.f32 0.0, %v1033
      %v1035 = vpop.f32.mrf.mxu0
      %v1036 = vadd.f32 0.0, %v1035
      %v1037 = vpop.f32.mrf.mxu0
      %v1038 = vadd.f32 0.0, %v1037
      %v1039 = vpop.f32.mrf.mxu0
      %v1040 = vadd.f32 0.0, %v1039
      %1041 = vdwg.mxu0
      %1042 = vmatprep.subr.bf16.mxu0 %v741
      %1043 = vmatpush1.bf16.msra.mxu0 %v740
      %1044 = vmatprep.subr.bf16.mxu0 %v733
      %1045 = vmatpush1.bf16.msra.mxu0 %v732
      %1046 = vmatprep.subr.bf16.mxu0 %v725
      %1047 = vmatpush1.bf16.msra.mxu0 %v724
      %1048 = vmatprep.subr.bf16.mxu0 %v717
      %1049 = vmatpush1.bf16.msra.mxu0 %v716
      %1050 = vmatprep.subr.bf16.mxu0 %v709
      %1051 = vmatpush1.bf16.msra.mxu0 %v708
      %1052 = vmatprep.subr.bf16.mxu0 %v701
      %1053 = vmatpush1.bf16.msra.mxu0 %v700
      %1054 = vmatprep.subr.bf16.mxu0 %v693
      %1055 = vmatpush1.bf16.msra.mxu0 %v692
      %1056 = vmatprep.subr.bf16.mxu0 %v685
      %1057 = vmatpush1.bf16.msra.mxu0 %v684
      %1058 = vmatprep.subr.bf16.mxu0 %v805
      %1059 = vmatpush2.bf16.msra.mxu0 %v804
      %1060 = vmatprep.subr.bf16.mxu0 %v797
      %1061 = vmatpush2.bf16.msra.mxu0 %v796
      %1062 = vmatprep.subr.bf16.mxu0 %v789
      %1063 = vmatpush2.bf16.msra.mxu0 %v788
      %1064 = vmatprep.subr.bf16.mxu0 %v781
      %1065 = vmatpush2.bf16.msra.mxu0 %v780
      %1066 = vmatprep.subr.bf16.mxu0 %v773
      %1067 = vmatpush2.bf16.msra.mxu0 %v772
      %1068 = vmatprep.subr.bf16.mxu0 %v765
      %1069 = vmatpush2.bf16.msra.mxu0 %v764
      %1070 = vmatprep.subr.bf16.mxu0 %v757
      %1071 = vmatpush2.bf16.msra.mxu0 %v756
      %1072 = vmatprep.subr.bf16.mxu0 %v749
      %1073 = vmatpush2.bf16.msra.mxu0 %v748
      %1074 = vmatprep.mubr.bf16.mxu0 %v289
      %1075 = vmatmul.mubr.bf16.gmra.mxu0 %v288
      %v1076 = vpop.f32.mrf.mxu0
      %v1077 = vadd.f32 0.0, %v1076
      %v1078 = vpop.f32.mrf.mxu0
      %v1079 = vadd.f32 0.0, %v1078
      %v1080 = vpop.f32.mrf.mxu0
      %v1081 = vadd.f32 0.0, %v1080
      %v1082 = vpop.f32.mrf.mxu0
      %v1083 = vadd.f32 0.0, %v1082
      %1084 = vmatprep.mubr.bf16.mxu0 %v291
      %1085 = vmatmul.mubr.bf16.gmra.mxu0 %v290
      %v1086 = vpop.f32.mrf.mxu0
      %v1087 = vadd.f32 0.0, %v1086
      %v1088 = vpop.f32.mrf.mxu0
      %v1089 = vadd.f32 0.0, %v1088
      %v1090 = vpop.f32.mrf.mxu0
      %v1091 = vadd.f32 0.0, %v1090
      %v1092 = vpop.f32.mrf.mxu0
      %v1093 = vadd.f32 0.0, %v1092
      %1094 = vdwg.mxu0
      %1095 = vmatprep.subr.bf16.mxu0 %v743
      %1096 = vmatpush1.bf16.msra.mxu0 %v742
      %1097 = vmatprep.subr.bf16.mxu0 %v735
      %1098 = vmatpush1.bf16.msra.mxu0 %v734
      %1099 = vmatprep.subr.bf16.mxu0 %v727
      %1100 = vmatpush1.bf16.msra.mxu0 %v726
      %1101 = vmatprep.subr.bf16.mxu0 %v719
      %1102 = vmatpush1.bf16.msra.mxu0 %v718
      %1103 = vmatprep.subr.bf16.mxu0 %v711
      %1104 = vmatpush1.bf16.msra.mxu0 %v710
      %1105 = vmatprep.subr.bf16.mxu0 %v703
      %1106 = vmatpush1.bf16.msra.mxu0 %v702
      %1107 = vmatprep.subr.bf16.mxu0 %v695
      %1108 = vmatpush1.bf16.msra.mxu0 %v694
      %1109 = vmatprep.subr.bf16.mxu0 %v687
      %1110 = vmatpush1.bf16.msra.mxu0 %v686
      %1111 = vmatprep.subr.bf16.mxu0 %v807
      %1112 = vmatpush2.bf16.msra.mxu0 %v806
      %1113 = vmatprep.subr.bf16.mxu0 %v799
      %1114 = vmatpush2.bf16.msra.mxu0 %v798
      %1115 = vmatprep.subr.bf16.mxu0 %v791
      %1116 = vmatpush2.bf16.msra.mxu0 %v790
      %1117 = vmatprep.subr.bf16.mxu0 %v783
      %1118 = vmatpush2.bf16.msra.mxu0 %v782
      %1119 = vmatprep.subr.bf16.mxu0 %v775
      %1120 = vmatpush2.bf16.msra.mxu0 %v774
      %1121 = vmatprep.subr.bf16.mxu0 %v767
      %1122 = vmatpush2.bf16.msra.mxu0 %v766
      %1123 = vmatprep.subr.bf16.mxu0 %v759
      %1124 = vmatpush2.bf16.msra.mxu0 %v758
      %1125 = vmatprep.subr.bf16.mxu0 %v751
      %1126 = vmatpush2.bf16.msra.mxu0 %v750
      %1127 = vmatprep.mubr.bf16.mxu0 %v289
      %1128 = vmatmul.mubr.bf16.gmra.mxu0 %v288
      %v1129 = vpop.f32.mrf.mxu0
      %v1130 = vadd.f32 0.0, %v1129
      %v1131 = vpop.f32.mrf.mxu0
      %v1132 = vadd.f32 0.0, %v1131
      %v1133 = vpop.f32.mrf.mxu0
      %v1134 = vadd.f32 0.0, %v1133
      %v1135 = vpop.f32.mrf.mxu0
      %v1136 = vadd.f32 0.0, %v1135
      %1137 = vmatprep.mubr.bf16.mxu0 %v291
      %1138 = vmatmul.mubr.bf16.gmra.mxu0 %v290
      %v1139 = vpop.f32.mrf.mxu0
      %v1140 = vadd.f32 0.0, %v1139
      %v1141 = vpop.f32.mrf.mxu0
      %v1142 = vadd.f32 0.0, %v1141
      %v1143 = vpop.f32.mrf.mxu0
      %v1144 = vadd.f32 0.0, %v1143
      %v1145 = vpop.f32.mrf.mxu0
      %v1146 = vadd.f32 0.0, %v1145
      %1147 = vdwg.mxu0
      %v1148 = vadd.f32 %v971, %v973
      %v1149 = vadd.f32 %v1148, %v1024
      %v1150 = vadd.f32 %v1149, %v1026
      %v1151 = vadd.f32 %v1150, %v1077
      %v1152 = vadd.f32 %v1151, %v1079
      %v1153 = vadd.f32 %v1152, %v1130
      %v1154 = vadd.f32 %v1153, %v1132
      %1155 = vadd.xlane.f32.xlu0 %v1154
      %v1156 = vpop.xlane.xlu0 %1155
      %v1157 = vadd.f32 %v975, %v977
      %v1158 = vadd.f32 %v1157, %v1028
      %v1159 = vadd.f32 %v1158, %v1030
      %v1160 = vadd.f32 %v1159, %v1081
      %v1161 = vadd.f32 %v1160, %v1083
      %v1162 = vadd.f32 %v1161, %v1134
      %v1163 = vadd.f32 %v1162, %v1136
      %1164 = vadd.xlane.f32.xlu0 %v1163
      %v1165 = vpop.xlane.xlu0 %1164
      %v1166 = vadd.f32 %v981, %v983
      %v1167 = vadd.f32 %v1166, %v1034
      %v1168 = vadd.f32 %v1167, %v1036
      %v1169 = vadd.f32 %v1168, %v1087
      %v1170 = vadd.f32 %v1169, %v1089
      %v1171 = vadd.f32 %v1170, %v1140
      %v1172 = vadd.f32 %v1171, %v1142
      %1173 = vadd.xlane.f32.xlu0 %v1172
      %v1174 = vpop.xlane.xlu0 %1173
      %v1175 = vadd.f32 %v985, %v987
      %v1176 = vadd.f32 %v1175, %v1038
      %v1177 = vadd.f32 %v1176, %v1040
      %v1178 = vadd.f32 %v1177, %v1091
      %v1179 = vadd.f32 %v1178, %v1093
      %v1180 = vadd.f32 %v1179, %v1144
      %v1181 = vadd.f32 %v1180, %v1146
      %1182 = vadd.xlane.f32.xlu0 %v1181
      %v1183 = vpop.xlane.xlu0 %1182
      %v1184 = vrcp.pop 1024.0
      %v1185 = vmul.f32 %v1156, %v1184
      %v1186 = vmul.f32 %v1165, %v1184
      %v1187 = vmul.f32 %v1174, %v1184
      %v1188 = vmul.f32 %v1183, %v1184
      %v1189 = vsub.f32 %v971, %v1185
      %v1190 = vsub.f32 %v973, %v1185
      %v1191 = vsub.f32 %v1024, %v1185
      %v1192 = vsub.f32 %v1026, %v1185
      %v1193 = vsub.f32 %v1077, %v1185
      %v1194 = vsub.f32 %v1079, %v1185
      %v1195 = vsub.f32 %v1130, %v1185
      %v1196 = vsub.f32 %v1132, %v1185
      %v1197 = vsub.f32 %v975, %v1186
      %v1198 = vsub.f32 %v977, %v1186
      %v1199 = vsub.f32 %v1028, %v1186
      %v1200 = vsub.f32 %v1030, %v1186
      %v1201 = vsub.f32 %v1081, %v1186
      %v1202 = vsub.f32 %v1083, %v1186
      %v1203 = vsub.f32 %v1134, %v1186
      %v1204 = vsub.f32 %v1136, %v1186
      %v1205 = vsub.f32 %v981, %v1187
      %v1206 = vsub.f32 %v983, %v1187
      %v1207 = vsub.f32 %v1034, %v1187
      %v1208 = vsub.f32 %v1036, %v1187
      %v1209 = vsub.f32 %v1087, %v1187
      %v1210 = vsub.f32 %v1089, %v1187
      %v1211 = vsub.f32 %v1140, %v1187
      %v1212 = vsub.f32 %v1142, %v1187
      %v1213 = vsub.f32 %v985, %v1188
      %v1214 = vsub.f32 %v987, %v1188
      %v1215 = vsub.f32 %v1038, %v1188
      %v1216 = vsub.f32 %v1040, %v1188
      %v1217 = vsub.f32 %v1091, %v1188
      %v1218 = vsub.f32 %v1093, %v1188
      %v1219 = vsub.f32 %v1144, %v1188
      %v1220 = vsub.f32 %v1146, %v1188
      %v1221 = vmul.f32 %v1189, %v1189
      %v1222 = vmul.f32 %v1190, %v1190
      %v1223 = vmul.f32 %v1191, %v1191
      %v1224 = vmul.f32 %v1192, %v1192
      %v1225 = vmul.f32 %v1193, %v1193
      %v1226 = vmul.f32 %v1194, %v1194
      %v1227 = vmul.f32 %v1195, %v1195
      %v1228 = vmul.f32 %v1196, %v1196
      %v1229 = vmul.f32 %v1197, %v1197
      %v1230 = vmul.f32 %v1198, %v1198
      %v1231 = vmul.f32 %v1199, %v1199
      %v1232 = vmul.f32 %v1200, %v1200
      %v1233 = vmul.f32 %v1201, %v1201
      %v1234 = vmul.f32 %v1202, %v1202
      %v1235 = vmul.f32 %v1203, %v1203
      %v1236 = vmul.f32 %v1204, %v1204
      %v1237 = vmul.f32 %v1205, %v1205
      %v1238 = vmul.f32 %v1206, %v1206
      %v1239 = vmul.f32 %v1207, %v1207
      %v1240 = vmul.f32 %v1208, %v1208
      %v1241 = vmul.f32 %v1209, %v1209
      %v1242 = vmul.f32 %v1210, %v1210
      %v1243 = vmul.f32 %v1211, %v1211
      %v1244 = vmul.f32 %v1212, %v1212
      %v1245 = vmul.f32 %v1213, %v1213
      %v1246 = vmul.f32 %v1214, %v1214
      %v1247 = vmul.f32 %v1215, %v1215
      %v1248 = vmul.f32 %v1216, %v1216
      %v1249 = vmul.f32 %v1217, %v1217
      %v1250 = vmul.f32 %v1218, %v1218
      %v1251 = vmul.f32 %v1219, %v1219
      %v1252 = vmul.f32 %v1220, %v1220
      %v1253 = vadd.f32 %v1221, %v1222
      %v1254 = vadd.f32 %v1253, %v1223
      %v1255 = vadd.f32 %v1254, %v1224
      %v1256 = vadd.f32 %v1255, %v1225
      %v1257 = vadd.f32 %v1256, %v1226
      %v1258 = vadd.f32 %v1257, %v1227
      %v1259 = vadd.f32 %v1258, %v1228
      %1260 = vadd.xlane.f32.xlu0 %v1259
      %v1261 = vpop.xlane.xlu0 %1260
      %v1262 = vadd.f32 %v1229, %v1230
      %v1263 = vadd.f32 %v1262, %v1231
      %v1264 = vadd.f32 %v1263, %v1232
      %v1265 = vadd.f32 %v1264, %v1233
      %v1266 = vadd.f32 %v1265, %v1234
      %v1267 = vadd.f32 %v1266, %v1235
      %v1268 = vadd.f32 %v1267, %v1236
      %1269 = vadd.xlane.f32.xlu0 %v1268
      %v1270 = vpop.xlane.xlu0 %1269
      %v1271 = vadd.f32 %v1237, %v1238
      %v1272 = vadd.f32 %v1271, %v1239
      %v1273 = vadd.f32 %v1272, %v1240
      %v1274 = vadd.f32 %v1273, %v1241
      %v1275 = vadd.f32 %v1274, %v1242
      %v1276 = vadd.f32 %v1275, %v1243
      %v1277 = vadd.f32 %v1276, %v1244
      %1278 = vadd.xlane.f32.xlu0 %v1277
      %v1279 = vpop.xlane.xlu0 %1278
      %v1280 = vadd.f32 %v1245, %v1246
      %v1281 = vadd.f32 %v1280, %v1247
      %v1282 = vadd.f32 %v1281, %v1248
      %v1283 = vadd.f32 %v1282, %v1249
      %v1284 = vadd.f32 %v1283, %v1250
      %v1285 = vadd.f32 %v1284, %v1251
      %v1286 = vadd.f32 %v1285, %v1252
      %1287 = vadd.xlane.f32.xlu0 %v1286
      %v1288 = vpop.xlane.xlu0 %1287
      %v1289 = vmul.f32 %v1261, %v1184
      %v1290 = vmul.f32 %v1270, %v1184
      %v1291 = vmul.f32 %v1279, %v1184
      %v1292 = vmul.f32 %v1288, %v1184
      %v1293 = vadd.f32 %v1289, 1e-05
      %v1294 = vadd.f32 %v1290, 1e-05
      %v1295 = vadd.f32 %v1291, 1e-05
      %v1296 = vadd.f32 %v1292, 1e-05
      %v1297 = vrsqrt.pop %v1293
      %v1298 = vrsqrt.pop %v1294
      %v1299 = vrsqrt.pop %v1295
      %v1300 = vrsqrt.pop %v1296
      %v1301 = vmul.f32 %v1189, %v1297
      %v1302 = vmul.f32 %v1190, %v1297
      %v1303 = vmul.f32 %v1191, %v1297
      %v1304 = vmul.f32 %v1192, %v1297
      %v1305 = vmul.f32 %v1193, %v1297
      %v1306 = vmul.f32 %v1194, %v1297
      %v1307 = vmul.f32 %v1195, %v1297
      %v1308 = vmul.f32 %v1196, %v1297
      %v1309 = vmul.f32 %v1197, %v1298
      %v1310 = vmul.f32 %v1198, %v1298
      %v1311 = vmul.f32 %v1199, %v1298
      %v1312 = vmul.f32 %v1200, %v1298
      %v1313 = vmul.f32 %v1201, %v1298
      %v1314 = vmul.f32 %v1202, %v1298
      %v1315 = vmul.f32 %v1203, %v1298
      %v1316 = vmul.f32 %v1204, %v1298
      %v1317 = vmul.f32 %v1205, %v1299
      %v1318 = vmul.f32 %v1206, %v1299
      %v1319 = vmul.f32 %v1207, %v1299
      %v1320 = vmul.f32 %v1208, %v1299
      %v1321 = vmul.f32 %v1209, %v1299
      %v1322 = vmul.f32 %v1210, %v1299
      %v1323 = vmul.f32 %v1211, %v1299
      %v1324 = vmul.f32 %v1212, %v1299
      %v1325 = vmul.f32 %v1213, %v1300
      %v1326 = vmul.f32 %v1214, %v1300
      %v1327 = vmul.f32 %v1215, %v1300
      %v1328 = vmul.f32 %v1216, %v1300
      %v1329 = vmul.f32 %v1217, %v1300
      %v1330 = vmul.f32 %v1218, %v1300
      %v1331 = vmul.f32 %v1219, %v1300
      %v1332 = vmul.f32 %v1220, %v1300
      %vm1333 = vcmp.ge.f32.partialorder %v1301, 0.0
      %vm1334 = vcmp.ge.f32.partialorder %v1302, 0.0
      %vm1335 = vcmp.ge.f32.partialorder %v1303, 0.0
      %vm1336 = vcmp.ge.f32.partialorder %v1304, 0.0
      %vm1337 = vcmp.ge.f32.partialorder %v1305, 0.0
      %vm1338 = vcmp.ge.f32.partialorder %v1306, 0.0
      %vm1339 = vcmp.ge.f32.partialorder %v1307, 0.0
      %vm1340 = vcmp.ge.f32.partialorder %v1308, 0.0
      %vm1341 = vcmp.ge.f32.partialorder %v1309, 0.0
      %vm1342 = vcmp.ge.f32.partialorder %v1310, 0.0
      %vm1343 = vcmp.ge.f32.partialorder %v1311, 0.0
      %vm1344 = vcmp.ge.f32.partialorder %v1312, 0.0
      %vm1345 = vcmp.ge.f32.partialorder %v1313, 0.0
      %vm1346 = vcmp.ge.f32.partialorder %v1314, 0.0
      %vm1347 = vcmp.ge.f32.partialorder %v1315, 0.0
      %vm1348 = vcmp.ge.f32.partialorder %v1316, 0.0
      %vm1349 = vcmp.ge.f32.partialorder %v1317, 0.0
      %vm1350 = vcmp.ge.f32.partialorder %v1318, 0.0
      %vm1351 = vcmp.ge.f32.partialorder %v1319, 0.0
      %vm1352 = vcmp.ge.f32.partialorder %v1320, 0.0
      %vm1353 = vcmp.ge.f32.partialorder %v1321, 0.0
      %vm1354 = vcmp.ge.f32.partialorder %v1322, 0.0
      %vm1355 = vcmp.ge.f32.partialorder %v1323, 0.0
      %vm1356 = vcmp.ge.f32.partialorder %v1324, 0.0
      %vm1357 = vcmp.ge.f32.partialorder %v1325, 0.0
      %vm1358 = vcmp.ge.f32.partialorder %v1326, 0.0
      %vm1359 = vcmp.ge.f32.partialorder %v1327, 0.0
      %vm1360 = vcmp.ge.f32.partialorder %v1328, 0.0
      %vm1361 = vcmp.ge.f32.partialorder %v1329, 0.0
      %vm1362 = vcmp.ge.f32.partialorder %v1330, 0.0
      %vm1363 = vcmp.ge.f32.partialorder %v1331, 0.0
      %vm1364 = vcmp.ge.f32.partialorder %v1332, 0.0
      %v1365 = vmul.f32 %v1301, 0.2
      %v1366 = vmul.f32 %v1302, 0.2
      %v1367 = vmul.f32 %v1303, 0.2
      %v1368 = vmul.f32 %v1304, 0.2
      %v1369 = vmul.f32 %v1305, 0.2
      %v1370 = vmul.f32 %v1306, 0.2
      %v1371 = vmul.f32 %v1307, 0.2
      %v1372 = vmul.f32 %v1308, 0.2
      %v1373 = vmul.f32 %v1309, 0.2
      %v1374 = vmul.f32 %v1310, 0.2
      %v1375 = vmul.f32 %v1311, 0.2
      %v1376 = vmul.f32 %v1312, 0.2
      %v1377 = vmul.f32 %v1313, 0.2
      %v1378 = vmul.f32 %v1314, 0.2
      %v1379 = vmul.f32 %v1315, 0.2
      %v1380 = vmul.f32 %v1316, 0.2
      %v1381 = vmul.f32 %v1317, 0.2
      %v1382 = vmul.f32 %v1318, 0.2
      %v1383 = vmul.f32 %v1319, 0.2
      %v1384 = vmul.f32 %v1320, 0.2
      %v1385 = vmul.f32 %v1321, 0.2
      %v1386 = vmul.f32 %v1322, 0.2
      %v1387 = vmul.f32 %v1323, 0.2
      %v1388 = vmul.f32 %v1324, 0.2
      %v1389 = vmul.f32 %v1325, 0.2
      %v1390 = vmul.f32 %v1326, 0.2
      %v1391 = vmul.f32 %v1327, 0.2
      %v1392 = vmul.f32 %v1328, 0.2
      %v1393 = vmul.f32 %v1329, 0.2
      %v1394 = vmul.f32 %v1330, 0.2
      %v1395 = vmul.f32 %v1331, 0.2
      %v1396 = vmul.f32 %v1332, 0.2
      %v1397 = vsel %vm1333, %v1301, %v1365
      %v1398 = vsel %vm1334, %v1302, %v1366
      %v1399 = vsel %vm1335, %v1303, %v1367
      %v1400 = vsel %vm1336, %v1304, %v1368
      %v1401 = vsel %vm1337, %v1305, %v1369
      %v1402 = vsel %vm1338, %v1306, %v1370
      %v1403 = vsel %vm1339, %v1307, %v1371
      %v1404 = vsel %vm1340, %v1308, %v1372
      %v1405 = vsel %vm1341, %v1309, %v1373
      %v1406 = vsel %vm1342, %v1310, %v1374
      %v1407 = vsel %vm1343, %v1311, %v1375
      %v1408 = vsel %vm1344, %v1312, %v1376
      %v1409 = vsel %vm1345, %v1313, %v1377
      %v1410 = vsel %vm1346, %v1314, %v1378
      %v1411 = vsel %vm1347, %v1315, %v1379
      %v1412 = vsel %vm1348, %v1316, %v1380
      %v1413 = vsel %vm1349, %v1317, %v1381
      %v1414 = vsel %vm1350, %v1318, %v1382
      %v1415 = vsel %vm1351, %v1319, %v1383
      %v1416 = vsel %vm1352, %v1320, %v1384
      %v1417 = vsel %vm1353, %v1321, %v1385
      %v1418 = vsel %vm1354, %v1322, %v1386
      %v1419 = vsel %vm1355, %v1323, %v1387
      %v1420 = vsel %vm1356, %v1324, %v1388
      %v1421 = vsel %vm1357, %v1325, %v1389
      %v1422 = vsel %vm1358, %v1326, %v1390
      %v1423 = vsel %vm1359, %v1327, %v1391
      %v1424 = vsel %vm1360, %v1328, %v1392
      %v1425 = vsel %vm1361, %v1329, %v1393
      %v1426 = vsel %vm1362, %v1330, %v1394
      %v1427 = vsel %vm1363, %v1331, %v1395
      %v1428 = vsel %vm1364, %v1332, %v1396
      %v1429 = vpack.c.bf16 %v1405, %v1397
      %v1430 = vpack.c.bf16 %v1406, %v1398
      %v1431 = vpack.c.bf16 %v1407, %v1399
      %v1432 = vpack.c.bf16 %v1408, %v1400
      %v1433 = vpack.c.bf16 %v1409, %v1401
      %v1434 = vpack.c.bf16 %v1410, %v1402
      %v1435 = vpack.c.bf16 %v1411, %v1403
      %v1436 = vpack.c.bf16 %v1412, %v1404
      %v1437 = vpack.c.bf16 %v1421, %v1413
      %v1438 = vpack.c.bf16 %v1422, %v1414
      %v1439 = vpack.c.bf16 %v1423, %v1415
      %v1440 = vpack.c.bf16 %v1424, %v1416
      %v1441 = vpack.c.bf16 %v1425, %v1417
      %v1442 = vpack.c.bf16 %v1426, %v1418
      %v1443 = vpack.c.bf16 %v1427, %v1419
      %v1444 = vpack.c.bf16 %v1428, %v1420
      %v1461 = vunpack.c.l.b16 %v1429
      %v1462 = vunpack.c.l.b16 %v1430
      %v1463 = vunpack.c.l.b16 %v1431
      %v1464 = vunpack.c.l.b16 %v1432
      %v1465 = vunpack.c.l.b16 %v1433
      %v1466 = vunpack.c.l.b16 %v1434
      %v1467 = vunpack.c.l.b16 %v1435
      %v1468 = vunpack.c.l.b16 %v1436
      %v1469 = vunpack.c.h.b16 %v1429
      %v1470 = vunpack.c.h.b16 %v1430
      %v1471 = vunpack.c.h.b16 %v1431
      %v1472 = vunpack.c.h.b16 %v1432
      %v1473 = vunpack.c.h.b16 %v1433
      %v1474 = vunpack.c.h.b16 %v1434
      %v1475 = vunpack.c.h.b16 %v1435
      %v1476 = vunpack.c.h.b16 %v1436
      %v1477 = vunpack.c.l.b16 %v1437
      %v1478 = vunpack.c.l.b16 %v1438
      %v1479 = vunpack.c.l.b16 %v1439
      %v1480 = vunpack.c.l.b16 %v1440
      %v1481 = vunpack.c.l.b16 %v1441
      %v1482 = vunpack.c.l.b16 %v1442
      %v1483 = vunpack.c.l.b16 %v1443
      %v1484 = vunpack.c.l.b16 %v1444
      %v1485 = vunpack.c.h.b16 %v1437
      %v1486 = vunpack.c.h.b16 %v1438
      %v1487 = vunpack.c.h.b16 %v1439
      %v1488 = vunpack.c.h.b16 %v1440
      %v1489 = vunpack.c.h.b16 %v1441
      %v1490 = vunpack.c.h.b16 %v1442
      %v1491 = vunpack.c.h.b16 %v1443
      %v1492 = vunpack.c.h.b16 %v1444
      %v1493 = vpack.c.b16 %v1462, %v1461
      %v1494 = vpack.c.b16 %v1464, %v1463
      %v1495 = vpack.c.b16 %v1466, %v1465
      %v1496 = vpack.c.b16 %v1468, %v1467
      %v1497 = vpack.c.b16 %v1470, %v1469
      %v1498 = vpack.c.b16 %v1472, %v1471
      %v1499 = vpack.c.b16 %v1474, %v1473
      %v1500 = vpack.c.b16 %v1476, %v1475
      %v1501 = vpack.c.b16 %v1478, %v1477
      %v1502 = vpack.c.b16 %v1480, %v1479
      %v1503 = vpack.c.b16 %v1482, %v1481
      %v1504 = vpack.c.b16 %v1484, %v1483
      %v1505 = vpack.c.b16 %v1486, %v1485
      %v1506 = vpack.c.b16 %v1488, %v1487
      %v1507 = vpack.c.b16 %v1490, %v1489
      %v1508 = vpack.c.b16 %v1492, %v1491
      %1525 = vst [vmem:[%s143] sm:$0xff] %v1493
      %1526 = vst [vmem:[%s143 + $0x8] sm:$0xff] %v1494
      %1527 = vst [vmem:[%s143 + $0x10] sm:$0xff] %v1495
      %1528 = vst [vmem:[%s143 + $0x18] sm:$0xff] %v1496
      %1529 = vst [vmem:[%s143 + $0x20] sm:$0xff] %v1497
      %1530 = vst [vmem:[%s143 + $0x28] sm:$0xff] %v1498
      %1531 = vst [vmem:[%s143 + $0x30] sm:$0xff] %v1499
      %1532 = vst [vmem:[%s143 + $0x38] sm:$0xff] %v1500
      %1533 = vst [vmem:[%s143 + $0x40] sm:$0xff] %v1501
      %1534 = vst [vmem:[%s143 + $0x48] sm:$0xff] %v1502
      %1535 = vst [vmem:[%s143 + $0x50] sm:$0xff] %v1503
      %1536 = vst [vmem:[%s143 + $0x58] sm:$0xff] %v1504
      %1537 = vst [vmem:[%s143 + $0x60] sm:$0xff] %v1505
      %1538 = vst [vmem:[%s143 + $0x68] sm:$0xff] %v1506
      %1539 = vst [vmem:[%s143 + $0x70] sm:$0xff] %v1507
      %1540 = vst [vmem:[%s143 + $0x78] sm:$0xff] %v1508
      %p1541 = scmp.lt.s32.totalorder %s13, 1
      %s1542 = scalar_select %p1541, %s13, 1
      %s1543 = smul.addr %s1542, 32
      %s1544 = smul.addr %s1543, 4
      %s1545 = scalar_lea.vmem %s2, %s1544
      // Predicated region
      $region29: #{discriminator_forward.5} parent=27 // pred_check
        %p1546 = pneg %p78
      $region30: #{discriminator_forward.5} parent=27 // pred_check_branch
        %1548 = sbr.rel (%p1546) target = $region32
      $region31: #{discriminator_forward.5} parent=27 // pred_region
        _
      $region32: #{discriminator_forward.5} parent=27 // pred_fallthru
        _
    $region28: #{discriminator_forward.5} parent=5 // pred_fallthru
      _
    %p1549 = scmp.le.s32.totalorder 2, %s8
    // Predicated region
    $region33: #{discriminator_forward.5} parent=5 // pred_check
      %p1550 = pneg %p1549
    $region34: #{discriminator_forward.5} parent=5 // pred_check_branch
      %1552 = sbr.rel (%p1550) target = $region36
    $region35: #{discriminator_forward.5} parent=5 // pred_region
      %s1553 = ssub.s32 %s8, 2
      // Predicated region
      $region37: #{discriminator_forward.5} parent=35 // pred_check
        %p1554 = pneg %p84
      $region38: #{discriminator_forward.5} parent=35 // pred_check_branch
        %1556 = sbr.rel (%p1554) target = $region40
      $region39: #{discriminator_forward.5} parent=35 // pred_region
        %p1557 = scmp.lt.s32.totalorder %s14, 1
        %s1558 = scalar_select %p1557, %s14, 1
        %s1559 = smul.addr %s1558, 32
        %s1560 = smul.addr %s1559, 4
        %s1561 = scalar_lea.vmem %s2, %s1560
      $region40: #{discriminator_forward.5} parent=35 // pred_fallthru
        _
    $region36: #{discriminator_forward.5} parent=5 // pred_fallthru
      _
  $region6: #{discriminator_forward.5} parent=0 // loop_footer
    %s12 = sadd.s32 1, %s8
  $region7: #{discriminator_forward.5} parent=0 // loop_footer_branch
    %7 = sbr.rel target = $region3
  $region8: #{discriminator_forward.5} parent=0 // loop_exit
    _

// kernel: discriminator_forward.6
$region0: #{discriminator_forward.6}
  #allocation0 [shape = 'u32[]', space=smem, size = 0x4, offset = 0x4, fixed_abs, tag = 'smem constant byte address 0x4 - core index']
  #allocation1 [shape = 'u32[144,128]{1,0:T(1,128)}', space=vmem, size = 0x12000, scoped, tag = 'internal scratch']
  %s0 = inlined_call_operand.vmem [shape: bf16[2,512,256], index: 0, kind: input, shape index: {}]
  %s1 = inlined_call_operand.vmem [shape: bf16[64,512], index: 1, kind: input, shape index: {}]
  %s2 = inlined_call_operand.vmem [shape: bf16[2,64,256], index: 2, kind: output, shape index: {}]
  %s3 = sld [smem:[#allocation0]]
  $region41: #{discriminator_forward.6} parent=0
    _
  %s5 = ssub.s32 1, %s3
  %s6 = scalar_select 0, %s5, %s3
  loop: start=0, step=1, limit=4
  $region2: #{discriminator_forward.6} parent=0 // loop_pre_header
    _
  $region3: #{discriminator_forward.6} parent=0 // loop_header
    %s8 = sphi 0, %s12
    %p9 = scmp.ge.s32.totalorder %s8, 4
    %s18 = sphi 0, %s20
    %s21 = sphi 0, %s18
    %s22 = sphi 0, %s21
    %s38 = sphi 0, %s22
    %s42 = sphi 0, %s42
    %s44 = sphi 0, %s42
    %s45 = sphi 0, %s44
    %s59 = sphi 0, %s45
    %s65 = sphi 0, %s67
    %s68 = sphi 0, %s65
    %s69 = sphi 0, %s68
    %s85 = sphi 0, %s69
  $region4: #{discriminator_forward.6} parent=0 // loop_header_branch
    %11 = sbr.rel (%p9) target = $region8
  $region5: #{discriminator_forward.6} parent=0 // loop_body
    %s13 = ssub.s32 %s8, 1
    %s14 = ssub.s32 %s8, 2
    %s15 = sadd.s32 %s8, 1
    %s16 = ssub.s32 %s8, %s15
    %p17 = scmp.eq.s32.totalorder %s16, 0
    %s19 = sadd.s32 %s18, 1
    %s20 = scalar_select %p17, %s18, %s19
    %p23 = pneg %p17
    %p24 = scmp.eq.s32.totalorder %s8, 1
    %p25 = por %p23, %p24
    %p26 = scmp.ne.s32.totalorder %s18, %s21
    %p27 = scmp.eq.s32.totalorder %s8, 0
    %p28 = por %p26, %p27
    %p29 = scmp.ne.s32.totalorder %s18, %s21
    %p30 = scmp.eq.s32.totalorder %s13, 1
    %p31 = por %p29, %p30
    %p32 = scmp.ne.s32.totalorder %s21, %s22
    %p33 = scmp.eq.s32.totalorder %s13, 0
    %p34 = por %p32, %p33
    %p35 = scmp.ne.s32.totalorder %s21, %s22
    %p36 = scmp.eq.s32.totalorder %s14, 1
    %p37 = por %p35, %p36
    %p39 = scmp.ne.s32.totalorder %s22, %s38
    %p40 = scmp.eq.s32.totalorder %s14, 0
    %p41 = por %p39, %p40
    %s43 = sadd.s32 %s42, 1
    %p46 = scmp.eq.s32.totalorder %s8, 1
    %p47 = scmp.ne.s32.totalorder %s42, %s44
    %p48 = scmp.eq.s32.totalorder %s8, 0
    %p49 = por %p47, %p48
    %p50 = scmp.ne.s32.totalorder %s42, %s44
    %p51 = scmp.eq.s32.totalorder %s13, 1
    %p52 = por %p50, %p51
    %p53 = scmp.ne.s32.totalorder %s44, %s45
    %p54 = scmp.eq.s32.totalorder %s13, 0
    %p55 = por %p53, %p54
    %p56 = scmp.ne.s32.totalorder %s44, %s45
    %p57 = scmp.eq.s32.totalorder %s14, 1
    %p58 = por %p56, %p57
    %p60 = scmp.ne.s32.totalorder %s45, %s59
    %p61 = scmp.eq.s32.totalorder %s14, 0
    %p62 = por %p60, %p61
    %s63 = ssub.s32 %s8, %s15
    %p64 = scmp.eq.s32.totalorder %s63, 0
    %s66 = sadd.s32 %s65, 1
    %s67 = scalar_select %p64, %s65, %s66
    %p70 = pneg %p64
    %p71 = scmp.eq.s32.totalorder %s8, 1
    %p72 = por %p70, %p71
    %p73 = scmp.ne.s32.totalorder %s65, %s68
    %p74 = scmp.eq.s32.totalorder %s8, 0
    %p75 = por %p73, %p74
    %p76 = scmp.ne.s32.totalorder %s65, %s68
    %p77 = scmp.eq.s32.totalorder %s13, 1
    %p78 = por %p76, %p77
    %p79 = scmp.ne.s32.totalorder %s68, %s69
    %p80 = scmp.eq.s32.totalorder %s13, 0
    %p81 = por %p79, %p80
    %p82 = scmp.ne.s32.totalorder %s68, %s69
    %p83 = scmp.eq.s32.totalorder %s14, 1
    %p84 = por %p82, %p83
    %p86 = scmp.ne.s32.totalorder %s69, %s85
    %p87 = scmp.eq.s32.totalorder %s14, 0
    %p88 = por %p86, %p87
    %p89 = scmp.le.s32.totalorder 1, %s8
    %p90 = scmp.lt.s32.totalorder %s8, 3
    %p91 = pnand %p89, %p90
    %p92 = pneg %p91
    // Predicated region
    $region9: #{discriminator_forward.6} parent=5 // pred_check
      _
    $region10: #{discriminator_forward.6} parent=5 // pred_check_branch
      %94 = sbr.rel (%p91) target = $region12
    $region11: #{discriminator_forward.6} parent=5 // pred_region
      %s95 = ssub.s32 %s8, 1
      // Predicated region
      $region13: #{discriminator_forward.6} parent=11 // pred_check
        %p96 = pneg %p55
      $region14: #{discriminator_forward.6} parent=11 // pred_check_branch
        %98 = sbr.rel (%p96) target = $region16
      $region15: #{discriminator_forward.6} parent=11 // pred_region
        _
      $region16: #{discriminator_forward.6} parent=11 // pred_fallthru
        _
    $region12: #{discriminator_forward.6} parent=5 // pred_fallthru
      _
    %p99 = scmp.lt.s32.totalorder %s8, 2
    // Predicated region
    $region17: #{discriminator_forward.6} parent=5 // pred_check
      %p100 = pneg %p99
    $region18: #{discriminator_forward.6} parent=5 // pred_check_branch
      %102 = sbr.rel (%p100) target = $region20
    $region19: #{discriminator_forward.6} parent=5 // pred_region
      // Predicated region
      $region21: #{discriminator_forward.6} parent=19 // pred_check
        %p103 = pneg %p28
      $region22: #{discriminator_forward.6} parent=19 // pred_check_branch
        %105 = sbr.rel (%p103) target = $region24
      $region23: #{discriminator_forward.6} parent=19 // pred_region
        %p106 = scmp.lt.s32.totalorder %s8, 1
        %s107 = scalar_select %p106, %s8, 1
        %s108 = smul.addr %s107, 128
        %s109 = smul.addr %s108, 4
        %s110 = scalar_lea.vmem %s0, %s109
      $region24: #{discriminator_forward.6} parent=19 // pred_fallthru
        _
    $region20: #{discriminator_forward.6} parent=5 // pred_fallthru
      _
    %p111 = scmp.le.s32.totalorder 1, %s8
    %p112 = scmp.lt.s32.totalorder %s8, 3
    %p113 = pnand %p111, %p112
    %p114 = pneg %p113
    // Predicated region
    $region25: #{discriminator_forward.6} parent=5 // pred_check
      _
    $region26: #{discriminator_forward.6} parent=5 // pred_check_branch
      %116 = sbr.rel (%p113) target = $region28
    $region27: #{discriminator_forward.6} parent=5 // pred_region
      %s117 = ssub.s32 %s8, 1
      %p118 = scmp.lt.s32.totalorder %s13, 1
      %s119 = scalar_select %p118, %s13, 1
      %s120 = smul.addr %s119, 128
      %s121 = smul.addr %s120, 4
      %s122 = scalar_lea.vmem %s0, %s121
      %p123 = pneg %p34
      %p124 = pneg %p31
      %p125 = pneg %p55
      %p126 = pneg %p52
      %p127 = pneg %p81
      %p128 = pneg %p78
      %p129 = scmp.lt.s32.totalorder %s13, 1
      %s130 = scalar_select %p129, %s13, 1
      %s131 = smul.addr %s130, 16
      %s132 = smul.addr %s131, 4
      %s133 = scalar_lea.vmem %s2, %s132
      %p134 = scmp.lt.s32.totalorder %s13, 1
      %s135 = scalar_select %p134, %s13, 1
      %s136 = smul.addr %s135, 128
      %s137 = smul.addr %s136, 4
      %s138 = scalar_lea.vmem %s0, %s137
      %p139 = scmp.lt.s32.totalorder %s13, 1
      %s140 = scalar_select %p139, %s13, 1
      %s141 = smul.addr %s140, 16
      %s142 = smul.addr %s141, 4
      %s143 = scalar_lea.vmem %s2, %s142
      %v144 = vld [vmem:[%s1] sm:$0xff]
      %v145 = vld [vmem:[%s1 + $0x8] sm:$0xff]
      %v146 = vld [vmem:[%s1 + $0x10] sm:$0xff]
      %v147 = vld [vmem:[%s1 + $0x18] sm:$0xff]
      %v148 = vld [vmem:[%s1 + $0x20] sm:$0xff]
      %v149 = vld [vmem:[%s1 + $0x28] sm:$0xff]
      %v150 = vld [vmem:[%s1 + $0x30] sm:$0xff]
      %v151 = vld [vmem:[%s1 + $0x38] sm:$0xff]
      %v152 = vld [vmem:[%s1 + $0x40] sm:$0xff]
      %v153 = vld [vmem:[%s1 + $0x48] sm:$0xff]
      %v154 = vld [vmem:[%s1 + $0x50] sm:$0xff]
      %v155 = vld [vmem:[%s1 + $0x58] sm:$0xff]
      %v156 = vld [vmem:[%s1 + $0x60] sm:$0xff]
      %v157 = vld [vmem:[%s1 + $0x68] sm:$0xff]
      %v158 = vld [vmem:[%s1 + $0x70] sm:$0xff]
      %v159 = vld [vmem:[%s1 + $0x78] sm:$0xff]
      %v160 = vld [vmem:[%s138] sm:$0xff]
      %v161 = vld [vmem:[%s138 + $0x8] sm:$0xff]
      %v162 = vld [vmem:[%s138 + $0x10] sm:$0xff]
      %v163 = vld [vmem:[%s138 + $0x18] sm:$0xff]
      %v164 = vld [vmem:[%s138 + $0x20] sm:$0xff]
      %v165 = vld [vmem:[%s138 + $0x28] sm:$0xff]
      %v166 = vld [vmem:[%s138 + $0x30] sm:$0xff]
      %v167 = vld [vmem:[%s138 + $0x38] sm:$0xff]
      %v168 = vld [vmem:[%s138 + $0x40] sm:$0xff]
      %v169 = vld [vmem:[%s138 + $0x48] sm:$0xff]
      %v170 = vld [vmem:[%s138 + $0x50] sm:$0xff]
      %v171 = vld [vmem:[%s138 + $0x58] sm:$0xff]
      %v172 = vld [vmem:[%s138 + $0x60] sm:$0xff]
      %v173 = vld [vmem:[%s138 + $0x68] sm:$0xff]
      %v174 = vld [vmem:[%s138 + $0x70] sm:$0xff]
      %v175 = vld [vmem:[%s138 + $0x78] sm:$0xff]
      %v176 = vld [vmem:[%s138 + $0x80] sm:$0xff]
      %v177 = vld [vmem:[%s138 + $0x88] sm:$0xff]
      %v178 = vld [vmem:[%s138 + $0x90] sm:$0xff]
      %v179 = vld [vmem:[%s138 + $0x98] sm:$0xff]
      %v180 = vld [vmem:[%s138 + $0xa0] sm:$0xff]
      %v181 = vld [vmem:[%s138 + $0xa8] sm:$0xff]
      %v182 = vld [vmem:[%s138 + $0xb0] sm:$0xff]
      %v183 = vld [vmem:[%s138 + $0xb8] sm:$0xff]
      %v184 = vld [vmem:[%s138 + $0xc0] sm:$0xff]
      %v185 = vld [vmem:[%s138 + $0xc8] sm:$0xff]
      %v186 = vld [vmem:[%s138 + $0xd0] sm:$0xff]
      %v187 = vld [vmem:[%s138 + $0xd8] sm:$0xff]
      %v188 = vld [vmem:[%s138 + $0xe0] sm:$0xff]
      %v189 = vld [vmem:[%s138 + $0xe8] sm:$0xff]
      %v190 = vld [vmem:[%s138 + $0xf0] sm:$0xff]
      %v191 = vld [vmem:[%s138 + $0xf8] sm:$0xff]
      %v192 = vld [vmem:[%s138 + $0x100] sm:$0xff]
      %v193 = vld [vmem:[%s138 + $0x108] sm:$0xff]
      %v194 = vld [vmem:[%s138 + $0x110] sm:$0xff]
      %v195 = vld [vmem:[%s138 + $0x118] sm:$0xff]
      %v196 = vld [vmem:[%s138 + $0x120] sm:$0xff]
      %v197 = vld [vmem:[%s138 + $0x128] sm:$0xff]
      %v198 = vld [vmem:[%s138 + $0x130] sm:$0xff]
      %v199 = vld [vmem:[%s138 + $0x138] sm:$0xff]
      %v200 = vld [vmem:[%s138 + $0x140] sm:$0xff]
      %v201 = vld [vmem:[%s138 + $0x148] sm:$0xff]
      %v202 = vld [vmem:[%s138 + $0x150] sm:$0xff]
      %v203 = vld [vmem:[%s138 + $0x158] sm:$0xff]
      %v204 = vld [vmem:[%s138 + $0x160] sm:$0xff]
      %v205 = vld [vmem:[%s138 + $0x168] sm:$0xff]
      %v206 = vld [vmem:[%s138 + $0x170] sm:$0xff]
      %v207 = vld [vmem:[%s138 + $0x178] sm:$0xff]
      %v208 = vld [vmem:[%s138 + $0x180] sm:$0xff]
      %v209 = vld [vmem:[%s138 + $0x188] sm:$0xff]
      %v210 = vld [vmem:[%s138 + $0x190] sm:$0xff]
      %v211 = vld [vmem:[%s138 + $0x198] sm:$0xff]
      %v212 = vld [vmem:[%s138 + $0x1a0] sm:$0xff]
      %v213 = vld [vmem:[%s138 + $0x1a8] sm:$0xff]
      %v214 = vld [vmem:[%s138 + $0x1b0] sm:$0xff]
      %v215 = vld [vmem:[%s138 + $0x1b8] sm:$0xff]
      %v216 = vld [vmem:[%s138 + $0x1c0] sm:$0xff]
      %v217 = vld [vmem:[%s138 + $0x1c8] sm:$0xff]
      %v218 = vld [vmem:[%s138 + $0x1d0] sm:$0xff]
      %v219 = vld [vmem:[%s138 + $0x1d8] sm:$0xff]
      %v220 = vld [vmem:[%s138 + $0x1e0] sm:$0xff]
      %v221 = vld [vmem:[%s138 + $0x1e8] sm:$0xff]
      %v222 = vld [vmem:[%s138 + $0x1f0] sm:$0xff]
      %v223 = vld [vmem:[%s138 + $0x1f8] sm:$0xff]
      %v240 = vunpack.c.l.b16 %v144
      %v241 = vunpack.c.h.b16 %v144
      %v242 = vunpack.c.l.b16 %v145
      %v243 = vunpack.c.h.b16 %v145
      %v244 = vunpack.c.l.b16 %v146
      %v245 = vunpack.c.h.b16 %v146
      %v246 = vunpack.c.l.b16 %v147
      %v247 = vunpack.c.h.b16 %v147
      %v248 = vunpack.c.l.b16 %v148
      %v249 = vunpack.c.h.b16 %v148
      %v250 = vunpack.c.l.b16 %v149
      %v251 = vunpack.c.h.b16 %v149
      %v252 = vunpack.c.l.b16 %v150
      %v253 = vunpack.c.h.b16 %v150
      %v254 = vunpack.c.l.b16 %v151
      %v255 = vunpack.c.h.b16 %v151
      %v256 = vunpack.c.l.b16 %v152
      %v257 = vunpack.c.h.b16 %v152
      %v258 = vunpack.c.l.b16 %v153
      %v259 = vunpack.c.h.b16 %v153
      %v260 = vunpack.c.l.b16 %v154
      %v261 = vunpack.c.h.b16 %v154
      %v262 = vunpack.c.l.b16 %v155
      %v263 = vunpack.c.h.b16 %v155
      %v264 = vunpack.c.l.b16 %v156
      %v265 = vunpack.c.h.b16 %v156
      %v266 = vunpack.c.l.b16 %v157
      %v267 = vunpack.c.h.b16 %v157
      %v268 = vunpack.c.l.b16 %v158
      %v269 = vunpack.c.h.b16 %v158
      %v270 = vunpack.c.l.b16 %v159
      %v271 = vunpack.c.h.b16 %v159
      %v272 = vpack.c.b16 %v244, %v240
      %v273 = vpack.c.b16 %v245, %v241
      %v274 = vpack.c.b16 %v246, %v242
      %v275 = vpack.c.b16 %v247, %v243
      %v276 = vpack.c.b16 %v252, %v248
      %v277 = vpack.c.b16 %v253, %v249
      %v278 = vpack.c.b16 %v254, %v250
      %v279 = vpack.c.b16 %v255, %v251
      %v280 = vpack.c.b16 %v260, %v256
      %v281 = vpack.c.b16 %v261, %v257
      %v282 = vpack.c.b16 %v262, %v258
      %v283 = vpack.c.b16 %v263, %v259
      %v284 = vpack.c.b16 %v268, %v264
      %v285 = vpack.c.b16 %v269, %v265
      %v286 = vpack.c.b16 %v270, %v266
      %v287 = vpack.c.b16 %v271, %v267
      %v368 = vunpack.c.l.b16 %v160
      %v369 = vunpack.c.h.b16 %v160
      %v370 = vunpack.c.l.b16 %v161
      %v371 = vunpack.c.h.b16 %v161
      %v372 = vunpack.c.l.b16 %v162
      %v373 = vunpack.c.h.b16 %v162
      %v374 = vunpack.c.l.b16 %v163
      %v375 = vunpack.c.h.b16 %v163
      %v376 = vunpack.c.l.b16 %v164
      %v377 = vunpack.c.h.b16 %v164
      %v378 = vunpack.c.l.b16 %v165
      %v379 = vunpack.c.h.b16 %v165
      %v380 = vunpack.c.l.b16 %v166
      %v381 = vunpack.c.h.b16 %v166
      %v382 = vunpack.c.l.b16 %v167
      %v383 = vunpack.c.h.b16 %v167
      %v384 = vunpack.c.l.b16 %v168
      %v385 = vunpack.c.h.b16 %v168
      %v386 = vunpack.c.l.b16 %v169
      %v387 = vunpack.c.h.b16 %v169
      %v388 = vunpack.c.l.b16 %v170
      %v389 = vunpack.c.h.b16 %v170
      %v390 = vunpack.c.l.b16 %v171
      %v391 = vunpack.c.h.b16 %v171
      %v392 = vunpack.c.l.b16 %v172
      %v393 = vunpack.c.h.b16 %v172
      %v394 = vunpack.c.l.b16 %v173
      %v395 = vunpack.c.h.b16 %v173
      %v396 = vunpack.c.l.b16 %v174
      %v397 = vunpack.c.h.b16 %v174
      %v398 = vunpack.c.l.b16 %v175
      %v399 = vunpack.c.h.b16 %v175
      %v400 = vunpack.c.l.b16 %v176
      %v401 = vunpack.c.h.b16 %v176
      %v402 = vunpack.c.l.b16 %v177
      %v403 = vunpack.c.h.b16 %v177
      %v404 = vunpack.c.l.b16 %v178
      %v405 = vunpack.c.h.b16 %v178
      %v406 = vunpack.c.l.b16 %v179
      %v407 = vunpack.c.h.b16 %v179
      %v408 = vunpack.c.l.b16 %v180
      %v409 = vunpack.c.h.b16 %v180
      %v410 = vunpack.c.l.b16 %v181
      %v411 = vunpack.c.h.b16 %v181
      %v412 = vunpack.c.l.b16 %v182
      %v413 = vunpack.c.h.b16 %v182
      %v414 = vunpack.c.l.b16 %v183
      %v415 = vunpack.c.h.b16 %v183
      %v416 = vunpack.c.l.b16 %v184
      %v417 = vunpack.c.h.b16 %v184
      %v418 = vunpack.c.l.b16 %v185
      %v419 = vunpack.c.h.b16 %v185
      %v420 = vunpack.c.l.b16 %v186
      %v421 = vunpack.c.h.b16 %v186
      %v422 = vunpack.c.l.b16 %v187
      %v423 = vunpack.c.h.b16 %v187
      %v424 = vunpack.c.l.b16 %v188
      %v425 = vunpack.c.h.b16 %v188
      %v426 = vunpack.c.l.b16 %v189
      %v427 = vunpack.c.h.b16 %v189
      %v428 = vunpack.c.l.b16 %v190
      %v429 = vunpack.c.h.b16 %v190
      %v430 = vunpack.c.l.b16 %v191
      %v431 = vunpack.c.h.b16 %v191
      %v432 = vunpack.c.l.b16 %v192
      %v433 = vunpack.c.h.b16 %v192
      %v434 = vunpack.c.l.b16 %v193
      %v435 = vunpack.c.h.b16 %v193
      %v436 = vunpack.c.l.b16 %v194
      %v437 = vunpack.c.h.b16 %v194
      %v438 = vunpack.c.l.b16 %v195
      %v439 = vunpack.c.h.b16 %v195
      %v440 = vunpack.c.l.b16 %v196
      %v441 = vunpack.c.h.b16 %v196
      %v442 = vunpack.c.l.b16 %v197
      %v443 = vunpack.c.h.b16 %v197
      %v444 = vunpack.c.l.b16 %v198
      %v445 = vunpack.c.h.b16 %v198
      %v446 = vunpack.c.l.b16 %v199
      %v447 = vunpack.c.h.b16 %v199
      %v448 = vunpack.c.l.b16 %v200
      %v449 = vunpack.c.h.b16 %v200
      %v450 = vunpack.c.l.b16 %v201
      %v451 = vunpack.c.h.b16 %v201
      %v452 = vunpack.c.l.b16 %v202
      %v453 = vunpack.c.h.b16 %v202
      %v454 = vunpack.c.l.b16 %v203
      %v455 = vunpack.c.h.b16 %v203
      %v456 = vunpack.c.l.b16 %v204
      %v457 = vunpack.c.h.b16 %v204
      %v458 = vunpack.c.l.b16 %v205
      %v459 = vunpack.c.h.b16 %v205
      %v460 = vunpack.c.l.b16 %v206
      %v461 = vunpack.c.h.b16 %v206
      %v462 = vunpack.c.l.b16 %v207
      %v463 = vunpack.c.h.b16 %v207
      %v464 = vunpack.c.l.b16 %v208
      %v465 = vunpack.c.h.b16 %v208
      %v466 = vunpack.c.l.b16 %v209
      %v467 = vunpack.c.h.b16 %v209
      %v468 = vunpack.c.l.b16 %v210
      %v469 = vunpack.c.h.b16 %v210
      %v470 = vunpack.c.l.b16 %v211
      %v471 = vunpack.c.h.b16 %v211
      %v472 = vunpack.c.l.b16 %v212
      %v473 = vunpack.c.h.b16 %v212
      %v474 = vunpack.c.l.b16 %v213
      %v475 = vunpack.c.h.b16 %v213
      %v476 = vunpack.c.l.b16 %v214
      %v477 = vunpack.c.h.b16 %v214
      %v478 = vunpack.c.l.b16 %v215
      %v479 = vunpack.c.h.b16 %v215
      %v480 = vunpack.c.l.b16 %v216
      %v481 = vunpack.c.h.b16 %v216
      %v482 = vunpack.c.l.b16 %v217
      %v483 = vunpack.c.h.b16 %v217
      %v484 = vunpack.c.l.b16 %v218
      %v485 = vunpack.c.h.b16 %v218
      %v486 = vunpack.c.l.b16 %v219
      %v487 = vunpack.c.h.b16 %v219
      %v488 = vunpack.c.l.b16 %v220
      %v489 = vunpack.c.h.b16 %v220
      %v490 = vunpack.c.l.b16 %v221
      %v491 = vunpack.c.h.b16 %v221
      %v492 = vunpack.c.l.b16 %v222
      %v493 = vunpack.c.h.b16 %v222
      %v494 = vunpack.c.l.b16 %v223
      %v495 = vunpack.c.h.b16 %v223
      %v496 = vpack.c.b16 %v370, %v368
      %v497 = vpack.c.b16 %v371, %v369
      %v498 = vpack.c.b16 %v374, %v372
      %v499 = vpack.c.b16 %v375, %v373
      %v500 = vpack.c.b16 %v378, %v376
      %v501 = vpack.c.b16 %v379, %v377
      %v502 = vpack.c.b16 %v382, %v380
      %v503 = vpack.c.b16 %v383, %v381
      %v504 = vpack.c.b16 %v386, %v384
      %v505 = vpack.c.b16 %v387, %v385
      %v506 = vpack.c.b16 %v390, %v388
      %v507 = vpack.c.b16 %v391, %v389
      %v508 = vpack.c.b16 %v394, %v392
      %v509 = vpack.c.b16 %v395, %v393
      %v510 = vpack.c.b16 %v398, %v396
      %v511 = vpack.c.b16 %v399, %v397
      %v512 = vpack.c.b16 %v402, %v400
      %v513 = vpack.c.b16 %v403, %v401
      %v514 = vpack.c.b16 %v406, %v404
      %v515 = vpack.c.b16 %v407, %v405
      %v516 = vpack.c.b16 %v410, %v408
      %v517 = vpack.c.b16 %v411, %v409
      %v518 = vpack.c.b16 %v414, %v412
      %v519 = vpack.c.b16 %v415, %v413
      %v520 = vpack.c.b16 %v418, %v416
      %v521 = vpack.c.b16 %v419, %v417
      %v522 = vpack.c.b16 %v422, %v420
      %v523 = vpack.c.b16 %v423, %v421
      %v524 = vpack.c.b16 %v426, %v424
      %v525 = vpack.c.b16 %v427, %v425
      %v526 = vpack.c.b16 %v430, %v428
      %v527 = vpack.c.b16 %v431, %v429
      %v528 = vpack.c.b16 %v434, %v432
      %v529 = vpack.c.b16 %v435, %v433
      %v530 = vpack.c.b16 %v438, %v436
      %v531 = vpack.c.b16 %v439, %v437
      %v532 = vpack.c.b16 %v442, %v440
      %v533 = vpack.c.b16 %v443, %v441
      %v534 = vpack.c.b16 %v446, %v444
      %v535 = vpack.c.b16 %v447, %v445
      %v536 = vpack.c.b16 %v450, %v448
      %v537 = vpack.c.b16 %v451, %v449
      %v538 = vpack.c.b16 %v454, %v452
      %v539 = vpack.c.b16 %v455, %v453
      %v540 = vpack.c.b16 %v458, %v456
      %v541 = vpack.c.b16 %v459, %v457
      %v542 = vpack.c.b16 %v462, %v460
      %v543 = vpack.c.b16 %v463, %v461
      %v544 = vpack.c.b16 %v466, %v464
      %v545 = vpack.c.b16 %v467, %v465
      %v546 = vpack.c.b16 %v470, %v468
      %v547 = vpack.c.b16 %v471, %v469
      %v548 = vpack.c.b16 %v474, %v472
      %v549 = vpack.c.b16 %v475, %v473
      %v550 = vpack.c.b16 %v478, %v476
      %v551 = vpack.c.b16 %v479, %v477
      %v552 = vpack.c.b16 %v482, %v480
      %v553 = vpack.c.b16 %v483, %v481
      %v554 = vpack.c.b16 %v486, %v484
      %v555 = vpack.c.b16 %v487, %v485
      %v556 = vpack.c.b16 %v490, %v488
      %v557 = vpack.c.b16 %v491, %v489
      %v558 = vpack.c.b16 %v494, %v492
      %v559 = vpack.c.b16 %v495, %v493
      %624 = vmatprep.subr.bf16.mxu0 %v511
      %625 = vmatpush1.bf16.msra.mxu0 %v510
      %626 = vmatprep.subr.bf16.mxu0 %v509
      %627 = vmatpush1.bf16.msra.mxu0 %v508
      %628 = vmatprep.subr.bf16.mxu0 %v507
      %629 = vmatpush1.bf16.msra.mxu0 %v506
      %630 = vmatprep.subr.bf16.mxu0 %v505
      %631 = vmatpush1.bf16.msra.mxu0 %v504
      %632 = vmatprep.subr.bf16.mxu0 %v503
      %633 = vmatpush1.bf16.msra.mxu0 %v502
      %634 = vmatprep.subr.bf16.mxu0 %v501
      %635 = vmatpush1.bf16.msra.mxu0 %v500
      %636 = vmatprep.subr.bf16.mxu0 %v499
      %637 = vmatpush1.bf16.msra.mxu0 %v498
      %638 = vmatprep.subr.bf16.mxu0 %v497
      %639 = vmatpush1.bf16.msra.mxu0 %v496
      %640 = vmatprep.subr.bf16.mxu0 %v527
      %641 = vmatpush2.bf16.msra.mxu0 %v526
      %642 = vmatprep.subr.bf16.mxu0 %v525
      %643 = vmatpush2.bf16.msra.mxu0 %v524
      %644 = vmatprep.subr.bf16.mxu0 %v523
      %645 = vmatpush2.bf16.msra.mxu0 %v522
      %646 = vmatprep.subr.bf16.mxu0 %v521
      %647 = vmatpush2.bf16.msra.mxu0 %v520
      %648 = vmatprep.subr.bf16.mxu0 %v519
      %649 = vmatpush2.bf16.msra.mxu0 %v518
      %650 = vmatprep.subr.bf16.mxu0 %v517
      %651 = vmatpush2.bf16.msra.mxu0 %v516
      %652 = vmatprep.subr.bf16.mxu0 %v515
      %653 = vmatpush2.bf16.msra.mxu0 %v514
      %654 = vmatprep.subr.bf16.mxu0 %v513
      %655 = vmatpush2.bf16.msra.mxu0 %v512
      %656 = vmatprep.mubr.bf16.mxu0 %v273
      %657 = vmatmul.mubr.bf16.gmra.mxu0 %v272
      %v658 = vpop.f32.mrf.mxu0
      %v659 = vadd.f32 0.0, %v658
      %v660 = vpop.f32.mrf.mxu0
      %v661 = vadd.f32 0.0, %v660
      %v662 = vpop.f32.mrf.mxu0
      %v663 = vadd.f32 0.0, %v662
      %v664 = vpop.f32.mrf.mxu0
      %v665 = vadd.f32 0.0, %v664
      %666 = vmatprep.mubr.bf16.mxu0 %v277
      %667 = vmatmul.mubr.bf16.gmra.mxu0 %v276
      %v668 = vpop.f32.mrf.mxu0
      %v669 = vadd.f32 0.0, %v668
      %v670 = vpop.f32.mrf.mxu0
      %v671 = vadd.f32 0.0, %v670
      %v672 = vpop.f32.mrf.mxu0
      %v673 = vadd.f32 0.0, %v672
      %v674 = vpop.f32.mrf.mxu0
      %v675 = vadd.f32 0.0, %v674
      %676 = vmatprep.mubr.bf16.mxu0 %v281
      %677 = vmatmul.mubr.bf16.gmra.mxu0 %v280
      %v678 = vpop.f32.mrf.mxu0
      %v679 = vadd.f32 0.0, %v678
      %v680 = vpop.f32.mrf.mxu0
      %v681 = vadd.f32 0.0, %v680
      %v682 = vpop.f32.mrf.mxu0
      %v683 = vadd.f32 0.0, %v682
      %v684 = vpop.f32.mrf.mxu0
      %v685 = vadd.f32 0.0, %v684
      %686 = vmatprep.mubr.bf16.mxu0 %v285
      %687 = vmatmul.mubr.bf16.gmra.mxu0 %v284
      %v688 = vpop.f32.mrf.mxu0
      %v689 = vadd.f32 0.0, %v688
      %v690 = vpop.f32.mrf.mxu0
      %v691 = vadd.f32 0.0, %v690
      %v692 = vpop.f32.mrf.mxu0
      %v693 = vadd.f32 0.0, %v692
      %v694 = vpop.f32.mrf.mxu0
      %v695 = vadd.f32 0.0, %v694
      %696 = vdwg.mxu0
      %697 = vmatprep.subr.bf16.mxu0 %v543
      %698 = vmatpush1.bf16.msra.mxu0 %v542
      %699 = vmatprep.subr.bf16.mxu0 %v541
      %700 = vmatpush1.bf16.msra.mxu0 %v540
      %701 = vmatprep.subr.bf16.mxu0 %v539
      %702 = vmatpush1.bf16.msra.mxu0 %v538
      %703 = vmatprep.subr.bf16.mxu0 %v537
      %704 = vmatpush1.bf16.msra.mxu0 %v536
      %705 = vmatprep.subr.bf16.mxu0 %v535
      %706 = vmatpush1.bf16.msra.mxu0 %v534
      %707 = vmatprep.subr.bf16.mxu0 %v533
      %708 = vmatpush1.bf16.msra.mxu0 %v532
      %709 = vmatprep.subr.bf16.mxu0 %v531
      %710 = vmatpush1.bf16.msra.mxu0 %v530
      %711 = vmatprep.subr.bf16.mxu0 %v529
      %712 = vmatpush1.bf16.msra.mxu0 %v528
      %713 = vmatprep.subr.bf16.mxu0 %v559
      %714 = vmatpush2.bf16.msra.mxu0 %v558
      %715 = vmatprep.subr.bf16.mxu0 %v557
      %716 = vmatpush2.bf16.msra.mxu0 %v556
      %717 = vmatprep.subr.bf16.mxu0 %v555
      %718 = vmatpush2.bf16.msra.mxu0 %v554
      %719 = vmatprep.subr.bf16.mxu0 %v553
      %720 = vmatpush2.bf16.msra.mxu0 %v552
      %721 = vmatprep.subr.bf16.mxu0 %v551
      %722 = vmatpush2.bf16.msra.mxu0 %v550
      %723 = vmatprep.subr.bf16.mxu0 %v549
      %724 = vmatpush2.bf16.msra.mxu0 %v548
      %725 = vmatprep.subr.bf16.mxu0 %v547
      %726 = vmatpush2.bf16.msra.mxu0 %v546
      %727 = vmatprep.subr.bf16.mxu0 %v545
      %728 = vmatpush2.bf16.msra.mxu0 %v544
      %729 = vmatprep.mubr.bf16.mxu0 %v275
      %730 = vmatmul.mubr.bf16.gmra.mxu0 %v274
      %v731 = vpop.f32.mrf.mxu0
      %v732 = vadd.f32 %v659, %v731
      %v733 = vpop.f32.mrf.mxu0
      %v734 = vadd.f32 %v661, %v733
      %v735 = vpop.f32.mrf.mxu0
      %v736 = vadd.f32 %v663, %v735
      %v737 = vpop.f32.mrf.mxu0
      %v738 = vadd.f32 %v665, %v737
      %739 = vmatprep.mubr.bf16.mxu0 %v279
      %740 = vmatmul.mubr.bf16.gmra.mxu0 %v278
      %v741 = vpop.f32.mrf.mxu0
      %v742 = vadd.f32 %v669, %v741
      %v743 = vpop.f32.mrf.mxu0
      %v744 = vadd.f32 %v671, %v743
      %v745 = vpop.f32.mrf.mxu0
      %v746 = vadd.f32 %v673, %v745
      %v747 = vpop.f32.mrf.mxu0
      %v748 = vadd.f32 %v675, %v747
      %749 = vmatprep.mubr.bf16.mxu0 %v283
      %750 = vmatmul.mubr.bf16.gmra.mxu0 %v282
      %v751 = vpop.f32.mrf.mxu0
      %v752 = vadd.f32 %v679, %v751
      %v753 = vpop.f32.mrf.mxu0
      %v754 = vadd.f32 %v681, %v753
      %v755 = vpop.f32.mrf.mxu0
      %v756 = vadd.f32 %v683, %v755
      %v757 = vpop.f32.mrf.mxu0
      %v758 = vadd.f32 %v685, %v757
      %759 = vmatprep.mubr.bf16.mxu0 %v287
      %760 = vmatmul.mubr.bf16.gmra.mxu0 %v286
      %v761 = vpop.f32.mrf.mxu0
      %v762 = vadd.f32 %v689, %v761
      %v763 = vpop.f32.mrf.mxu0
      %v764 = vadd.f32 %v691, %v763
      %v765 = vpop.f32.mrf.mxu0
      %v766 = vadd.f32 %v693, %v765
      %v767 = vpop.f32.mrf.mxu0
      %v768 = vadd.f32 %v695, %v767
      %769 = vdwg.mxu0
      %v770 = vadd.f32 %v732, %v734
      %771 = vadd.xlane.f32.xlu0 %v770
      %v772 = vpop.xlane.xlu0 %771
      %v773 = vadd.f32 %v736, %v738
      %774 = vadd.xlane.f32.xlu0 %v773
      %v775 = vpop.xlane.xlu0 %774
      %v776 = vadd.f32 %v742, %v744
      %777 = vadd.xlane.f32.xlu0 %v776
      %v778 = vpop.xlane.xlu0 %777
      %v779 = vadd.f32 %v746, %v748
      %780 = vadd.xlane.f32.xlu0 %v779
      %v781 = vpop.xlane.xlu0 %780
      %v782 = vadd.f32 %v752, %v754
      %783 = vadd.xlane.f32.xlu0 %v782
      %v784 = vpop.xlane.xlu0 %783
      %v785 = vadd.f32 %v756, %v758
      %786 = vadd.xlane.f32.xlu0 %v785
      %v787 = vpop.xlane.xlu0 %786
      %v788 = vadd.f32 %v762, %v764
      %789 = vadd.xlane.f32.xlu0 %v788
      %v790 = vpop.xlane.xlu0 %789
      %v791 = vadd.f32 %v766, %v768
      %792 = vadd.xlane.f32.xlu0 %v791
      %v793 = vpop.xlane.xlu0 %792
      %v794 = vrcp.pop 256.0
      %v795 = vmul.f32 %v772, %v794
      %v796 = vmul.f32 %v775, %v794
      %v797 = vmul.f32 %v778, %v794
      %v798 = vmul.f32 %v781, %v794
      %v799 = vmul.f32 %v784, %v794
      %v800 = vmul.f32 %v787, %v794
      %v801 = vmul.f32 %v790, %v794
      %v802 = vmul.f32 %v793, %v794
      %v803 = vsub.f32 %v732, %v795
      %v804 = vsub.f32 %v734, %v795
      %v805 = vsub.f32 %v736, %v796
      %v806 = vsub.f32 %v738, %v796
      %v807 = vsub.f32 %v742, %v797
      %v808 = vsub.f32 %v744, %v797
      %v809 = vsub.f32 %v746, %v798
      %v810 = vsub.f32 %v748, %v798
      %v811 = vsub.f32 %v752, %v799
      %v812 = vsub.f32 %v754, %v799
      %v813 = vsub.f32 %v756, %v800
      %v814 = vsub.f32 %v758, %v800
      %v815 = vsub.f32 %v762, %v801
      %v816 = vsub.f32 %v764, %v801
      %v817 = vsub.f32 %v766, %v802
      %v818 = vsub.f32 %v768, %v802
      %v819 = vmul.f32 %v803, %v803
      %v820 = vmul.f32 %v804, %v804
      %v821 = vmul.f32 %v805, %v805
      %v822 = vmul.f32 %v806, %v806
      %v823 = vmul.f32 %v807, %v807
      %v824 = vmul.f32 %v808, %v808
      %v825 = vmul.f32 %v809, %v809
      %v826 = vmul.f32 %v810, %v810
      %v827 = vmul.f32 %v811, %v811
      %v828 = vmul.f32 %v812, %v812
      %v829 = vmul.f32 %v813, %v813
      %v830 = vmul.f32 %v814, %v814
      %v831 = vmul.f32 %v815, %v815
      %v832 = vmul.f32 %v816, %v816
      %v833 = vmul.f32 %v817, %v817
      %v834 = vmul.f32 %v818, %v818
      %v835 = vadd.f32 %v819, %v820
      %836 = vadd.xlane.f32.xlu0 %v835
      %v837 = vpop.xlane.xlu0 %836
      %v838 = vadd.f32 %v821, %v822
      %839 = vadd.xlane.f32.xlu0 %v838
      %v840 = vpop.xlane.xlu0 %839
      %v841 = vadd.f32 %v823, %v824
      %842 = vadd.xlane.f32.xlu0 %v841
      %v843 = vpop.xlane.xlu0 %842
      %v844 = vadd.f32 %v825, %v826
      %845 = vadd.xlane.f32.xlu0 %v844
      %v846 = vpop.xlane.xlu0 %845
      %v847 = vadd.f32 %v827, %v828
      %848 = vadd.xlane.f32.xlu0 %v847
      %v849 = vpop.xlane.xlu0 %848
      %v850 = vadd.f32 %v829, %v830
      %851 = vadd.xlane.f32.xlu0 %v850
      %v852 = vpop.xlane.xlu0 %851
      %v853 = vadd.f32 %v831, %v832
      %854 = vadd.xlane.f32.xlu0 %v853
      %v855 = vpop.xlane.xlu0 %854
      %v856 = vadd.f32 %v833, %v834
      %857 = vadd.xlane.f32.xlu0 %v856
      %v858 = vpop.xlane.xlu0 %857
      %v859 = vmul.f32 %v837, %v794
      %v860 = vmul.f32 %v840, %v794
      %v861 = vmul.f32 %v843, %v794
      %v862 = vmul.f32 %v846, %v794
      %v863 = vmul.f32 %v849, %v794
      %v864 = vmul.f32 %v852, %v794
      %v865 = vmul.f32 %v855, %v794
      %v866 = vmul.f32 %v858, %v794
      %v867 = vadd.f32 %v859, 1e-05
      %v868 = vadd.f32 %v860, 1e-05
      %v869 = vadd.f32 %v861, 1e-05
      %v870 = vadd.f32 %v862, 1e-05
      %v871 = vadd.f32 %v863, 1e-05
      %v872 = vadd.f32 %v864, 1e-05
      %v873 = vadd.f32 %v865, 1e-05
      %v874 = vadd.f32 %v866, 1e-05
      %v875 = vrsqrt.pop %v867
      %v876 = vrsqrt.pop %v868
      %v877 = vrsqrt.pop %v869
      %v878 = vrsqrt.pop %v870
      %v879 = vrsqrt.pop %v871
      %v880 = vrsqrt.pop %v872
      %v881 = vrsqrt.pop %v873
      %v882 = vrsqrt.pop %v874
      %v883 = vmul.f32 %v803, %v875
      %v884 = vmul.f32 %v804, %v875
      %v885 = vmul.f32 %v805, %v876
      %v886 = vmul.f32 %v806, %v876
      %v887 = vmul.f32 %v807, %v877
      %v888 = vmul.f32 %v808, %v877
      %v889 = vmul.f32 %v809, %v878
      %v890 = vmul.f32 %v810, %v878
      %v891 = vmul.f32 %v811, %v879
      %v892 = vmul.f32 %v812, %v879
      %v893 = vmul.f32 %v813, %v880
      %v894 = vmul.f32 %v814, %v880
      %v895 = vmul.f32 %v815, %v881
      %v896 = vmul.f32 %v816, %v881
      %v897 = vmul.f32 %v817, %v882
      %v898 = vmul.f32 %v818, %v882
      %vm899 = vcmp.ge.f32.partialorder %v883, 0.0
      %vm900 = vcmp.ge.f32.partialorder %v884, 0.0
      %vm901 = vcmp.ge.f32.partialorder %v885, 0.0
      %vm902 = vcmp.ge.f32.partialorder %v886, 0.0
      %vm903 = vcmp.ge.f32.partialorder %v887, 0.0
      %vm904 = vcmp.ge.f32.partialorder %v888, 0.0
      %vm905 = vcmp.ge.f32.partialorder %v889, 0.0
      %vm906 = vcmp.ge.f32.partialorder %v890, 0.0
      %vm907 = vcmp.ge.f32.partialorder %v891, 0.0
      %vm908 = vcmp.ge.f32.partialorder %v892, 0.0
      %vm909 = vcmp.ge.f32.partialorder %v893, 0.0
      %vm910 = vcmp.ge.f32.partialorder %v894, 0.0
      %vm911 = vcmp.ge.f32.partialorder %v895, 0.0
      %vm912 = vcmp.ge.f32.partialorder %v896, 0.0
      %vm913 = vcmp.ge.f32.partialorder %v897, 0.0
      %vm914 = vcmp.ge.f32.partialorder %v898, 0.0
      %v915 = vmul.f32 %v883, 0.2
      %v916 = vmul.f32 %v884, 0.2
      %v917 = vmul.f32 %v885, 0.2
      %v918 = vmul.f32 %v886, 0.2
      %v919 = vmul.f32 %v887, 0.2
      %v920 = vmul.f32 %v888, 0.2
      %v921 = vmul.f32 %v889, 0.2
      %v922 = vmul.f32 %v890, 0.2
      %v923 = vmul.f32 %v891, 0.2
      %v924 = vmul.f32 %v892, 0.2
      %v925 = vmul.f32 %v893, 0.2
      %v926 = vmul.f32 %v894, 0.2
      %v927 = vmul.f32 %v895, 0.2
      %v928 = vmul.f32 %v896, 0.2
      %v929 = vmul.f32 %v897, 0.2
      %v930 = vmul.f32 %v898, 0.2
      %v931 = vsel %vm899, %v883, %v915
      %v932 = vsel %vm900, %v884, %v916
      %v933 = vsel %vm901, %v885, %v917
      %v934 = vsel %vm902, %v886, %v918
      %v935 = vsel %vm903, %v887, %v919
      %v936 = vsel %vm904, %v888, %v920
      %v937 = vsel %vm905, %v889, %v921
      %v938 = vsel %vm906, %v890, %v922
      %v939 = vsel %vm907, %v891, %v923
      %v940 = vsel %vm908, %v892, %v924
      %v941 = vsel %vm909, %v893, %v925
      %v942 = vsel %vm910, %v894, %v926
      %v943 = vsel %vm911, %v895, %v927
      %v944 = vsel %vm912, %v896, %v928
      %v945 = vsel %vm913, %v897, %v929
      %v946 = vsel %vm914, %v898, %v930
      %v947 = vpack.c.bf16 %v933, %v931
      %v948 = vpack.c.bf16 %v934, %v932
      %v949 = vpack.c.bf16 %v937, %v935
      %v950 = vpack.c.bf16 %v938, %v936
      %v951 = vpack.c.bf16 %v941, %v939
      %v952 = vpack.c.bf16 %v942, %v940
      %v953 = vpack.c.bf16 %v945, %v943
      %v954 = vpack.c.bf16 %v946, %v944
      %v963 = vunpack.c.l.b16 %v947
      %v964 = vunpack.c.l.b16 %v948
      %v965 = vunpack.c.h.b16 %v947
      %v966 = vunpack.c.h.b16 %v948
      %v967 = vunpack.c.l.b16 %v949
      %v968 = vunpack.c.l.b16 %v950
      %v969 = vunpack.c.h.b16 %v949
      %v970 = vunpack.c.h.b16 %v950
      %v971 = vunpack.c.l.b16 %v951
      %v972 = vunpack.c.l.b16 %v952
      %v973 = vunpack.c.h.b16 %v951
      %v974 = vunpack.c.h.b16 %v952
      %v975 = vunpack.c.l.b16 %v953
      %v976 = vunpack.c.l.b16 %v954
      %v977 = vunpack.c.h.b16 %v953
      %v978 = vunpack.c.h.b16 %v954
      %v979 = vpack.c.b16 %v964, %v963
      %v980 = vpack.c.b16 %v966, %v965
      %v981 = vpack.c.b16 %v968, %v967
      %v982 = vpack.c.b16 %v970, %v969
      %v983 = vpack.c.b16 %v972, %v971
      %v984 = vpack.c.b16 %v974, %v973
      %v985 = vpack.c.b16 %v976, %v975
      %v986 = vpack.c.b16 %v978, %v977
      %995 = vst [vmem:[%s143] sm:$0xff] %v979
      %996 = vst [vmem:[%s143 + $0x8] sm:$0xff] %v980
      %997 = vst [vmem:[%s143 + $0x10] sm:$0xff] %v981
      %998 = vst [vmem:[%s143 + $0x18] sm:$0xff] %v982
      %999 = vst [vmem:[%s143 + $0x20] sm:$0xff] %v983
      %1000 = vst [vmem:[%s143 + $0x28] sm:$0xff] %v984
      %1001 = vst [vmem:[%s143 + $0x30] sm:$0xff] %v985
      %1002 = vst [vmem:[%s143 + $0x38] sm:$0xff] %v986
      %p1003 = scmp.lt.s32.totalorder %s13, 1
      %s1004 = scalar_select %p1003, %s13, 1
      %s1005 = smul.addr %s1004, 16
      %s1006 = smul.addr %s1005, 4
      %s1007 = scalar_lea.vmem %s2, %s1006
      // Predicated region
      $region29: #{discriminator_forward.6} parent=27 // pred_check
        %p1008 = pneg %p78
      $region30: #{discriminator_forward.6} parent=27 // pred_check_branch
        %1010 = sbr.rel (%p1008) target = $region32
      $region31: #{discriminator_forward.6} parent=27 // pred_region
        _
      $region32: #{discriminator_forward.6} parent=27 // pred_fallthru
        _
    $region28: #{discriminator_forward.6} parent=5 // pred_fallthru
      _
    %p1011 = scmp.le.s32.totalorder 2, %s8
    // Predicated region
    $region33: #{discriminator_forward.6} parent=5 // pred_check
      %p1012 = pneg %p1011
    $region34: #{discriminator_forward.6} parent=5 // pred_check_branch
      %1014 = sbr.rel (%p1012) target = $region36
    $region35: #{discriminator_forward.6} parent=5 // pred_region
      %s1015 = ssub.s32 %s8, 2
      // Predicated region
      $region37: #{discriminator_forward.6} parent=35 // pred_check
        %p1016 = pneg %p84
      $region38: #{discriminator_forward.6} parent=35 // pred_check_branch
        %1018 = sbr.rel (%p1016) target = $region40
      $region39: #{discriminator_forward.6} parent=35 // pred_region
        %p1019 = scmp.lt.s32.totalorder %s14, 1
        %s1020 = scalar_select %p1019, %s14, 1
        %s1021 = smul.addr %s1020, 16
        %s1022 = smul.addr %s1021, 4
        %s1023 = scalar_lea.vmem %s2, %s1022
      $region40: #{discriminator_forward.6} parent=35 // pred_fallthru
        _
    $region36: #{discriminator_forward.6} parent=5 // pred_fallthru
      _
  $region6: #{discriminator_forward.6} parent=0 // loop_footer
    %s12 = sadd.s32 1, %s8
  $region7: #{discriminator_forward.6} parent=0 // loop_footer_branch
    %7 = sbr.rel target = $region3
  $region8: #{discriminator_forward.6} parent=0 // loop_exit
    _

// kernel: discriminator_forward.7
$region0: #{discriminator_forward.7}
  #allocation0 [shape = 'u32[]', space=smem, size = 0x4, offset = 0x4, fixed_abs, tag = 'smem constant byte address 0x4 - core index']
  #allocation1 [shape = 'u32[144,128]{1,0:T(1,128)}', space=vmem, size = 0x12000, scoped, tag = 'internal scratch']
  #allocation2 [shape = 'f32[1,1]{1,0:T(1,128)S(1)}', space=vmem, size = 0x200, scoped, tag = 'scoped memory for discriminator_forward.7']
  %s0 = inlined_call_operand.vmem [shape: bf16[2,1024,64], index: 0, kind: input, shape index: {}]
  %s1 = inlined_call_operand.vmem [shape: bf16[128,1024], index: 1, kind: input, shape index: {}]
  %s2 = inlined_call_operand.vmem [shape: f32[128,64], index: 2, kind: input, shape index: {}]
  %s3 = inlined_call_operand.<no memory space> [shape: f32[1,1], index: 3, kind: input, shape index: {}]
  %s4 = inlined_call_operand.vmem [shape: f32[2,1,1], index: 4, kind: output, shape index: {}]
  %s5 = sld [smem:[#allocation0]]
  $region49: #{discriminator_forward.7} parent=0
    _
  %s7 = ssub.s32 1, %s5
  %s8 = scalar_select 0, %s7, %s5
  %v9 = vstv %s3
  %10 = vst [vmem:[#allocation2] sm:$0x1] %v9
  loop: start=0, step=1, limit=4
  $region2: #{discriminator_forward.7} parent=0 // loop_pre_header
    _
  $region3: #{discriminator_forward.7} parent=0 // loop_header
    %s12 = sphi 0, %s16
    %p13 = scmp.ge.s32.totalorder %s12, 4
    %s22 = sphi 0, %s24
    %s25 = sphi 0, %s22
    %s26 = sphi 0, %s25
    %s42 = sphi 0, %s26
    %s46 = sphi 0, %s46
    %s48 = sphi 0, %s46
    %s49 = sphi 0, %s48
    %s63 = sphi 0, %s49
    %s67 = sphi 0, %s67
    %s69 = sphi 0, %s67
    %s70 = sphi 0, %s69
    %s84 = sphi 0, %s70
    %s88 = sphi 0, %s88
    %s90 = sphi 0, %s88
    %s91 = sphi 0, %s90
    %s105 = sphi 0, %s91
    %s111 = sphi 0, %s113
    %s114 = sphi 0, %s111
    %s115 = sphi 0, %s114
    %s131 = sphi 0, %s115
  $region4: #{discriminator_forward.7} parent=0 // loop_header_branch
    %15 = sbr.rel (%p13) target = $region8
  $region5: #{discriminator_forward.7} parent=0 // loop_body
    %s17 = ssub.s32 %s12, 1
    %s18 = ssub.s32 %s12, 2
    %s19 = sadd.s32 %s12, 1
    %s20 = ssub.s32 %s12, %s19
    %p21 = scmp.eq.s32.totalorder %s20, 0
    %s23 = sadd.s32 %s22, 1
    %s24 = scalar_select %p21, %s22, %s23
    %p27 = pneg %p21
    %p28 = scmp.eq.s32.totalorder %s12, 1
    %p29 = por %p27, %p28
    %p30 = scmp.ne.s32.totalorder %s22, %s25
    %p31 = scmp.eq.s32.totalorder %s12, 0
    %p32 = por %p30, %p31
    %p33 = scmp.ne.s32.totalorder %s22, %s25
    %p34 = scmp.eq.s32.totalorder %s17, 1
    %p35 = por %p33, %p34
    %p36 = scmp.ne.s32.totalorder %s25, %s26
    %p37 = scmp.eq.s32.totalorder %s17, 0
    %p38 = por %p36, %p37
    %p39 = scmp.ne.s32.totalorder %s25, %s26
    %p40 = scmp.eq.s32.totalorder %s18, 1
    %p41 = por %p39, %p40
    %p43 = scmp.ne.s32.totalorder %s26, %s42
    %p44 = scmp.eq.s32.totalorder %s18, 0
    %p45 = por %p43, %p44
    %s47 = sadd.s32 %s46, 1
    %p50 = scmp.eq.s32.totalorder %s12, 1
    %p51 = scmp.ne.s32.totalorder %s46, %s48
    %p52 = scmp.eq.s32.totalorder %s12, 0
    %p53 = por %p51, %p52
    %p54 = scmp.ne.s32.totalorder %s46, %s48
    %p55 = scmp.eq.s32.totalorder %s17, 1
    %p56 = por %p54, %p55
    %p57 = scmp.ne.s32.totalorder %s48, %s49
    %p58 = scmp.eq.s32.totalorder %s17, 0
    %p59 = por %p57, %p58
    %p60 = scmp.ne.s32.totalorder %s48, %s49
    %p61 = scmp.eq.s32.totalorder %s18, 1
    %p62 = por %p60, %p61
    %p64 = scmp.ne.s32.totalorder %s49, %s63
    %p65 = scmp.eq.s32.totalorder %s18, 0
    %p66 = por %p64, %p65
    %s68 = sadd.s32 %s67, 1
    %p71 = scmp.eq.s32.totalorder %s12, 1
    %p72 = scmp.ne.s32.totalorder %s67, %s69
    %p73 = scmp.eq.s32.totalorder %s12, 0
    %p74 = por %p72, %p73
    %p75 = scmp.ne.s32.totalorder %s67, %s69
    %p76 = scmp.eq.s32.totalorder %s17, 1
    %p77 = por %p75, %p76
    %p78 = scmp.ne.s32.totalorder %s69, %s70
    %p79 = scmp.eq.s32.totalorder %s17, 0
    %p80 = por %p78, %p79
    %p81 = scmp.ne.s32.totalorder %s69, %s70
    %p82 = scmp.eq.s32.totalorder %s18, 1
    %p83 = por %p81, %p82
    %p85 = scmp.ne.s32.totalorder %s70, %s84
    %p86 = scmp.eq.s32.totalorder %s18, 0
    %p87 = por %p85, %p86
    %s89 = sadd.s32 %s88, 1
    %p92 = scmp.eq.s32.totalorder %s12, 1
    %p93 = scmp.ne.s32.totalorder %s88, %s90
    %p94 = scmp.eq.s32.totalorder %s12, 0
    %p95 = por %p93, %p94
    %p96 = scmp.ne.s32.totalorder %s88, %s90
    %p97 = scmp.eq.s32.totalorder %s17, 1
    %p98 = por %p96, %p97
    %p99 = scmp.ne.s32.totalorder %s90, %s91
    %p100 = scmp.eq.s32.totalorder %s17, 0
    %p101 = por %p99, %p100
    %p102 = scmp.ne.s32.totalorder %s90, %s91
    %p103 = scmp.eq.s32.totalorder %s18, 1
    %p104 = por %p102, %p103
    %p106 = scmp.ne.s32.totalorder %s91, %s105
    %p107 = scmp.eq.s32.totalorder %s18, 0
    %p108 = por %p106, %p107
    %s109 = ssub.s32 %s12, %s19
    %p110 = scmp.eq.s32.totalorder %s109, 0
    %s112 = sadd.s32 %s111, 1
    %s113 = scalar_select %p110, %s111, %s112
    %p116 = pneg %p110
    %p117 = scmp.eq.s32.totalorder %s12, 1
    %p118 = por %p116, %p117
    %p119 = scmp.ne.s32.totalorder %s111, %s114
    %p120 = scmp.eq.s32.totalorder %s12, 0
    %p121 = por %p119, %p120
    %p122 = scmp.ne.s32.totalorder %s111, %s114
    %p123 = scmp.eq.s32.totalorder %s17, 1
    %p124 = por %p122, %p123
    %p125 = scmp.ne.s32.totalorder %s114, %s115
    %p126 = scmp.eq.s32.totalorder %s17, 0
    %p127 = por %p125, %p126
    %p128 = scmp.ne.s32.totalorder %s114, %s115
    %p129 = scmp.eq.s32.totalorder %s18, 1
    %p130 = por %p128, %p129
    %p132 = scmp.ne.s32.totalorder %s115, %s131
    %p133 = scmp.eq.s32.totalorder %s18, 0
    %p134 = por %p132, %p133
    %p135 = scmp.le.s32.totalorder 1, %s12
    %p136 = scmp.lt.s32.totalorder %s12, 3
    %p137 = pnand %p135, %p136
    %p138 = pneg %p137
    // Predicated region
    $region9: #{discriminator_forward.7} parent=5 // pred_check
      _
    $region10: #{discriminator_forward.7} parent=5 // pred_check_branch
      %140 = sbr.rel (%p137) target = $region12
    $region11: #{discriminator_forward.7} parent=5 // pred_region
      %s141 = ssub.s32 %s12, 1
      // Predicated region
      $region13: #{discriminator_forward.7} parent=11 // pred_check
        %p142 = pneg %p59
      $region14: #{discriminator_forward.7} parent=11 // pred_check_branch
        %144 = sbr.rel (%p142) target = $region16
      $region15: #{discriminator_forward.7} parent=11 // pred_region
        _
      $region16: #{discriminator_forward.7} parent=11 // pred_fallthru
        _
      // Predicated region
      $region17: #{discriminator_forward.7} parent=11 // pred_check
        %p145 = pneg %p80
      $region18: #{discriminator_forward.7} parent=11 // pred_check_branch
        %147 = sbr.rel (%p145) target = $region20
      $region19: #{discriminator_forward.7} parent=11 // pred_region
        _
      $region20: #{discriminator_forward.7} parent=11 // pred_fallthru
        _
      // Predicated region
      $region21: #{discriminator_forward.7} parent=11 // pred_check
        %p148 = pneg %p101
      $region22: #{discriminator_forward.7} parent=11 // pred_check_branch
        %150 = sbr.rel (%p148) target = $region24
      $region23: #{discriminator_forward.7} parent=11 // pred_region
        _
      $region24: #{discriminator_forward.7} parent=11 // pred_fallthru
        _
    $region12: #{discriminator_forward.7} parent=5 // pred_fallthru
      _
    %p151 = scmp.lt.s32.totalorder %s12, 2
    // Predicated region
    $region25: #{discriminator_forward.7} parent=5 // pred_check
      %p152 = pneg %p151
    $region26: #{discriminator_forward.7} parent=5 // pred_check_branch
      %154 = sbr.rel (%p152) target = $region28
    $region27: #{discriminator_forward.7} parent=5 // pred_region
      // Predicated region
      $region29: #{discriminator_forward.7} parent=27 // pred_check
        %p155 = pneg %p32
      $region30: #{discriminator_forward.7} parent=27 // pred_check_branch
        %157 = sbr.rel (%p155) target = $region32
      $region31: #{discriminator_forward.7} parent=27 // pred_region
        %p158 = scmp.lt.s32.totalorder %s12, 1
        %s159 = scalar_select %p158, %s12, 1
        %s160 = smul.addr %s159, 128
        %s161 = smul.addr %s160, 4
        %s162 = scalar_lea.vmem %s0, %s161
      $region32: #{discriminator_forward.7} parent=27 // pred_fallthru
        _
    $region28: #{discriminator_forward.7} parent=5 // pred_fallthru
      _
    %p163 = scmp.le.s32.totalorder 1, %s12
    %p164 = scmp.lt.s32.totalorder %s12, 3
    %p165 = pnand %p163, %p164
    %p166 = pneg %p165
    // Predicated region
    $region33: #{discriminator_forward.7} parent=5 // pred_check
      _
    $region34: #{discriminator_forward.7} parent=5 // pred_check_branch
      %168 = sbr.rel (%p165) target = $region36
    $region35: #{discriminator_forward.7} parent=5 // pred_region
      %s169 = ssub.s32 %s12, 1
      %p170 = scmp.lt.s32.totalorder %s17, 1
      %s171 = scalar_select %p170, %s17, 1
      %s172 = smul.addr %s171, 128
      %s173 = smul.addr %s172, 4
      %s174 = scalar_lea.vmem %s0, %s173
      %p175 = pneg %p38
      %p176 = pneg %p35
      %p177 = pneg %p59
      %p178 = pneg %p56
      %p179 = pneg %p80
      %p180 = pneg %p77
      %p181 = pneg %p101
      %p182 = pneg %p98
      %p183 = pneg %p127
      %p184 = pneg %p124
      %p185 = scmp.lt.s32.totalorder %s17, 1
      %s186 = scalar_select %p185, %s17, 1
      %s187 = scalar_lea.vmem %s4, %s186
      %p188 = scmp.lt.s32.totalorder %s17, 1
      %s189 = scalar_select %p188, %s17, 1
      %s190 = smul.addr %s189, 128
      %s191 = smul.addr %s190, 4
      %s192 = scalar_lea.vmem %s0, %s191
      %p193 = scmp.lt.s32.totalorder %s17, 1
      %s194 = scalar_select %p193, %s17, 1
      %s195 = scalar_lea.vmem %s4, %s194
      %v197 = vld [vmem:[%s1] sm:$0xff]
      %v198 = vld [vmem:[%s1 + $0x8] sm:$0xff]
      %v199 = vld [vmem:[%s1 + $0x10] sm:$0xff]
      %v200 = vld [vmem:[%s1 + $0x18] sm:$0xff]
      %v201 = vld [vmem:[%s1 + $0x20] sm:$0xff]
      %v202 = vld [vmem:[%s1 + $0x28] sm:$0xff]
      %v203 = vld [vmem:[%s1 + $0x30] sm:$0xff]
      %v204 = vld [vmem:[%s1 + $0x38] sm:$0xff]
      %v205 = vld [vmem:[%s1 + $0x40] sm:$0xff]
      %v206 = vld [vmem:[%s1 + $0x48] sm:$0xff]
      %v207 = vld [vmem:[%s1 + $0x50] sm:$0xff]
      %v208 = vld [vmem:[%s1 + $0x58] sm:$0xff]
      %v209 = vld [vmem:[%s1 + $0x60] sm:$0xff]
      %v210 = vld [vmem:[%s1 + $0x68] sm:$0xff]
      %v211 = vld [vmem:[%s1 + $0x70] sm:$0xff]
      %v212 = vld [vmem:[%s1 + $0x78] sm:$0xff]
      %v213 = vld [vmem:[%s1 + $0x80] sm:$0xff]
      %v214 = vld [vmem:[%s1 + $0x88] sm:$0xff]
      %v215 = vld [vmem:[%s1 + $0x90] sm:$0xff]
      %v216 = vld [vmem:[%s1 + $0x98] sm:$0xff]
      %v217 = vld [vmem:[%s1 + $0xa0] sm:$0xff]
      %v218 = vld [vmem:[%s1 + $0xa8] sm:$0xff]
      %v219 = vld [vmem:[%s1 + $0xb0] sm:$0xff]
      %v220 = vld [vmem:[%s1 + $0xb8] sm:$0xff]
      %v221 = vld [vmem:[%s1 + $0xc0] sm:$0xff]
      %v222 = vld [vmem:[%s1 + $0xc8] sm:$0xff]
      %v223 = vld [vmem:[%s1 + $0xd0] sm:$0xff]
      %v224 = vld [vmem:[%s1 + $0xd8] sm:$0xff]
      %v225 = vld [vmem:[%s1 + $0xe0] sm:$0xff]
      %v226 = vld [vmem:[%s1 + $0xe8] sm:$0xff]
      %v227 = vld [vmem:[%s1 + $0xf0] sm:$0xff]
      %v228 = vld [vmem:[%s1 + $0xf8] sm:$0xff]
      %v229 = vld [vmem:[%s1 + $0x100] sm:$0xff]
      %v230 = vld [vmem:[%s1 + $0x108] sm:$0xff]
      %v231 = vld [vmem:[%s1 + $0x110] sm:$0xff]
      %v232 = vld [vmem:[%s1 + $0x118] sm:$0xff]
      %v233 = vld [vmem:[%s1 + $0x120] sm:$0xff]
      %v234 = vld [vmem:[%s1 + $0x128] sm:$0xff]
      %v235 = vld [vmem:[%s1 + $0x130] sm:$0xff]
      %v236 = vld [vmem:[%s1 + $0x138] sm:$0xff]
      %v237 = vld [vmem:[%s1 + $0x140] sm:$0xff]
      %v238 = vld [vmem:[%s1 + $0x148] sm:$0xff]
      %v239 = vld [vmem:[%s1 + $0x150] sm:$0xff]
      %v240 = vld [vmem:[%s1 + $0x158] sm:$0xff]
      %v241 = vld [vmem:[%s1 + $0x160] sm:$0xff]
      %v242 = vld [vmem:[%s1 + $0x168] sm:$0xff]
      %v243 = vld [vmem:[%s1 + $0x170] sm:$0xff]
      %v244 = vld [vmem:[%s1 + $0x178] sm:$0xff]
      %v245 = vld [vmem:[%s1 + $0x180] sm:$0xff]
      %v246 = vld [vmem:[%s1 + $0x188] sm:$0xff]
      %v247 = vld [vmem:[%s1 + $0x190] sm:$0xff]
      %v248 = vld [vmem:[%s1 + $0x198] sm:$0xff]
      %v249 = vld [vmem:[%s1 + $0x1a0] sm:$0xff]
      %v250 = vld [vmem:[%s1 + $0x1a8] sm:$0xff]
      %v251 = vld [vmem:[%s1 + $0x1b0] sm:$0xff]
      %v252 = vld [vmem:[%s1 + $0x1b8] sm:$0xff]
      %v253 = vld [vmem:[%s1 + $0x1c0] sm:$0xff]
      %v254 = vld [vmem:[%s1 + $0x1c8] sm:$0xff]
      %v255 = vld [vmem:[%s1 + $0x1d0] sm:$0xff]
      %v256 = vld [vmem:[%s1 + $0x1d8] sm:$0xff]
      %v257 = vld [vmem:[%s1 + $0x1e0] sm:$0xff]
      %v258 = vld [vmem:[%s1 + $0x1e8] sm:$0xff]
      %v259 = vld [vmem:[%s1 + $0x1f0] sm:$0xff]
      %v260 = vld [vmem:[%s1 + $0x1f8] sm:$0xff]
      %v261 = vld [vmem:[%s192] sm:$0xf]
      %v262 = vld [vmem:[%s192 + $0x4] sm:$0xf]
      %v263 = vld [vmem:[%s192 + $0x8] sm:$0xf]
      %v264 = vld [vmem:[%s192 + $0xc] sm:$0xf]
      %v265 = vld [vmem:[%s192 + $0x10] sm:$0xf]
      %v266 = vld [vmem:[%s192 + $0x14] sm:$0xf]
      %v267 = vld [vmem:[%s192 + $0x18] sm:$0xf]
      %v268 = vld [vmem:[%s192 + $0x1c] sm:$0xf]
      %v269 = vld [vmem:[%s192 + $0x20] sm:$0xf]
      %v270 = vld [vmem:[%s192 + $0x24] sm:$0xf]
      %v271 = vld [vmem:[%s192 + $0x28] sm:$0xf]
      %v272 = vld [vmem:[%s192 + $0x2c] sm:$0xf]
      %v273 = vld [vmem:[%s192 + $0x30] sm:$0xf]
      %v274 = vld [vmem:[%s192 + $0x34] sm:$0xf]
      %v275 = vld [vmem:[%s192 + $0x38] sm:$0xf]
      %v276 = vld [vmem:[%s192 + $0x3c] sm:$0xf]
      %v277 = vld [vmem:[%s192 + $0x40] sm:$0xf]
      %v278 = vld [vmem:[%s192 + $0x44] sm:$0xf]
      %v279 = vld [vmem:[%s192 + $0x48] sm:$0xf]
      %v280 = vld [vmem:[%s192 + $0x4c] sm:$0xf]
      %v281 = vld [vmem:[%s192 + $0x50] sm:$0xf]
      %v282 = vld [vmem:[%s192 + $0x54] sm:$0xf]
      %v283 = vld [vmem:[%s192 + $0x58] sm:$0xf]
      %v284 = vld [vmem:[%s192 + $0x5c] sm:$0xf]
      %v285 = vld [vmem:[%s192 + $0x60] sm:$0xf]
      %v286 = vld [vmem:[%s192 + $0x64] sm:$0xf]
      %v287 = vld [vmem:[%s192 + $0x68] sm:$0xf]
      %v288 = vld [vmem:[%s192 + $0x6c] sm:$0xf]
      %v289 = vld [vmem:[%s192 + $0x70] sm:$0xf]
      %v290 = vld [vmem:[%s192 + $0x74] sm:$0xf]
      %v291 = vld [vmem:[%s192 + $0x78] sm:$0xf]
      %v292 = vld [vmem:[%s192 + $0x7c] sm:$0xf]
      %v293 = vld [vmem:[%s192 + $0x80] sm:$0xf]
      %v294 = vld [vmem:[%s192 + $0x84] sm:$0xf]
      %v295 = vld [vmem:[%s192 + $0x88] sm:$0xf]
      %v296 = vld [vmem:[%s192 + $0x8c] sm:$0xf]
      %v297 = vld [vmem:[%s192 + $0x90] sm:$0xf]
      %v298 = vld [vmem:[%s192 + $0x94] sm:$0xf]
      %v299 = vld [vmem:[%s192 + $0x98] sm:$0xf]
      %v300 = vld [vmem:[%s192 + $0x9c] sm:$0xf]
      %v301 = vld [vmem:[%s192 + $0xa0] sm:$0xf]
      %v302 = vld [vmem:[%s192 + $0xa4] sm:$0xf]
      %v303 = vld [vmem:[%s192 + $0xa8] sm:$0xf]
      %v304 = vld [vmem:[%s192 + $0xac] sm:$0xf]
      %v305 = vld [vmem:[%s192 + $0xb0] sm:$0xf]
      %v306 = vld [vmem:[%s192 + $0xb4] sm:$0xf]
      %v307 = vld [vmem:[%s192 + $0xb8] sm:$0xf]
      %v308 = vld [vmem:[%s192 + $0xbc] sm:$0xf]
      %v309 = vld [vmem:[%s192 + $0xc0] sm:$0xf]
      %v310 = vld [vmem:[%s192 + $0xc4] sm:$0xf]
      %v311 = vld [vmem:[%s192 + $0xc8] sm:$0xf]
      %v312 = vld [vmem:[%s192 + $0xcc] sm:$0xf]
      %v313 = vld [vmem:[%s192 + $0xd0] sm:$0xf]
      %v314 = vld [vmem:[%s192 + $0xd4] sm:$0xf]
      %v315 = vld [vmem:[%s192 + $0xd8] sm:$0xf]
      %v316 = vld [vmem:[%s192 + $0xdc] sm:$0xf]
      %v317 = vld [vmem:[%s192 + $0xe0] sm:$0xf]
      %v318 = vld [vmem:[%s192 + $0xe4] sm:$0xf]
      %v319 = vld [vmem:[%s192 + $0xe8] sm:$0xf]
      %v320 = vld [vmem:[%s192 + $0xec] sm:$0xf]
      %v321 = vld [vmem:[%s192 + $0xf0] sm:$0xf]
      %v322 = vld [vmem:[%s192 + $0xf4] sm:$0xf]
      %v323 = vld [vmem:[%s192 + $0xf8] sm:$0xf]
      %v324 = vld [vmem:[%s192 + $0xfc] sm:$0xf]
      %v325 = vld [vmem:[%s192 + $0x100] sm:$0xf]
      %v326 = vld [vmem:[%s192 + $0x104] sm:$0xf]
      %v327 = vld [vmem:[%s192 + $0x108] sm:$0xf]
      %v328 = vld [vmem:[%s192 + $0x10c] sm:$0xf]
      %v329 = vld [vmem:[%s192 + $0x110] sm:$0xf]
      %v330 = vld [vmem:[%s192 + $0x114] sm:$0xf]
      %v331 = vld [vmem:[%s192 + $0x118] sm:$0xf]
      %v332 = vld [vmem:[%s192 + $0x11c] sm:$0xf]
      %v333 = vld [vmem:[%s192 + $0x120] sm:$0xf]
      %v334 = vld [vmem:[%s192 + $0x124] sm:$0xf]
      %v335 = vld [vmem:[%s192 + $0x128] sm:$0xf]
      %v336 = vld [vmem:[%s192 + $0x12c] sm:$0xf]
      %v337 = vld [vmem:[%s192 + $0x130] sm:$0xf]
      %v338 = vld [vmem:[%s192 + $0x134] sm:$0xf]
      %v339 = vld [vmem:[%s192 + $0x138] sm:$0xf]
      %v340 = vld [vmem:[%s192 + $0x13c] sm:$0xf]
      %v341 = vld [vmem:[%s192 + $0x140] sm:$0xf]
      %v342 = vld [vmem:[%s192 + $0x144] sm:$0xf]
      %v343 = vld [vmem:[%s192 + $0x148] sm:$0xf]
      %v344 = vld [vmem:[%s192 + $0x14c] sm:$0xf]
      %v345 = vld [vmem:[%s192 + $0x150] sm:$0xf]
      %v346 = vld [vmem:[%s192 + $0x154] sm:$0xf]
      %v347 = vld [vmem:[%s192 + $0x158] sm:$0xf]
      %v348 = vld [vmem:[%s192 + $0x15c] sm:$0xf]
      %v349 = vld [vmem:[%s192 + $0x160] sm:$0xf]
      %v350 = vld [vmem:[%s192 + $0x164] sm:$0xf]
      %v351 = vld [vmem:[%s192 + $0x168] sm:$0xf]
      %v352 = vld [vmem:[%s192 + $0x16c] sm:$0xf]
      %v353 = vld [vmem:[%s192 + $0x170] sm:$0xf]
      %v354 = vld [vmem:[%s192 + $0x174] sm:$0xf]
      %v355 = vld [vmem:[%s192 + $0x178] sm:$0xf]
      %v356 = vld [vmem:[%s192 + $0x17c] sm:$0xf]
      %v357 = vld [vmem:[%s192 + $0x180] sm:$0xf]
      %v358 = vld [vmem:[%s192 + $0x184] sm:$0xf]
      %v359 = vld [vmem:[%s192 + $0x188] sm:$0xf]
      %v360 = vld [vmem:[%s192 + $0x18c] sm:$0xf]
      %v361 = vld [vmem:[%s192 + $0x190] sm:$0xf]
      %v362 = vld [vmem:[%s192 + $0x194] sm:$0xf]
      %v363 = vld [vmem:[%s192 + $0x198] sm:$0xf]
      %v364 = vld [vmem:[%s192 + $0x19c] sm:$0xf]
      %v365 = vld [vmem:[%s192 + $0x1a0] sm:$0xf]
      %v366 = vld [vmem:[%s192 + $0x1a4] sm:$0xf]
      %v367 = vld [vmem:[%s192 + $0x1a8] sm:$0xf]
      %v368 = vld [vmem:[%s192 + $0x1ac] sm:$0xf]
      %v369 = vld [vmem:[%s192 + $0x1b0] sm:$0xf]
      %v370 = vld [vmem:[%s192 + $0x1b4] sm:$0xf]
      %v371 = vld [vmem:[%s192 + $0x1b8] sm:$0xf]
      %v372 = vld [vmem:[%s192 + $0x1bc] sm:$0xf]
      %v373 = vld [vmem:[%s192 + $0x1c0] sm:$0xf]
      %v374 = vld [vmem:[%s192 + $0x1c4] sm:$0xf]
      %v375 = vld [vmem:[%s192 + $0x1c8] sm:$0xf]
      %v376 = vld [vmem:[%s192 + $0x1cc] sm:$0xf]
      %v377 = vld [vmem:[%s192 + $0x1d0] sm:$0xf]
      %v378 = vld [vmem:[%s192 + $0x1d4] sm:$0xf]
      %v379 = vld [vmem:[%s192 + $0x1d8] sm:$0xf]
      %v380 = vld [vmem:[%s192 + $0x1dc] sm:$0xf]
      %v381 = vld [vmem:[%s192 + $0x1e0] sm:$0xf]
      %v382 = vld [vmem:[%s192 + $0x1e4] sm:$0xf]
      %v383 = vld [vmem:[%s192 + $0x1e8] sm:$0xf]
      %v384 = vld [vmem:[%s192 + $0x1ec] sm:$0xf]
      %v385 = vld [vmem:[%s192 + $0x1f0] sm:$0xf]
      %v386 = vld [vmem:[%s192 + $0x1f4] sm:$0xf]
      %v387 = vld [vmem:[%s192 + $0x1f8] sm:$0xf]
      %v388 = vld [vmem:[%s192 + $0x1fc] sm:$0xf]
      %v453 = vunpack.c.l.b16 %v197
      %v454 = vunpack.c.h.b16 %v197
      %v455 = vunpack.c.l.b16 %v198
      %v456 = vunpack.c.h.b16 %v198
      %v457 = vunpack.c.l.b16 %v199
      %v458 = vunpack.c.h.b16 %v199
      %v459 = vunpack.c.l.b16 %v200
      %v460 = vunpack.c.h.b16 %v200
      %v461 = vunpack.c.l.b16 %v201
      %v462 = vunpack.c.h.b16 %v201
      %v463 = vunpack.c.l.b16 %v202
      %v464 = vunpack.c.h.b16 %v202
      %v465 = vunpack.c.l.b16 %v203
      %v466 = vunpack.c.h.b16 %v203
      %v467 = vunpack.c.l.b16 %v204
      %v468 = vunpack.c.h.b16 %v204
      %v469 = vunpack.c.l.b16 %v205
      %v470 = vunpack.c.h.b16 %v205
      %v471 = vunpack.c.l.b16 %v206
      %v472 = vunpack.c.h.b16 %v206
      %v473 = vunpack.c.l.b16 %v207
      %v474 = vunpack.c.h.b16 %v207
      %v475 = vunpack.c.l.b16 %v208
      %v476 = vunpack.c.h.b16 %v208
      %v477 = vunpack.c.l.b16 %v209
      %v478 = vunpack.c.h.b16 %v209
      %v479 = vunpack.c.l.b16 %v210
      %v480 = vunpack.c.h.b16 %v210
      %v481 = vunpack.c.l.b16 %v211
      %v482 = vunpack.c.h.b16 %v211
      %v483 = vunpack.c.l.b16 %v212
      %v484 = vunpack.c.h.b16 %v212
      %v485 = vunpack.c.l.b16 %v213
      %v486 = vunpack.c.h.b16 %v213
      %v487 = vunpack.c.l.b16 %v214
      %v488 = vunpack.c.h.b16 %v214
      %v489 = vunpack.c.l.b16 %v215
      %v490 = vunpack.c.h.b16 %v215
      %v491 = vunpack.c.l.b16 %v216
      %v492 = vunpack.c.h.b16 %v216
      %v493 = vunpack.c.l.b16 %v217
      %v494 = vunpack.c.h.b16 %v217
      %v495 = vunpack.c.l.b16 %v218
      %v496 = vunpack.c.h.b16 %v218
      %v497 = vunpack.c.l.b16 %v219
      %v498 = vunpack.c.h.b16 %v219
      %v499 = vunpack.c.l.b16 %v220
      %v500 = vunpack.c.h.b16 %v220
      %v501 = vunpack.c.l.b16 %v221
      %v502 = vunpack.c.h.b16 %v221
      %v503 = vunpack.c.l.b16 %v222
      %v504 = vunpack.c.h.b16 %v222
      %v505 = vunpack.c.l.b16 %v223
      %v506 = vunpack.c.h.b16 %v223
      %v507 = vunpack.c.l.b16 %v224
      %v508 = vunpack.c.h.b16 %v224
      %v509 = vunpack.c.l.b16 %v225
      %v510 = vunpack.c.h.b16 %v225
      %v511 = vunpack.c.l.b16 %v226
      %v512 = vunpack.c.h.b16 %v226
      %v513 = vunpack.c.l.b16 %v227
      %v514 = vunpack.c.h.b16 %v227
      %v515 = vunpack.c.l.b16 %v228
      %v516 = vunpack.c.h.b16 %v228
      %v517 = vunpack.c.l.b16 %v229
      %v518 = vunpack.c.h.b16 %v229
      %v519 = vunpack.c.l.b16 %v230
      %v520 = vunpack.c.h.b16 %v230
      %v521 = vunpack.c.l.b16 %v231
      %v522 = vunpack.c.h.b16 %v231
      %v523 = vunpack.c.l.b16 %v232
      %v524 = vunpack.c.h.b16 %v232
      %v525 = vunpack.c.l.b16 %v233
      %v526 = vunpack.c.h.b16 %v233
      %v527 = vunpack.c.l.b16 %v234
      %v528 = vunpack.c.h.b16 %v234
      %v529 = vunpack.c.l.b16 %v235
      %v530 = vunpack.c.h.b16 %v235
      %v531 = vunpack.c.l.b16 %v236
      %v532 = vunpack.c.h.b16 %v236
      %v533 = vunpack.c.l.b16 %v237
      %v534 = vunpack.c.h.b16 %v237
      %v535 = vunpack.c.l.b16 %v238
      %v536 = vunpack.c.h.b16 %v238
      %v537 = vunpack.c.l.b16 %v239
      %v538 = vunpack.c.h.b16 %v239
      %v539 = vunpack.c.l.b16 %v240
      %v540 = vunpack.c.h.b16 %v240
      %v541 = vunpack.c.l.b16 %v241
      %v542 = vunpack.c.h.b16 %v241
      %v543 = vunpack.c.l.b16 %v242
      %v544 = vunpack.c.h.b16 %v242
      %v545 = vunpack.c.l.b16 %v243
      %v546 = vunpack.c.h.b16 %v243
      %v547 = vunpack.c.l.b16 %v244
      %v548 = vunpack.c.h.b16 %v244
      %v549 = vunpack.c.l.b16 %v245
      %v550 = vunpack.c.h.b16 %v245
      %v551 = vunpack.c.l.b16 %v246
      %v552 = vunpack.c.h.b16 %v246
      %v553 = vunpack.c.l.b16 %v247
      %v554 = vunpack.c.h.b16 %v247
      %v555 = vunpack.c.l.b16 %v248
      %v556 = vunpack.c.h.b16 %v248
      %v557 = vunpack.c.l.b16 %v249
      %v558 = vunpack.c.h.b16 %v249
      %v559 = vunpack.c.l.b16 %v250
      %v560 = vunpack.c.h.b16 %v250
      %v561 = vunpack.c.l.b16 %v251
      %v562 = vunpack.c.h.b16 %v251
      %v563 = vunpack.c.l.b16 %v252
      %v564 = vunpack.c.h.b16 %v252
      %v565 = vunpack.c.l.b16 %v253
      %v566 = vunpack.c.h.b16 %v253
      %v567 = vunpack.c.l.b16 %v254
      %v568 = vunpack.c.h.b16 %v254
      %v569 = vunpack.c.l.b16 %v255
      %v570 = vunpack.c.h.b16 %v255
      %v571 = vunpack.c.l.b16 %v256
      %v572 = vunpack.c.h.b16 %v256
      %v573 = vunpack.c.l.b16 %v257
      %v574 = vunpack.c.h.b16 %v257
      %v575 = vunpack.c.l.b16 %v258
      %v576 = vunpack.c.h.b16 %v258
      %v577 = vunpack.c.l.b16 %v259
      %v578 = vunpack.c.h.b16 %v259
      %v579 = vunpack.c.l.b16 %v260
      %v580 = vunpack.c.h.b16 %v260
      %v581 = vpack.c.b16 %v461, %v453
      %v582 = vpack.c.b16 %v462, %v454
      %v583 = vpack.c.b16 %v463, %v455
      %v584 = vpack.c.b16 %v464, %v456
      %v585 = vpack.c.b16 %v465, %v457
      %v586 = vpack.c.b16 %v466, %v458
      %v587 = vpack.c.b16 %v467, %v459
      %v588 = vpack.c.b16 %v468, %v460
      %v589 = vpack.c.b16 %v477, %v469
      %v590 = vpack.c.b16 %v478, %v470
      %v591 = vpack.c.b16 %v479, %v471
      %v592 = vpack.c.b16 %v480, %v472
      %v593 = vpack.c.b16 %v481, %v473
      %v594 = vpack.c.b16 %v482, %v474
      %v595 = vpack.c.b16 %v483, %v475
      %v596 = vpack.c.b16 %v484, %v476
      %v597 = vpack.c.b16 %v493, %v485
      %v598 = vpack.c.b16 %v494, %v486
      %v599 = vpack.c.b16 %v495, %v487
      %v600 = vpack.c.b16 %v496, %v488
      %v601 = vpack.c.b16 %v497, %v489
      %v602 = vpack.c.b16 %v498, %v490
      %v603 = vpack.c.b16 %v499, %v491
      %v604 = vpack.c.b16 %v500, %v492
      %v605 = vpack.c.b16 %v509, %v501
      %v606 = vpack.c.b16 %v510, %v502
      %v607 = vpack.c.b16 %v511, %v503
      %v608 = vpack.c.b16 %v512, %v504
      %v609 = vpack.c.b16 %v513, %v505
      %v610 = vpack.c.b16 %v514, %v506
      %v611 = vpack.c.b16 %v515, %v507
      %v612 = vpack.c.b16 %v516, %v508
      %v613 = vpack.c.b16 %v525, %v517
      %v614 = vpack.c.b16 %v526, %v518
      %v615 = vpack.c.b16 %v527, %v519
      %v616 = vpack.c.b16 %v528, %v520
      %v617 = vpack.c.b16 %v529, %v521
      %v618 = vpack.c.b16 %v530, %v522
      %v619 = vpack.c.b16 %v531, %v523
      %v620 = vpack.c.b16 %v532, %v524
      %v621 = vpack.c.b16 %v541, %v533
      %v622 = vpack.c.b16 %v542, %v534
      %v623 = vpack.c.b16 %v543, %v535
      %v624 = vpack.c.b16 %v544, %v536
      %v625 = vpack.c.b16 %v545, %v537
      %v626 = vpack.c.b16 %v546, %v538
      %v627 = vpack.c.b16 %v547, %v539
      %v628 = vpack.c.b16 %v548, %v540
      %v629 = vpack.c.b16 %v557, %v549
      %v630 = vpack.c.b16 %v558, %v550
      %v631 = vpack.c.b16 %v559, %v551
      %v632 = vpack.c.b16 %v560, %v552
      %v633 = vpack.c.b16 %v561, %v553
      %v634 = vpack.c.b16 %v562, %v554
      %v635 = vpack.c.b16 %v563, %v555
      %v636 = vpack.c.b16 %v564, %v556
      %v637 = vpack.c.b16 %v573, %v565
      %v638 = vpack.c.b16 %v574, %v566
      %v639 = vpack.c.b16 %v575, %v567
      %v640 = vpack.c.b16 %v576, %v568
      %v641 = vpack.c.b16 %v577, %v569
      %v642 = vpack.c.b16 %v578, %v570
      %v643 = vpack.c.b16 %v579, %v571
      %v644 = vpack.c.b16 %v580, %v572
      %v837 = vunpack.c.l.b16 %v261
      %v838 = vunpack.c.l.b16 %v262
      %v839 = vunpack.c.l.b16 %v263
      %v840 = vunpack.c.l.b16 %v264
      %v841 = vunpack.c.l.b16 %v265
      %v842 = vunpack.c.l.b16 %v266
      %v843 = vunpack.c.l.b16 %v267
      %v844 = vunpack.c.l.b16 %v268
      %v845 = vunpack.c.l.b16 %v269
      %v846 = vunpack.c.l.b16 %v270
      %v847 = vunpack.c.l.b16 %v271
      %v848 = vunpack.c.l.b16 %v272
      %v849 = vunpack.c.l.b16 %v273
      %v850 = vunpack.c.l.b16 %v274
      %v851 = vunpack.c.l.b16 %v275
      %v852 = vunpack.c.l.b16 %v276
      %v853 = vunpack.c.l.b16 %v277
      %v854 = vunpack.c.l.b16 %v278
      %v855 = vunpack.c.l.b16 %v279
      %v856 = vunpack.c.l.b16 %v280
      %v857 = vunpack.c.l.b16 %v281
      %v858 = vunpack.c.l.b16 %v282
      %v859 = vunpack.c.l.b16 %v283
      %v860 = vunpack.c.l.b16 %v284
      %v861 = vunpack.c.l.b16 %v285
      %v862 = vunpack.c.l.b16 %v286
      %v863 = vunpack.c.l.b16 %v287
      %v864 = vunpack.c.l.b16 %v288
      %v865 = vunpack.c.l.b16 %v289
      %v866 = vunpack.c.l.b16 %v290
      %v867 = vunpack.c.l.b16 %v291
      %v868 = vunpack.c.l.b16 %v292
      %v869 = vunpack.c.l.b16 %v293
      %v870 = vunpack.c.l.b16 %v294
      %v871 = vunpack.c.l.b16 %v295
      %v872 = vunpack.c.l.b16 %v296
      %v873 = vunpack.c.l.b16 %v297
      %v874 = vunpack.c.l.b16 %v298
      %v875 = vunpack.c.l.b16 %v299
      %v876 = vunpack.c.l.b16 %v300
      %v877 = vunpack.c.l.b16 %v301
      %v878 = vunpack.c.l.b16 %v302
      %v879 = vunpack.c.l.b16 %v303
      %v880 = vunpack.c.l.b16 %v304
      %v881 = vunpack.c.l.b16 %v305
      %v882 = vunpack.c.l.b16 %v306
      %v883 = vunpack.c.l.b16 %v307
      %v884 = vunpack.c.l.b16 %v308
      %v885 = vunpack.c.l.b16 %v309
      %v886 = vunpack.c.l.b16 %v310
      %v887 = vunpack.c.l.b16 %v311
      %v888 = vunpack.c.l.b16 %v312
      %v889 = vunpack.c.l.b16 %v313
      %v890 = vunpack.c.l.b16 %v314
      %v891 = vunpack.c.l.b16 %v315
      %v892 = vunpack.c.l.b16 %v316
      %v893 = vunpack.c.l.b16 %v317
      %v894 = vunpack.c.l.b16 %v318
      %v895 = vunpack.c.l.b16 %v319
      %v896 = vunpack.c.l.b16 %v320
      %v897 = vunpack.c.l.b16 %v321
      %v898 = vunpack.c.l.b16 %v322
      %v899 = vunpack.c.l.b16 %v323
      %v900 = vunpack.c.l.b16 %v324
      %v901 = vunpack.c.l.b16 %v325
      %v902 = vunpack.c.l.b16 %v326
      %v903 = vunpack.c.l.b16 %v327
      %v904 = vunpack.c.l.b16 %v328
      %v905 = vunpack.c.l.b16 %v329
      %v906 = vunpack.c.l.b16 %v330
      %v907 = vunpack.c.l.b16 %v331
      %v908 = vunpack.c.l.b16 %v332
      %v909 = vunpack.c.l.b16 %v333
      %v910 = vunpack.c.l.b16 %v334
      %v911 = vunpack.c.l.b16 %v335
      %v912 = vunpack.c.l.b16 %v336
      %v913 = vunpack.c.l.b16 %v337
      %v914 = vunpack.c.l.b16 %v338
      %v915 = vunpack.c.l.b16 %v339
      %v916 = vunpack.c.l.b16 %v340
      %v917 = vunpack.c.l.b16 %v341
      %v918 = vunpack.c.l.b16 %v342
      %v919 = vunpack.c.l.b16 %v343
      %v920 = vunpack.c.l.b16 %v344
      %v921 = vunpack.c.l.b16 %v345
      %v922 = vunpack.c.l.b16 %v346
      %v923 = vunpack.c.l.b16 %v347
      %v924 = vunpack.c.l.b16 %v348
      %v925 = vunpack.c.l.b16 %v349
      %v926 = vunpack.c.l.b16 %v350
      %v927 = vunpack.c.l.b16 %v351
      %v928 = vunpack.c.l.b16 %v352
      %v929 = vunpack.c.l.b16 %v353
      %v930 = vunpack.c.l.b16 %v354
      %v931 = vunpack.c.l.b16 %v355
      %v932 = vunpack.c.l.b16 %v356
      %v933 = vunpack.c.l.b16 %v357
      %v934 = vunpack.c.l.b16 %v358
      %v935 = vunpack.c.l.b16 %v359
      %v936 = vunpack.c.l.b16 %v360
      %v937 = vunpack.c.l.b16 %v361
      %v938 = vunpack.c.l.b16 %v362
      %v939 = vunpack.c.l.b16 %v363
      %v940 = vunpack.c.l.b16 %v364
      %v941 = vunpack.c.l.b16 %v365
      %v942 = vunpack.c.l.b16 %v366
      %v943 = vunpack.c.l.b16 %v367
      %v944 = vunpack.c.l.b16 %v368
      %v945 = vunpack.c.l.b16 %v369
      %v946 = vunpack.c.l.b16 %v370
      %v947 = vunpack.c.l.b16 %v371
      %v948 = vunpack.c.l.b16 %v372
      %v949 = vunpack.c.l.b16 %v373
      %v950 = vunpack.c.l.b16 %v374
      %v951 = vunpack.c.l.b16 %v375
      %v952 = vunpack.c.l.b16 %v376
      %v953 = vunpack.c.l.b16 %v377
      %v954 = vunpack.c.l.b16 %v378
      %v955 = vunpack.c.l.b16 %v379
      %v956 = vunpack.c.l.b16 %v380
      %v957 = vunpack.c.l.b16 %v381
      %v958 = vunpack.c.l.b16 %v382
      %v959 = vunpack.c.l.b16 %v383
      %v960 = vunpack.c.l.b16 %v384
      %v961 = vunpack.c.l.b16 %v385
      %v962 = vunpack.c.l.b16 %v386
      %v963 = vunpack.c.l.b16 %v387
      %v964 = vunpack.c.l.b16 %v388
      %v965 = vpack.c.b16 %v838, %v837
      %v966 = vpack.c.b16 %v840, %v839
      %v967 = vpack.c.b16 %v842, %v841
      %v968 = vpack.c.b16 %v844, %v843
      %v969 = vpack.c.b16 %v846, %v845
      %v970 = vpack.c.b16 %v848, %v847
      %v971 = vpack.c.b16 %v850, %v849
      %v972 = vpack.c.b16 %v852, %v851
      %v973 = vpack.c.b16 %v854, %v853
      %v974 = vpack.c.b16 %v856, %v855
      %v975 = vpack.c.b16 %v858, %v857
      %v976 = vpack.c.b16 %v860, %v859
      %v977 = vpack.c.b16 %v862, %v861
      %v978 = vpack.c.b16 %v864, %v863
      %v979 = vpack.c.b16 %v866, %v865
      %v980 = vpack.c.b16 %v868, %v867
      %v981 = vpack.c.b16 %v870, %v869
      %v982 = vpack.c.b16 %v872, %v871
      %v983 = vpack.c.b16 %v874, %v873
      %v984 = vpack.c.b16 %v876, %v875
      %v985 = vpack.c.b16 %v878, %v877
      %v986 = vpack.c.b16 %v880, %v879
      %v987 = vpack.c.b16 %v882, %v881
      %v988 = vpack.c.b16 %v884, %v883
      %v989 = vpack.c.b16 %v886, %v885
      %v990 = vpack.c.b16 %v888, %v887
      %v991 = vpack.c.b16 %v890, %v889
      %v992 = vpack.c.b16 %v892, %v891
      %v993 = vpack.c.b16 %v894, %v893
      %v994 = vpack.c.b16 %v896, %v895
      %v995 = vpack.c.b16 %v898, %v897
      %v996 = vpack.c.b16 %v900, %v899
      %v997 = vpack.c.b16 %v902, %v901
      %v998 = vpack.c.b16 %v904, %v903
      %v999 = vpack.c.b16 %v906, %v905
      %v1000 = vpack.c.b16 %v908, %v907
      %v1001 = vpack.c.b16 %v910, %v909
      %v1002 = vpack.c.b16 %v912, %v911
      %v1003 = vpack.c.b16 %v914, %v913
      %v1004 = vpack.c.b16 %v916, %v915
      %v1005 = vpack.c.b16 %v918, %v917
      %v1006 = vpack.c.b16 %v920, %v919
      %v1007 = vpack.c.b16 %v922, %v921
      %v1008 = vpack.c.b16 %v924, %v923
      %v1009 = vpack.c.b16 %v926, %v925
      %v1010 = vpack.c.b16 %v928, %v927
      %v1011 = vpack.c.b16 %v930, %v929
      %v1012 = vpack.c.b16 %v932, %v931
      %v1013 = vpack.c.b16 %v934, %v933
      %v1014 = vpack.c.b16 %v936, %v935
      %v1015 = vpack.c.b16 %v938, %v937
      %v1016 = vpack.c.b16 %v940, %v939
      %v1017 = vpack.c.b16 %v942, %v941
      %v1018 = vpack.c.b16 %v944, %v943
      %v1019 = vpack.c.b16 %v946, %v945
      %v1020 = vpack.c.b16 %v948, %v947
      %v1021 = vpack.c.b16 %v950, %v949
      %v1022 = vpack.c.b16 %v952, %v951
      %v1023 = vpack.c.b16 %v954, %v953
      %v1024 = vpack.c.b16 %v956, %v955
      %v1025 = vpack.c.b16 %v958, %v957
      %v1026 = vpack.c.b16 %v960, %v959
      %v1027 = vpack.c.b16 %v962, %v961
      %v1028 = vpack.c.b16 %v964, %v963
      %1093 = vmatprep.subr.bf16.mxu0 0
      %1094 = vmatpush1.bf16.msra.mxu0 %v972
      %1095 = vmatprep.subr.bf16.mxu0 0
      %1096 = vmatpush1.bf16.msra.mxu0 %v971
      %1097 = vmatprep.subr.bf16.mxu0 0
      %1098 = vmatpush1.bf16.msra.mxu0 %v970
      %1099 = vmatprep.subr.bf16.mxu0 0
      %1100 = vmatpush1.bf16.msra.mxu0 %v969
      %1101 = vmatprep.subr.bf16.mxu0 0
      %1102 = vmatpush1.bf16.msra.mxu0 %v968
      %1103 = vmatprep.subr.bf16.mxu0 0
      %1104 = vmatpush1.bf16.msra.mxu0 %v967
      %1105 = vmatprep.subr.bf16.mxu0 0
      %1106 = vmatpush1.bf16.msra.mxu0 %v966
      %1107 = vmatprep.subr.bf16.mxu0 0
      %1108 = vmatpush1.bf16.msra.mxu0 %v965
      %1109 = vmatprep.subr.bf16.mxu0 0
      %1110 = vmatpush2.bf16.msra.mxu0 %v980
      %1111 = vmatprep.subr.bf16.mxu0 0
      %1112 = vmatpush2.bf16.msra.mxu0 %v979
      %1113 = vmatprep.subr.bf16.mxu0 0
      %1114 = vmatpush2.bf16.msra.mxu0 %v978
      %1115 = vmatprep.subr.bf16.mxu0 0
      %1116 = vmatpush2.bf16.msra.mxu0 %v977
      %1117 = vmatprep.subr.bf16.mxu0 0
      %1118 = vmatpush2.bf16.msra.mxu0 %v976
      %1119 = vmatprep.subr.bf16.mxu0 0
      %1120 = vmatpush2.bf16.msra.mxu0 %v975
      %1121 = vmatprep.subr.bf16.mxu0 0
      %1122 = vmatpush2.bf16.msra.mxu0 %v974
      %1123 = vmatprep.subr.bf16.mxu0 0
      %1124 = vmatpush2.bf16.msra.mxu0 %v973
      %1125 = vmatprep.mubr.bf16.mxu0 %v582
      %1126 = vmatmul.mubr.bf16.gmra.mxu0 %v581
      %v1127 = vpop.f32.mrf.mxu0
      %v1128 = vadd.f32 0.0, %v1127
      %v1129 = vpop.f32.mrf.mxu0
      %v1130 = vpop.f32.mrf.mxu0
      %v1131 = vadd.f32 0.0, %v1130
      %v1132 = vpop.f32.mrf.mxu0
      %1133 = vmatprep.mubr.bf16.mxu0 %v590
      %1134 = vmatmul.mubr.bf16.gmra.mxu0 %v589
      %v1135 = vpop.f32.mrf.mxu0
      %v1136 = vadd.f32 0.0, %v1135
      %v1137 = vpop.f32.mrf.mxu0
      %v1138 = vpop.f32.mrf.mxu0
      %v1139 = vadd.f32 0.0, %v1138
      %v1140 = vpop.f32.mrf.mxu0
      %1141 = vmatprep.mubr.bf16.mxu0 %v598
      %1142 = vmatmul.mubr.bf16.gmra.mxu0 %v597
      %v1143 = vpop.f32.mrf.mxu0
      %v1144 = vadd.f32 0.0, %v1143
      %v1145 = vpop.f32.mrf.mxu0
      %v1146 = vpop.f32.mrf.mxu0
      %v1147 = vadd.f32 0.0, %v1146
      %v1148 = vpop.f32.mrf.mxu0
      %1149 = vmatprep.mubr.bf16.mxu0 %v606
      %1150 = vmatmul.mubr.bf16.gmra.mxu0 %v605
      %v1151 = vpop.f32.mrf.mxu0
      %v1152 = vadd.f32 0.0, %v1151
      %v1153 = vpop.f32.mrf.mxu0
      %v1154 = vpop.f32.mrf.mxu0
      %v1155 = vadd.f32 0.0, %v1154
      %v1156 = vpop.f32.mrf.mxu0
      %1157 = vmatprep.mubr.bf16.mxu0 %v614
      %1158 = vmatmul.mubr.bf16.gmra.mxu0 %v613
      %v1159 = vpop.f32.mrf.mxu0
      %v1160 = vadd.f32 0.0, %v1159
      %v1161 = vpop.f32.mrf.mxu0
      %v1162 = vpop.f32.mrf.mxu0
      %v1163 = vadd.f32 0.0, %v1162
      %v1164 = vpop.f32.mrf.mxu0
      %1165 = vmatprep.mubr.bf16.mxu0 %v622
      %1166 = vmatmul.mubr.bf16.gmra.mxu0 %v621
      %v1167 = vpop.f32.mrf.mxu0
      %v1168 = vadd.f32 0.0, %v1167
      %v1169 = vpop.f32.mrf.mxu0
      %v1170 = vpop.f32.mrf.mxu0
      %v1171 = vadd.f32 0.0, %v1170
      %v1172 = vpop.f32.mrf.mxu0
      %1173 = vmatprep.mubr.bf16.mxu0 %v630
      %1174 = vmatmul.mubr.bf16.gmra.mxu0 %v629
      %v1175 = vpop.f32.mrf.mxu0
      %v1176 = vadd.f32 0.0, %v1175
      %v1177 = vpop.f32.mrf.mxu0
      %v1178 = vpop.f32.mrf.mxu0
      %v1179 = vadd.f32 0.0, %v1178
      %v1180 = vpop.f32.mrf.mxu0
      %1181 = vmatprep.mubr.bf16.mxu0 %v638
      %1182 = vmatmul.mubr.bf16.gmra.mxu0 %v637
      %v1183 = vpop.f32.mrf.mxu0
      %v1184 = vadd.f32 0.0, %v1183
      %v1185 = vpop.f32.mrf.mxu0
      %v1186 = vpop.f32.mrf.mxu0
      %v1187 = vadd.f32 0.0, %v1186
      %v1188 = vpop.f32.mrf.mxu0
      %1189 = vdwg.mxu0
      %1190 = vmatprep.subr.bf16.mxu0 0
      %1191 = vmatpush1.bf16.msra.mxu0 %v988
      %1192 = vmatprep.subr.bf16.mxu0 0
      %1193 = vmatpush1.bf16.msra.mxu0 %v987
      %1194 = vmatprep.subr.bf16.mxu0 0
      %1195 = vmatpush1.bf16.msra.mxu0 %v986
      %1196 = vmatprep.subr.bf16.mxu0 0
      %1197 = vmatpush1.bf16.msra.mxu0 %v985
      %1198 = vmatprep.subr.bf16.mxu0 0
      %1199 = vmatpush1.bf16.msra.mxu0 %v984
      %1200 = vmatprep.subr.bf16.mxu0 0
      %1201 = vmatpush1.bf16.msra.mxu0 %v983
      %1202 = vmatprep.subr.bf16.mxu0 0
      %1203 = vmatpush1.bf16.msra.mxu0 %v982
      %1204 = vmatprep.subr.bf16.mxu0 0
      %1205 = vmatpush1.bf16.msra.mxu0 %v981
      %1206 = vmatprep.subr.bf16.mxu0 0
      %1207 = vmatpush2.bf16.msra.mxu0 %v996
      %1208 = vmatprep.subr.bf16.mxu0 0
      %1209 = vmatpush2.bf16.msra.mxu0 %v995
      %1210 = vmatprep.subr.bf16.mxu0 0
      %1211 = vmatpush2.bf16.msra.mxu0 %v994
      %1212 = vmatprep.subr.bf16.mxu0 0
      %1213 = vmatpush2.bf16.msra.mxu0 %v993
      %1214 = vmatprep.subr.bf16.mxu0 0
      %1215 = vmatpush2.bf16.msra.mxu0 %v992
      %1216 = vmatprep.subr.bf16.mxu0 0
      %1217 = vmatpush2.bf16.msra.mxu0 %v991
      %1218 = vmatprep.subr.bf16.mxu0 0
      %1219 = vmatpush2.bf16.msra.mxu0 %v990
      %1220 = vmatprep.subr.bf16.mxu0 0
      %1221 = vmatpush2.bf16.msra.mxu0 %v989
      %1222 = vmatprep.mubr.bf16.mxu0 %v584
      %1223 = vmatmul.mubr.bf16.gmra.mxu0 %v583
      %v1224 = vpop.f32.mrf.mxu0
      %v1225 = vadd.f32 %v1128, %v1224
      %v1226 = vpop.f32.mrf.mxu0
      %v1227 = vpop.f32.mrf.mxu0
      %v1228 = vadd.f32 %v1131, %v1227
      %v1229 = vpop.f32.mrf.mxu0
      %1230 = vmatprep.mubr.bf16.mxu0 %v592
      %1231 = vmatmul.mubr.bf16.gmra.mxu0 %v591
      %v1232 = vpop.f32.mrf.mxu0
      %v1233 = vadd.f32 %v1136, %v1232
      %v1234 = vpop.f32.mrf.mxu0
      %v1235 = vpop.f32.mrf.mxu0
      %v1236 = vadd.f32 %v1139, %v1235
      %v1237 = vpop.f32.mrf.mxu0
      %1238 = vmatprep.mubr.bf16.mxu0 %v600
      %1239 = vmatmul.mubr.bf16.gmra.mxu0 %v599
      %v1240 = vpop.f32.mrf.mxu0
      %v1241 = vadd.f32 %v1144, %v1240
      %v1242 = vpop.f32.mrf.mxu0
      %v1243 = vpop.f32.mrf.mxu0
      %v1244 = vadd.f32 %v1147, %v1243
      %v1245 = vpop.f32.mrf.mxu0
      %1246 = vmatprep.mubr.bf16.mxu0 %v608
      %1247 = vmatmul.mubr.bf16.gmra.mxu0 %v607
      %v1248 = vpop.f32.mrf.mxu0
      %v1249 = vadd.f32 %v1152, %v1248
      %v1250 = vpop.f32.mrf.mxu0
      %v1251 = vpop.f32.mrf.mxu0
      %v1252 = vadd.f32 %v1155, %v1251
      %v1253 = vpop.f32.mrf.mxu0
      %1254 = vmatprep.mubr.bf16.mxu0 %v616
      %1255 = vmatmul.mubr.bf16.gmra.mxu0 %v615
      %v1256 = vpop.f32.mrf.mxu0
      %v1257 = vadd.f32 %v1160, %v1256
      %v1258 = vpop.f32.mrf.mxu0
      %v1259 = vpop.f32.mrf.mxu0
      %v1260 = vadd.f32 %v1163, %v1259
      %v1261 = vpop.f32.mrf.mxu0
      %1262 = vmatprep.mubr.bf16.mxu0 %v624
      %1263 = vmatmul.mubr.bf16.gmra.mxu0 %v623
      %v1264 = vpop.f32.mrf.mxu0
      %v1265 = vadd.f32 %v1168, %v1264
      %v1266 = vpop.f32.mrf.mxu0
      %v1267 = vpop.f32.mrf.mxu0
      %v1268 = vadd.f32 %v1171, %v1267
      %v1269 = vpop.f32.mrf.mxu0
      %1270 = vmatprep.mubr.bf16.mxu0 %v632
      %1271 = vmatmul.mubr.bf16.gmra.mxu0 %v631
      %v1272 = vpop.f32.mrf.mxu0
      %v1273 = vadd.f32 %v1176, %v1272
      %v1274 = vpop.f32.mrf.mxu0
      %v1275 = vpop.f32.mrf.mxu0
      %v1276 = vadd.f32 %v1179, %v1275
      %v1277 = vpop.f32.mrf.mxu0
      %1278 = vmatprep.mubr.bf16.mxu0 %v640
      %1279 = vmatmul.mubr.bf16.gmra.mxu0 %v639
      %v1280 = vpop.f32.mrf.mxu0
      %v1281 = vadd.f32 %v1184, %v1280
      %v1282 = vpop.f32.mrf.mxu0
      %v1283 = vpop.f32.mrf.mxu0
      %v1284 = vadd.f32 %v1187, %v1283
      %v1285 = vpop.f32.mrf.mxu0
      %1286 = vdwg.mxu0
      %1287 = vmatprep.subr.bf16.mxu0 0
      %1288 = vmatpush1.bf16.msra.mxu0 %v1004
      %1289 = vmatprep.subr.bf16.mxu0 0
      %1290 = vmatpush1.bf16.msra.mxu0 %v1003
      %1291 = vmatprep.subr.bf16.mxu0 0
      %1292 = vmatpush1.bf16.msra.mxu0 %v1002
      %1293 = vmatprep.subr.bf16.mxu0 0
      %1294 = vmatpush1.bf16.msra.mxu0 %v1001
      %1295 = vmatprep.subr.bf16.mxu0 0
      %1296 = vmatpush1.bf16.msra.mxu0 %v1000
      %1297 = vmatprep.subr.bf16.mxu0 0
      %1298 = vmatpush1.bf16.msra.mxu0 %v999
      %1299 = vmatprep.subr.bf16.mxu0 0
      %1300 = vmatpush1.bf16.msra.mxu0 %v998
      %1301 = vmatprep.subr.bf16.mxu0 0
      %1302 = vmatpush1.bf16.msra.mxu0 %v997
      %1303 = vmatprep.subr.bf16.mxu0 0
      %1304 = vmatpush2.bf16.msra.mxu0 %v1012
      %1305 = vmatprep.subr.bf16.mxu0 0
      %1306 = vmatpush2.bf16.msra.mxu0 %v1011
      %1307 = vmatprep.subr.bf16.mxu0 0
      %1308 = vmatpush2.bf16.msra.mxu0 %v1010
      %1309 = vmatprep.subr.bf16.mxu0 0
      %1310 = vmatpush2.bf16.msra.mxu0 %v1009
      %1311 = vmatprep.subr.bf16.mxu0 0
      %1312 = vmatpush2.bf16.msra.mxu0 %v1008
      %1313 = vmatprep.subr.bf16.mxu0 0
      %1314 = vmatpush2.bf16.msra.mxu0 %v1007
      %1315 = vmatprep.subr.bf16.mxu0 0
      %1316 = vmatpush2.bf16.msra.mxu0 %v1006
      %1317 = vmatprep.subr.bf16.mxu0 0
      %1318 = vmatpush2.bf16.msra.mxu0 %v1005
      %1319 = vmatprep.mubr.bf16.mxu0 %v586
      %1320 = vmatmul.mubr.bf16.gmra.mxu0 %v585
      %v1321 = vpop.f32.mrf.mxu0
      %v1322 = vadd.f32 %v1225, %v1321
      %v1323 = vpop.f32.mrf.mxu0
      %v1324 = vpop.f32.mrf.mxu0
      %v1325 = vadd.f32 %v1228, %v1324
      %v1326 = vpop.f32.mrf.mxu0
      %1327 = vmatprep.mubr.bf16.mxu0 %v594
      %1328 = vmatmul.mubr.bf16.gmra.mxu0 %v593
      %v1329 = vpop.f32.mrf.mxu0
      %v1330 = vadd.f32 %v1233, %v1329
      %v1331 = vpop.f32.mrf.mxu0
      %v1332 = vpop.f32.mrf.mxu0
      %v1333 = vadd.f32 %v1236, %v1332
      %v1334 = vpop.f32.mrf.mxu0
      %1335 = vmatprep.mubr.bf16.mxu0 %v602
      %1336 = vmatmul.mubr.bf16.gmra.mxu0 %v601
      %v1337 = vpop.f32.mrf.mxu0
      %v1338 = vadd.f32 %v1241, %v1337
      %v1339 = vpop.f32.mrf.mxu0
      %v1340 = vpop.f32.mrf.mxu0
      %v1341 = vadd.f32 %v1244, %v1340
      %v1342 = vpop.f32.mrf.mxu0
      %1343 = vmatprep.mubr.bf16.mxu0 %v610
      %1344 = vmatmul.mubr.bf16.gmra.mxu0 %v609
      %v1345 = vpop.f32.mrf.mxu0
      %v1346 = vadd.f32 %v1249, %v1345
      %v1347 = vpop.f32.mrf.mxu0
      %v1348 = vpop.f32.mrf.mxu0
      %v1349 = vadd.f32 %v1252, %v1348
      %v1350 = vpop.f32.mrf.mxu0
      %1351 = vmatprep.mubr.bf16.mxu0 %v618
      %1352 = vmatmul.mubr.bf16.gmra.mxu0 %v617
      %v1353 = vpop.f32.mrf.mxu0
      %v1354 = vadd.f32 %v1257, %v1353
      %v1355 = vpop.f32.mrf.mxu0
      %v1356 = vpop.f32.mrf.mxu0
      %v1357 = vadd.f32 %v1260, %v1356
      %v1358 = vpop.f32.mrf.mxu0
      %1359 = vmatprep.mubr.bf16.mxu0 %v626
      %1360 = vmatmul.mubr.bf16.gmra.mxu0 %v625
      %v1361 = vpop.f32.mrf.mxu0
      %v1362 = vadd.f32 %v1265, %v1361
      %v1363 = vpop.f32.mrf.mxu0
      %v1364 = vpop.f32.mrf.mxu0
      %v1365 = vadd.f32 %v1268, %v1364
      %v1366 = vpop.f32.mrf.mxu0
      %1367 = vmatprep.mubr.bf16.mxu0 %v634
      %1368 = vmatmul.mubr.bf16.gmra.mxu0 %v633
      %v1369 = vpop.f32.mrf.mxu0
      %v1370 = vadd.f32 %v1273, %v1369
      %v1371 = vpop.f32.mrf.mxu0
      %v1372 = vpop.f32.mrf.mxu0
      %v1373 = vadd.f32 %v1276, %v1372
      %v1374 = vpop.f32.mrf.mxu0
      %1375 = vmatprep.mubr.bf16.mxu0 %v642
      %1376 = vmatmul.mubr.bf16.gmra.mxu0 %v641
      %v1377 = vpop.f32.mrf.mxu0
      %v1378 = vadd.f32 %v1281, %v1377
      %v1379 = vpop.f32.mrf.mxu0
      %v1380 = vpop.f32.mrf.mxu0
      %v1381 = vadd.f32 %v1284, %v1380
      %v1382 = vpop.f32.mrf.mxu0
      %1383 = vdwg.mxu0
      %1384 = vmatprep.subr.bf16.mxu0 0
      %1385 = vmatpush1.bf16.msra.mxu0 %v1020
      %1386 = vmatprep.subr.bf16.mxu0 0
      %1387 = vmatpush1.bf16.msra.mxu0 %v1019
      %1388 = vmatprep.subr.bf16.mxu0 0
      %1389 = vmatpush1.bf16.msra.mxu0 %v1018
      %1390 = vmatprep.subr.bf16.mxu0 0
      %1391 = vmatpush1.bf16.msra.mxu0 %v1017
      %1392 = vmatprep.subr.bf16.mxu0 0
      %1393 = vmatpush1.bf16.msra.mxu0 %v1016
      %1394 = vmatprep.subr.bf16.mxu0 0
      %1395 = vmatpush1.bf16.msra.mxu0 %v1015
      %1396 = vmatprep.subr.bf16.mxu0 0
      %1397 = vmatpush1.bf16.msra.mxu0 %v1014
      %1398 = vmatprep.subr.bf16.mxu0 0
      %1399 = vmatpush1.bf16.msra.mxu0 %v1013
      %1400 = vmatprep.subr.bf16.mxu0 0
      %1401 = vmatpush2.bf16.msra.mxu0 %v1028
      %1402 = vmatprep.subr.bf16.mxu0 0
      %1403 = vmatpush2.bf16.msra.mxu0 %v1027
      %1404 = vmatprep.subr.bf16.mxu0 0
      %1405 = vmatpush2.bf16.msra.mxu0 %v1026
      %1406 = vmatprep.subr.bf16.mxu0 0
      %1407 = vmatpush2.bf16.msra.mxu0 %v1025
      %1408 = vmatprep.subr.bf16.mxu0 0
      %1409 = vmatpush2.bf16.msra.mxu0 %v1024
      %1410 = vmatprep.subr.bf16.mxu0 0
      %1411 = vmatpush2.bf16.msra.mxu0 %v1023
      %1412 = vmatprep.subr.bf16.mxu0 0
      %1413 = vmatpush2.bf16.msra.mxu0 %v1022
      %1414 = vmatprep.subr.bf16.mxu0 0
      %1415 = vmatpush2.bf16.msra.mxu0 %v1021
      %1416 = vmatprep.mubr.bf16.mxu0 %v588
      %1417 = vmatmul.mubr.bf16.gmra.mxu0 %v587
      %v1418 = vpop.f32.mrf.mxu0
      %v1419 = vadd.f32 %v1322, %v1418
      %v1420 = vpop.f32.mrf.mxu0
      %v1421 = vpop.f32.mrf.mxu0
      %v1422 = vadd.f32 %v1325, %v1421
      %v1423 = vpop.f32.mrf.mxu0
      %1424 = vmatprep.mubr.bf16.mxu0 %v596
      %1425 = vmatmul.mubr.bf16.gmra.mxu0 %v595
      %v1426 = vpop.f32.mrf.mxu0
      %v1427 = vadd.f32 %v1330, %v1426
      %v1428 = vpop.f32.mrf.mxu0
      %v1429 = vpop.f32.mrf.mxu0
      %v1430 = vadd.f32 %v1333, %v1429
      %v1431 = vpop.f32.mrf.mxu0
      %1432 = vmatprep.mubr.bf16.mxu0 %v604
      %1433 = vmatmul.mubr.bf16.gmra.mxu0 %v603
      %v1434 = vpop.f32.mrf.mxu0
      %v1435 = vadd.f32 %v1338, %v1434
      %v1436 = vpop.f32.mrf.mxu0
      %v1437 = vpop.f32.mrf.mxu0
      %v1438 = vadd.f32 %v1341, %v1437
      %v1439 = vpop.f32.mrf.mxu0
      %1440 = vmatprep.mubr.bf16.mxu0 %v612
      %1441 = vmatmul.mubr.bf16.gmra.mxu0 %v611
      %v1442 = vpop.f32.mrf.mxu0
      %v1443 = vadd.f32 %v1346, %v1442
      %v1444 = vpop.f32.mrf.mxu0
      %v1445 = vpop.f32.mrf.mxu0
      %v1446 = vadd.f32 %v1349, %v1445
      %v1447 = vpop.f32.mrf.mxu0
      %1448 = vmatprep.mubr.bf16.mxu0 %v620
      %1449 = vmatmul.mubr.bf16.gmra.mxu0 %v619
      %v1450 = vpop.f32.mrf.mxu0
      %v1451 = vadd.f32 %v1354, %v1450
      %v1452 = vpop.f32.mrf.mxu0
      %v1453 = vpop.f32.mrf.mxu0
      %v1454 = vadd.f32 %v1357, %v1453
      %v1455 = vpop.f32.mrf.mxu0
      %1456 = vmatprep.mubr.bf16.mxu0 %v628
      %1457 = vmatmul.mubr.bf16.gmra.mxu0 %v627
      %v1458 = vpop.f32.mrf.mxu0
      %v1459 = vadd.f32 %v1362, %v1458
      %v1460 = vpop.f32.mrf.mxu0
      %v1461 = vpop.f32.mrf.mxu0
      %v1462 = vadd.f32 %v1365, %v1461
      %v1463 = vpop.f32.mrf.mxu0
      %1464 = vmatprep.mubr.bf16.mxu0 %v636
      %1465 = vmatmul.mubr.bf16.gmra.mxu0 %v635
      %v1466 = vpop.f32.mrf.mxu0
      %v1467 = vadd.f32 %v1370, %v1466
      %v1468 = vpop.f32.mrf.mxu0
      %v1469 = vpop.f32.mrf.mxu0
      %v1470 = vadd.f32 %v1373, %v1469
      %v1471 = vpop.f32.mrf.mxu0
      %1472 = vmatprep.mubr.bf16.mxu0 %v644
      %1473 = vmatmul.mubr.bf16.gmra.mxu0 %v643
      %v1474 = vpop.f32.mrf.mxu0
      %v1475 = vadd.f32 %v1378, %v1474
      %v1476 = vpop.f32.mrf.mxu0
      %v1477 = vpop.f32.mrf.mxu0
      %v1478 = vadd.f32 %v1381, %v1477
      %v1479 = vpop.f32.mrf.mxu0
      %1480 = vdwg.mxu0
      %vm1481 = vcmask 523264
      %v1482 = vsel %vm1481, %v1419, 0.0
      %1483 = vadd.xlane.f32.xlu0 %v1482
      %v1484 = vpop.xlane.xlu0 %1483
      %v1485 = vsel %vm1481, %v1422, 0.0
      %1486 = vadd.xlane.f32.xlu0 %v1485
      %v1487 = vpop.xlane.xlu0 %1486
      %v1488 = vsel %vm1481, %v1427, 0.0
      %1489 = vadd.xlane.f32.xlu0 %v1488
      %v1490 = vpop.xlane.xlu0 %1489
      %v1491 = vsel %vm1481, %v1430, 0.0
      %1492 = vadd.xlane.f32.xlu0 %v1491
      %v1493 = vpop.xlane.xlu0 %1492
      %v1494 = vsel %vm1481, %v1435, 0.0
      %1495 = vadd.xlane.f32.xlu0 %v1494
      %v1496 = vpop.xlane.xlu0 %1495
      %v1497 = vsel %vm1481, %v1438, 0.0
      %1498 = vadd.xlane.f32.xlu0 %v1497
      %v1499 = vpop.xlane.xlu0 %1498
      %v1500 = vsel %vm1481, %v1443, 0.0
      %1501 = vadd.xlane.f32.xlu0 %v1500
      %v1502 = vpop.xlane.xlu0 %1501
      %v1503 = vsel %vm1481, %v1446, 0.0
      %1504 = vadd.xlane.f32.xlu0 %v1503
      %v1505 = vpop.xlane.xlu0 %1504
      %v1506 = vsel %vm1481, %v1451, 0.0
      %1507 = vadd.xlane.f32.xlu0 %v1506
      %v1508 = vpop.xlane.xlu0 %1507
      %v1509 = vsel %vm1481, %v1454, 0.0
      %1510 = vadd.xlane.f32.xlu0 %v1509
      %v1511 = vpop.xlane.xlu0 %1510
      %v1512 = vsel %vm1481, %v1459, 0.0
      %1513 = vadd.xlane.f32.xlu0 %v1512
      %v1514 = vpop.xlane.xlu0 %1513
      %v1515 = vsel %vm1481, %v1462, 0.0
      %1516 = vadd.xlane.f32.xlu0 %v1515
      %v1517 = vpop.xlane.xlu0 %1516
      %v1518 = vsel %vm1481, %v1467, 0.0
      %1519 = vadd.xlane.f32.xlu0 %v1518
      %v1520 = vpop.xlane.xlu0 %1519
      %v1521 = vsel %vm1481, %v1470, 0.0
      %1522 = vadd.xlane.f32.xlu0 %v1521
      %v1523 = vpop.xlane.xlu0 %1522
      %v1524 = vsel %vm1481, %v1475, 0.0
      %1525 = vadd.xlane.f32.xlu0 %v1524
      %v1526 = vpop.xlane.xlu0 %1525
      %v1527 = vsel %vm1481, %v1478, 0.0
      %1528 = vadd.xlane.f32.xlu0 %v1527
      %v1529 = vpop.xlane.xlu0 %1528
      %v1530 = vrcp.pop 64.0
      %v1531 = vmul.f32 %v1484, %v1530
      %v1532 = vmul.f32 %v1487, %v1530
      %v1533 = vmul.f32 %v1490, %v1530
      %v1534 = vmul.f32 %v1493, %v1530
      %v1535 = vmul.f32 %v1496, %v1530
      %v1536 = vmul.f32 %v1499, %v1530
      %v1537 = vmul.f32 %v1502, %v1530
      %v1538 = vmul.f32 %v1505, %v1530
      %v1539 = vmul.f32 %v1508, %v1530
      %v1540 = vmul.f32 %v1511, %v1530
      %v1541 = vmul.f32 %v1514, %v1530
      %v1542 = vmul.f32 %v1517, %v1530
      %v1543 = vmul.f32 %v1520, %v1530
      %v1544 = vmul.f32 %v1523, %v1530
      %v1545 = vmul.f32 %v1526, %v1530
      %v1546 = vmul.f32 %v1529, %v1530
      %v1547 = vsub.f32 %v1419, %v1531
      %v1548 = vsub.f32 %v1422, %v1532
      %v1549 = vsub.f32 %v1427, %v1533
      %v1550 = vsub.f32 %v1430, %v1534
      %v1551 = vsub.f32 %v1435, %v1535
      %v1552 = vsub.f32 %v1438, %v1536
      %v1553 = vsub.f32 %v1443, %v1537
      %v1554 = vsub.f32 %v1446, %v1538
      %v1555 = vsub.f32 %v1451, %v1539
      %v1556 = vsub.f32 %v1454, %v1540
      %v1557 = vsub.f32 %v1459, %v1541
      %v1558 = vsub.f32 %v1462, %v1542
      %v1559 = vsub.f32 %v1467, %v1543
      %v1560 = vsub.f32 %v1470, %v1544
      %v1561 = vsub.f32 %v1475, %v1545
      %v1562 = vsub.f32 %v1478, %v1546
      %v1563 = vmul.f32 %v1547, %v1547
      %v1564 = vmul.f32 %v1548, %v1548
      %v1565 = vmul.f32 %v1549, %v1549
      %v1566 = vmul.f32 %v1550, %v1550
      %v1567 = vmul.f32 %v1551, %v1551
      %v1568 = vmul.f32 %v1552, %v1552
      %v1569 = vmul.f32 %v1553, %v1553
      %v1570 = vmul.f32 %v1554, %v1554
      %v1571 = vmul.f32 %v1555, %v1555
      %v1572 = vmul.f32 %v1556, %v1556
      %v1573 = vmul.f32 %v1557, %v1557
      %v1574 = vmul.f32 %v1558, %v1558
      %v1575 = vmul.f32 %v1559, %v1559
      %v1576 = vmul.f32 %v1560, %v1560
      %v1577 = vmul.f32 %v1561, %v1561
      %v1578 = vmul.f32 %v1562, %v1562
      %v1579 = vsel %vm1481, %v1563, 0.0
      %1580 = vadd.xlane.f32.xlu0 %v1579
      %v1581 = vpop.xlane.xlu0 %1580
      %v1582 = vsel %vm1481, %v1564, 0.0
      %1583 = vadd.xlane.f32.xlu0 %v1582
      %v1584 = vpop.xlane.xlu0 %1583
      %v1585 = vsel %vm1481, %v1565, 0.0
      %1586 = vadd.xlane.f32.xlu0 %v1585
      %v1587 = vpop.xlane.xlu0 %1586
      %v1588 = vsel %vm1481, %v1566, 0.0
      %1589 = vadd.xlane.f32.xlu0 %v1588
      %v1590 = vpop.xlane.xlu0 %1589
      %v1591 = vsel %vm1481, %v1567, 0.0
      %1592 = vadd.xlane.f32.xlu0 %v1591
      %v1593 = vpop.xlane.xlu0 %1592
      %v1594 = vsel %vm1481, %v1568, 0.0
      %1595 = vadd.xlane.f32.xlu0 %v1594
      %v1596 = vpop.xlane.xlu0 %1595
      %v1597 = vsel %vm1481, %v1569, 0.0
      %1598 = vadd.xlane.f32.xlu0 %v1597
      %v1599 = vpop.xlane.xlu0 %1598
      %v1600 = vsel %vm1481, %v1570, 0.0
      %1601 = vadd.xlane.f32.xlu0 %v1600
      %v1602 = vpop.xlane.xlu0 %1601
      %v1603 = vsel %vm1481, %v1571, 0.0
      %1604 = vadd.xlane.f32.xlu0 %v1603
      %v1605 = vpop.xlane.xlu0 %1604
      %v1606 = vsel %vm1481, %v1572, 0.0
      %1607 = vadd.xlane.f32.xlu0 %v1606
      %v1608 = vpop.xlane.xlu0 %1607
      %v1609 = vsel %vm1481, %v1573, 0.0
      %1610 = vadd.xlane.f32.xlu0 %v1609
      %v1611 = vpop.xlane.xlu0 %1610
      %v1612 = vsel %vm1481, %v1574, 0.0
      %1613 = vadd.xlane.f32.xlu0 %v1612
      %v1614 = vpop.xlane.xlu0 %1613
      %v1615 = vsel %vm1481, %v1575, 0.0
      %1616 = vadd.xlane.f32.xlu0 %v1615
      %v1617 = vpop.xlane.xlu0 %1616
      %v1618 = vsel %vm1481, %v1576, 0.0
      %1619 = vadd.xlane.f32.xlu0 %v1618
      %v1620 = vpop.xlane.xlu0 %1619
      %v1621 = vsel %vm1481, %v1577, 0.0
      %1622 = vadd.xlane.f32.xlu0 %v1621
      %v1623 = vpop.xlane.xlu0 %1622
      %v1624 = vsel %vm1481, %v1578, 0.0
      %1625 = vadd.xlane.f32.xlu0 %v1624
      %v1626 = vpop.xlane.xlu0 %1625
      %v1627 = vmul.f32 %v1581, %v1530
      %v1628 = vmul.f32 %v1584, %v1530
      %v1629 = vmul.f32 %v1587, %v1530
      %v1630 = vmul.f32 %v1590, %v1530
      %v1631 = vmul.f32 %v1593, %v1530
      %v1632 = vmul.f32 %v1596, %v1530
      %v1633 = vmul.f32 %v1599, %v1530
      %v1634 = vmul.f32 %v1602, %v1530
      %v1635 = vmul.f32 %v1605, %v1530
      %v1636 = vmul.f32 %v1608, %v1530
      %v1637 = vmul.f32 %v1611, %v1530
      %v1638 = vmul.f32 %v1614, %v1530
      %v1639 = vmul.f32 %v1617, %v1530
      %v1640 = vmul.f32 %v1620, %v1530
      %v1641 = vmul.f32 %v1623, %v1530
      %v1642 = vmul.f32 %v1626, %v1530
      %v1643 = vadd.f32 %v1627, 1e-05
      %v1644 = vadd.f32 %v1628, 1e-05
      %v1645 = vadd.f32 %v1629, 1e-05
      %v1646 = vadd.f32 %v1630, 1e-05
      %v1647 = vadd.f32 %v1631, 1e-05
      %v1648 = vadd.f32 %v1632, 1e-05
      %v1649 = vadd.f32 %v1633, 1e-05
      %v1650 = vadd.f32 %v1634, 1e-05
      %v1651 = vadd.f32 %v1635, 1e-05
      %v1652 = vadd.f32 %v1636, 1e-05
      %v1653 = vadd.f32 %v1637, 1e-05
      %v1654 = vadd.f32 %v1638, 1e-05
      %v1655 = vadd.f32 %v1639, 1e-05
      %v1656 = vadd.f32 %v1640, 1e-05
      %v1657 = vadd.f32 %v1641, 1e-05
      %v1658 = vadd.f32 %v1642, 1e-05
      %v1659 = vrsqrt.pop %v1643
      %v1660 = vrsqrt.pop %v1644
      %v1661 = vrsqrt.pop %v1645
      %v1662 = vrsqrt.pop %v1646
      %v1663 = vrsqrt.pop %v1647
      %v1664 = vrsqrt.pop %v1648
      %v1665 = vrsqrt.pop %v1649
      %v1666 = vrsqrt.pop %v1650
      %v1667 = vrsqrt.pop %v1651
      %v1668 = vrsqrt.pop %v1652
      %v1669 = vrsqrt.pop %v1653
      %v1670 = vrsqrt.pop %v1654
      %v1671 = vrsqrt.pop %v1655
      %v1672 = vrsqrt.pop %v1656
      %v1673 = vrsqrt.pop %v1657
      %v1674 = vrsqrt.pop %v1658
      %v1675 = vmul.f32 %v1547, %v1659
      %v1676 = vmul.f32 %v1548, %v1660
      %v1677 = vmul.f32 %v1549, %v1661
      %v1678 = vmul.f32 %v1550, %v1662
      %v1679 = vmul.f32 %v1551, %v1663
      %v1680 = vmul.f32 %v1552, %v1664
      %v1681 = vmul.f32 %v1553, %v1665
      %v1682 = vmul.f32 %v1554, %v1666
      %v1683 = vmul.f32 %v1555, %v1667
      %v1684 = vmul.f32 %v1556, %v1668
      %v1685 = vmul.f32 %v1557, %v1669
      %v1686 = vmul.f32 %v1558, %v1670
      %v1687 = vmul.f32 %v1559, %v1671
      %v1688 = vmul.f32 %v1560, %v1672
      %v1689 = vmul.f32 %v1561, %v1673
      %v1690 = vmul.f32 %v1562, %v1674
      %vm1691 = vcmp.ge.f32.partialorder %v1675, 0.0
      %vm1692 = vcmp.ge.f32.partialorder %v1676, 0.0
      %vm1693 = vcmp.ge.f32.partialorder %v1677, 0.0
      %vm1694 = vcmp.ge.f32.partialorder %v1678, 0.0
      %vm1695 = vcmp.ge.f32.partialorder %v1679, 0.0
      %vm1696 = vcmp.ge.f32.partialorder %v1680, 0.0
      %vm1697 = vcmp.ge.f32.partialorder %v1681, 0.0
      %vm1698 = vcmp.ge.f32.partialorder %v1682, 0.0
      %vm1699 = vcmp.ge.f32.partialorder %v1683, 0.0
      %vm1700 = vcmp.ge.f32.partialorder %v1684, 0.0
      %vm1701 = vcmp.ge.f32.partialorder %v1685, 0.0
      %vm1702 = vcmp.ge.f32.partialorder %v1686, 0.0
      %vm1703 = vcmp.ge.f32.partialorder %v1687, 0.0
      %vm1704 = vcmp.ge.f32.partialorder %v1688, 0.0
      %vm1705 = vcmp.ge.f32.partialorder %v1689, 0.0
      %vm1706 = vcmp.ge.f32.partialorder %v1690, 0.0
      %v1707 = vmul.f32 %v1675, 0.2
      %v1708 = vmul.f32 %v1676, 0.2
      %v1709 = vmul.f32 %v1677, 0.2
      %v1710 = vmul.f32 %v1678, 0.2
      %v1711 = vmul.f32 %v1679, 0.2
      %v1712 = vmul.f32 %v1680, 0.2
      %v1713 = vmul.f32 %v1681, 0.2
      %v1714 = vmul.f32 %v1682, 0.2
      %v1715 = vmul.f32 %v1683, 0.2
      %v1716 = vmul.f32 %v1684, 0.2
      %v1717 = vmul.f32 %v1685, 0.2
      %v1718 = vmul.f32 %v1686, 0.2
      %v1719 = vmul.f32 %v1687, 0.2
      %v1720 = vmul.f32 %v1688, 0.2
      %v1721 = vmul.f32 %v1689, 0.2
      %v1722 = vmul.f32 %v1690, 0.2
      %v1723 = vsel %vm1691, %v1675, %v1707
      %v1724 = vsel %vm1692, %v1676, %v1708
      %v1725 = vsel %vm1693, %v1677, %v1709
      %v1726 = vsel %vm1694, %v1678, %v1710
      %v1727 = vsel %vm1695, %v1679, %v1711
      %v1728 = vsel %vm1696, %v1680, %v1712
      %v1729 = vsel %vm1697, %v1681, %v1713
      %v1730 = vsel %vm1698, %v1682, %v1714
      %v1731 = vsel %vm1699, %v1683, %v1715
      %v1732 = vsel %vm1700, %v1684, %v1716
      %v1733 = vsel %vm1701, %v1685, %v1717
      %v1734 = vsel %vm1702, %v1686, %v1718
      %v1735 = vsel %vm1703, %v1687, %v1719
      %v1736 = vsel %vm1704, %v1688, %v1720
      %v1737 = vsel %vm1705, %v1689, %v1721
      %v1738 = vsel %vm1706, %v1690, %v1722
      %v1739 = vld [vmem:[%s2] sm:$0xff]
      %v1740 = vld [vmem:[%s2 + $0x8] sm:$0xff]
      %v1741 = vld [vmem:[%s2 + $0x10] sm:$0xff]
      %v1742 = vld [vmem:[%s2 + $0x18] sm:$0xff]
      %v1743 = vld [vmem:[%s2 + $0x20] sm:$0xff]
      %v1744 = vld [vmem:[%s2 + $0x28] sm:$0xff]
      %v1745 = vld [vmem:[%s2 + $0x30] sm:$0xff]
      %v1746 = vld [vmem:[%s2 + $0x38] sm:$0xff]
      %v1747 = vld [vmem:[%s2 + $0x40] sm:$0xff]
      %v1748 = vld [vmem:[%s2 + $0x48] sm:$0xff]
      %v1749 = vld [vmem:[%s2 + $0x50] sm:$0xff]
      %v1750 = vld [vmem:[%s2 + $0x58] sm:$0xff]
      %v1751 = vld [vmem:[%s2 + $0x60] sm:$0xff]
      %v1752 = vld [vmem:[%s2 + $0x68] sm:$0xff]
      %v1753 = vld [vmem:[%s2 + $0x70] sm:$0xff]
      %v1754 = vld [vmem:[%s2 + $0x78] sm:$0xff]
      %v1755 = vmul.f32 %v1723, %v1739
      %v1756 = vmul.f32 %v1724, %v1740
      %v1757 = vmul.f32 %v1725, %v1741
      %v1758 = vmul.f32 %v1726, %v1742
      %v1759 = vmul.f32 %v1727, %v1743
      %v1760 = vmul.f32 %v1728, %v1744
      %v1761 = vmul.f32 %v1729, %v1745
      %v1762 = vmul.f32 %v1730, %v1746
      %v1763 = vmul.f32 %v1731, %v1747
      %v1764 = vmul.f32 %v1732, %v1748
      %v1765 = vmul.f32 %v1733, %v1749
      %v1766 = vmul.f32 %v1734, %v1750
      %v1767 = vmul.f32 %v1735, %v1751
      %v1768 = vmul.f32 %v1736, %v1752
      %v1769 = vmul.f32 %v1737, %v1753
      %v1770 = vmul.f32 %v1738, %v1754
      %v1771 = vsel %vm1481, %v1755, 0.0
      %1772 = vadd.xlane.f32.xlu0 %v1771
      %v1773 = vpop.xlane.xlu0 %1772
      %v1774 = vsel %vm1481, %v1756, 0.0
      %1775 = vadd.xlane.f32.xlu0 %v1774
      %v1776 = vpop.xlane.xlu0 %1775
      %v1777 = vsel %vm1481, %v1757, 0.0
      %1778 = vadd.xlane.f32.xlu0 %v1777
      %v1779 = vpop.xlane.xlu0 %1778
      %v1780 = vsel %vm1481, %v1758, 0.0
      %1781 = vadd.xlane.f32.xlu0 %v1780
      %v1782 = vpop.xlane.xlu0 %1781
      %v1783 = vsel %vm1481, %v1759, 0.0
      %1784 = vadd.xlane.f32.xlu0 %v1783
      %v1785 = vpop.xlane.xlu0 %1784
      %v1786 = vsel %vm1481, %v1760, 0.0
      %1787 = vadd.xlane.f32.xlu0 %v1786
      %v1788 = vpop.xlane.xlu0 %1787
      %v1789 = vsel %vm1481, %v1761, 0.0
      %1790 = vadd.xlane.f32.xlu0 %v1789
      %v1791 = vpop.xlane.xlu0 %1790
      %v1792 = vsel %vm1481, %v1762, 0.0
      %1793 = vadd.xlane.f32.xlu0 %v1792
      %v1794 = vpop.xlane.xlu0 %1793
      %v1795 = vsel %vm1481, %v1763, 0.0
      %1796 = vadd.xlane.f32.xlu0 %v1795
      %v1797 = vpop.xlane.xlu0 %1796
      %v1798 = vsel %vm1481, %v1764, 0.0
      %1799 = vadd.xlane.f32.xlu0 %v1798
      %v1800 = vpop.xlane.xlu0 %1799
      %v1801 = vsel %vm1481, %v1765, 0.0
      %1802 = vadd.xlane.f32.xlu0 %v1801
      %v1803 = vpop.xlane.xlu0 %1802
      %v1804 = vsel %vm1481, %v1766, 0.0
      %1805 = vadd.xlane.f32.xlu0 %v1804
      %v1806 = vpop.xlane.xlu0 %1805
      %v1807 = vsel %vm1481, %v1767, 0.0
      %1808 = vadd.xlane.f32.xlu0 %v1807
      %v1809 = vpop.xlane.xlu0 %1808
      %v1810 = vsel %vm1481, %v1768, 0.0
      %1811 = vadd.xlane.f32.xlu0 %v1810
      %v1812 = vpop.xlane.xlu0 %1811
      %v1813 = vsel %vm1481, %v1769, 0.0
      %1814 = vadd.xlane.f32.xlu0 %v1813
      %v1815 = vpop.xlane.xlu0 %1814
      %v1816 = vsel %vm1481, %v1770, 0.0
      %1817 = vadd.xlane.f32.xlu0 %v1816
      %v1818 = vpop.xlane.xlu0 %1817
      %v1819 = vadd.f32 %v1773, %v1776
      %v1820 = vadd.f32 %v1819, %v1779
      %v1821 = vadd.f32 %v1820, %v1782
      %v1822 = vadd.f32 %v1821, %v1785
      %v1823 = vadd.f32 %v1822, %v1788
      %v1824 = vadd.f32 %v1823, %v1791
      %v1825 = vadd.f32 %v1824, %v1794
      %v1826 = vadd.f32 %v1825, %v1797
      %v1827 = vadd.f32 %v1826, %v1800
      %v1828 = vadd.f32 %v1827, %v1803
      %v1829 = vadd.f32 %v1828, %v1806
      %v1830 = vadd.f32 %v1829, %v1809
      %v1831 = vadd.f32 %v1830, %v1812
      %v1832 = vadd.f32 %v1831, %v1815
      %v1833 = vadd.f32 %v1832, %v1818
      %v1834 = vrot.slane %v1833, 4
      %v1835 = vadd.f32 %v1833, %v1834
      %v1836 = vrot.slane %v1835, 2
      %v1837 = vadd.f32 %v1835, %v1836
      %v1838 = vrot.slane %v1837, 1
      %v1839 = vadd.f32 %v1837, %v1838
      %v1840 = vld [vmem:[#allocation2] sm:$0x1]
      %v1841 = vadd.f32 %v1839, %v1840
      %vm1842 = vcmask 0
      %1843 = vst.msk [vmem:[%s195] sm:$0x1] %vm1842, %v1841
      %p1844 = scmp.lt.s32.totalorder %s17, 1
      %s1845 = scalar_select %p1844, %s17, 1
      %s1846 = scalar_lea.vmem %s4, %s1845
      // Predicated region
      $region37: #{discriminator_forward.7} parent=35 // pred_check
        %p1847 = pneg %p124
      $region38: #{discriminator_forward.7} parent=35 // pred_check_branch
        %1849 = sbr.rel (%p1847) target = $region40
      $region39: #{discriminator_forward.7} parent=35 // pred_region
        _
      $region40: #{discriminator_forward.7} parent=35 // pred_fallthru
        _
    $region36: #{discriminator_forward.7} parent=5 // pred_fallthru
      _
    %p1850 = scmp.le.s32.totalorder 2, %s12
    // Predicated region
    $region41: #{discriminator_forward.7} parent=5 // pred_check
      %p1851 = pneg %p1850
    $region42: #{discriminator_forward.7} parent=5 // pred_check_branch
      %1853 = sbr.rel (%p1851) target = $region44
    $region43: #{discriminator_forward.7} parent=5 // pred_region
      %s1854 = ssub.s32 %s12, 2
      // Predicated region
      $region45: #{discriminator_forward.7} parent=43 // pred_check
        %p1855 = pneg %p130
      $region46: #{discriminator_forward.7} parent=43 // pred_check_branch
        %1857 = sbr.rel (%p1855) target = $region48
      $region47: #{discriminator_forward.7} parent=43 // pred_region
        %p1858 = scmp.lt.s32.totalorder %s18, 1
        %s1859 = scalar_select %p1858, %s18, 1
        %s1860 = scalar_lea.vmem %s4, %s1859
      $region48: #{discriminator_forward.7} parent=43 // pred_fallthru
        _
    $region44: #{discriminator_forward.7} parent=5 // pred_fallthru
      _
  $region6: #{discriminator_forward.7} parent=0 // loop_footer
    %s16 = sadd.s32 1, %s12
  $region7: #{discriminator_forward.7} parent=0 // loop_footer_branch
    %11 = sbr.rel target = $region3
  $region8: #{discriminator_forward.7} parent=0 // loop_exit
    _

</llo_original>
